<compile_context>
chip_gen: v6e
topology: v6e:2x2x1
jax: 0.10.0
libtpu: 0.0.40
codegen_flags: <defaults>
</compile_context>

<pallas_src>
import functools
import math

import jax
import jax.numpy as jnp
from jax.experimental import pallas as pl
from jax.experimental.pallas import tpu as pltpu


# --------------------------------------------------------------------------- #
# Kernel
# --------------------------------------------------------------------------- #
def _layer_norm(y, gamma, beta, eps=1e-5):
    mu = jnp.mean(y, axis=-1, keepdims=True)
    var = jnp.mean((y - mu) ** 2, axis=-1, keepdims=True)
    return (y - mu) * jax.lax.rsqrt(var + eps) * gamma + beta


def encoder_layer_kernel(x_ref,
                         wq_ref, bq_ref, wk_ref, bk_ref, wv_ref, bv_ref,
                         wo_ref, bo_ref,
                         w1_ref, b1_ref, w2_ref, b2_ref,
                         g1_ref, be1_ref, g2_ref, be2_ref,
                         o_ref,
                         k_scr, v_scr,
                         *, num_heads, q_block, kv_block, exp_bf16):
    qi = pl.program_id(1)
    S = x_ref.shape[1]
    D = x_ref.shape[2]
    H = num_heads
    dh = D // H
    TQ = q_block
    TK = kv_block
    NK = S // TK
    exp_dtype = jnp.bfloat16 if exp_bf16 else jnp.float32

    x_row = x_ref.at[0]                                   # (S, D) ref view, no load

    # ---- K / V projection + head-major relayout: once per batch row. ----
    # k_scr / v_scr are persistent VMEM scratch across the "arbitrary" qi axis.
    @pl.when(qi == 0)
    def _():
        xf = x_row[...].astype(jnp.bfloat16)              # (S, D)
        k = jnp.dot(xf, wk_ref[...], preferred_element_type=jnp.float32) + bk_ref[...]
        v = jnp.dot(xf, wv_ref[...], preferred_element_type=jnp.float32) + bv_ref[...]
        # K stored as (H, dh, S): 2-D transpose + leading-dim split, so the
        # per-step score matmul needs no K relayout (S is the lane-dense output).
        k_scr[...] = jnp.transpose(k, (1, 0)).astype(jnp.bfloat16).reshape(H, dh, S)
        # V stored head-major (H, S, dh): one major-dim permute per batch row.
        v_scr[...] = jnp.transpose(v.reshape(S, H, dh), (1, 0, 2)).astype(jnp.bfloat16)

    # ---- current query tile, sliced from the resident full-sequence block ----
    q_start = pl.multiple_of(qi * TQ, TQ)
    x_tile = x_row[pl.ds(q_start, TQ), :]                 # (TQ, D) f32

    # Q projection (1/sqrt(dh) pre-folded into wq / bq in the wrapper).
    q = jnp.dot(x_tile.astype(jnp.bfloat16), wq_ref[...],
                preferred_element_type=jnp.float32) + bq_ref[...]
    q_h = jnp.transpose(q.astype(jnp.bfloat16).reshape(TQ, H, dh), (1, 0, 2))  # (H,TQ,dh)

    # ---- head-batched attention over KV blocks with online softmax ----
    # TODO(synk): optional additive attention mask not wired in (mask=None path).
    m_i = jnp.full((H, TQ, 1), -jnp.inf, dtype=jnp.float32)
    l_i = jnp.zeros((H, TQ, 1), dtype=jnp.float32)
    acc = jnp.zeros((H, TQ, dh), dtype=jnp.float32)
    for j in range(NK):                                   # static, small trip count
        k_blk = k_scr[:, :, j * TK:(j + 1) * TK]          # (H, dh, TK) bf16
        v_blk = v_scr[:, j * TK:(j + 1) * TK, :]          # (H, TK, dh) bf16
        s = jnp.einsum("hqd,hdk->hqk", q_h, k_blk,
                       preferred_element_type=jnp.float32)            # (H, TQ, TK)
        m_new = jnp.maximum(m_i, jnp.max(s, axis=-1, keepdims=True))
        alpha = jnp.exp(m_i - m_new)
        # exp in bf16 on v6e/v7x (bf16-capable EUP); f32 on v5e. Sums stay f32.
        p = jnp.exp((s - m_new).astype(exp_dtype))
        l_i = alpha * l_i + jnp.sum(p.astype(jnp.float32), axis=-1, keepdims=True)
        acc = alpha * acc + jnp.einsum("hqk,hkd->hqd",
                                       p.astype(jnp.bfloat16), v_blk,
                                       preferred_element_type=jnp.float32)
        m_i = m_new

    o_heads = acc * pl.reciprocal(l_i, approx=True)       # (H, TQ, dh) f32
    ctx = jnp.transpose(o_heads, (1, 0, 2)).reshape(TQ, D)
    ctx = jnp.dot(ctx.astype(jnp.bfloat16), wo_ref[...],
                  preferred_element_type=jnp.float32) + bo_ref[...]

    # ---- residual + LayerNorm 1 (f32 on the VPU) ----
    h1 = _layer_norm(x_tile + ctx, g1_ref[...], be1_ref[...])

    # ---- FFN: Linear -> ReLU -> Linear (bf16 MXU operands, f32 accumulate) ----
    f = jnp.dot(h1.astype(jnp.bfloat16), w1_ref[...],
                preferred_element_type=jnp.float32) + b1_ref[...]
    f = jnp.maximum(f, 0.0)
    f = jnp.dot(f.astype(jnp.bfloat16), w2_ref[...],
                preferred_element_type=jnp.float32) + b2_ref[...]

    # ---- residual + LayerNorm 2 ----
    o_ref[0] = _layer_norm(h1 + f, g2_ref[...], be2_ref[...])


# --------------------------------------------------------------------------- #
# Host-side configuration helpers
# --------------------------------------------------------------------------- #
def _vmem_capacity_bytes():
    try:
        info = pltpu.get_tpu_info()
        cap = int(getattr(info, "vmem_capacity_bytes", 0))
        if cap > 0:
            return cap
    except Exception:
        pass
    return 64 * 1024 * 1024          # conservative default: v7x physical VMEM


def _supports_bf16_exp():
    try:
        kind = jax.devices()[0].device_kind.lower()
    except Exception:
        return False
    return ("v6" in kind) or ("v7" in kind) or ("7x" in kind)


def _footprint_bytes(S, D, d_ff, TQ, TK, H, double_buffer_weights):
    """Rough upper bound on live VMEM bytes for one grid step."""
    dh = D // H
    wbuf = 2 if double_buffer_weights else 1
    weights = wbuf * 2 * (4 * D * D + 2 * D * d_ff)       # bf16 weight blocks
    small = wbuf * 4 * (10 * D + d_ff)                    # f32 biases + LN params
    x_block = 2 * S * D * 4                               # double-buffered f32 input row
    out_block = 2 * TQ * D * 4                            # double-buffered f32 output tile
    kv_scratch = 2 * S * D * 2                            # persistent bf16 K/V scratch
    kv_proj_tmp = 2 * S * D * 4 + 2 * S * D * 2           # qi==0 f32 K/V + bf16 relayouts
    attn_tmp = (3 * H * TQ * TK * 4                       # scores / probs / exp temporaries
                + 3 * H * TQ * dh * 4                     # acc, pv partial, o_heads
                + 4 * TQ * D * 4)                         # q, ctx, h1, residual temporaries
    ffn_tmp = 2 * TQ * d_ff * 4 + 2 * TQ * D * 4
    return (weights + small + x_block + out_block + kv_scratch
            + kv_proj_tmp + attn_tmp + ffn_tmp)


def _vmem_limit_bytes(footprint, capacity):
    headroom = 4 * 1024 * 1024
    limit = max(32 * 1024 * 1024, int(1.4 * footprint))
    return int(min(capacity - headroom, limit))


def _choose_kv_block(S):
    for t in (512, 256, 128):
        if S % t == 0:
            return t
    return S


def _choose_q_block(S, D, d_ff, H, TK, capacity):
    budget = int(0.6 * capacity)
    cands = [t for t in (1024, 512, 256, 128, 64, 32, 16, 8) if t <= S and S % t == 0]
    if not cands:
        return S
    for t in cands:
        if _footprint_bytes(S, D, d_ff, t, TK, H, True) <= budget:
            return t
    return cands[-1]


_BUFFERED_SUPPORTED = None


def _probe_single_buffered():
    """One-time cached check that pl.Buffered(1) (single-buffered grid-invariant
    weight blocks) is supported by this JAX/Mosaic version."""
    global _BUFFERED_SUPPORTED
    if _BUFFERED_SUPPORTED is None:
        try:
            def _probe_kernel(x_ref, w_ref, o_ref):
                o_ref[...] = x_ref[...] + w_ref[...]

            fn = pl.pallas_call(
                _probe_kernel,
                out_shape=jax.ShapeDtypeStruct((2, 8, 128), jnp.float32),
                grid=(2,),
                in_specs=[pl.BlockSpec((1, 8, 128), lambda i: (i, 0, 0)),
                          pl.BlockSpec((1, 8, 128), lambda i: (0, 0, 0),
                                       pipeline_mode=pl.Buffered(1))],
                out_specs=pl.BlockSpec((1, 8, 128), lambda i: (i, 0, 0)))
            jax.block_until_ready(fn(jnp.ones((2, 8, 128), jnp.float32),
                                     jnp.ones((1, 8, 128), jnp.float32)))
            _BUFFERED_SUPPORTED = True
        except Exception:
            _BUFFERED_SUPPORTED = False
    return _BUFFERED_SUPPORTED


# --------------------------------------------------------------------------- #
# pallas_call construction (cached) + jitted wrapper
# --------------------------------------------------------------------------- #
@functools.lru_cache(maxsize=None)
def _build_call(B, S, D, d_ff, TQ, TK, H, use_buffered, exp_bf16, vmem_limit):
    NQ = S // TQ
    dh = D // H

    def const_spec(shape):
        # Grid-invariant blocks (weights / biases / LN params): fetched once.
        index_map = lambda b, qi: (0,) * len(shape)
        if use_buffered:
            return pl.BlockSpec(shape, index_map, pipeline_mode=pl.Buffered(1))
        return pl.BlockSpec(shape, index_map)

    in_specs = [
        pl.BlockSpec((1, S, D), lambda b, qi: (b, 0, 0)),  # x: full-seq row (resident)
        const_spec((D, D)), const_spec((1, D)),            # wq, bq (pre-scaled)
        const_spec((D, D)), const_spec((1, D)),            # wk, bk
        const_spec((D, D)), const_spec((1, D)),            # wv, bv
        const_spec((D, D)), const_spec((1, D)),            # wo, bo
        const_spec((D, d_ff)), const_spec((1, d_ff)),      # w1, b1
        const_spec((d_ff, D)), const_spec((1, D)),         # w2, b2
        const_spec((1, D)), const_spec((1, D)),            # gamma1, beta1
        const_spec((1, D)), const_spec((1, D)),            # gamma2, beta2
    ]

    # TODO(synk): v7x megacore — only the B axis is "parallel"; folding (B, NQ)
    # into one parallel axis (recomputing K/V per core) would help at B == 1.
    return pl.pallas_call(
        functools.partial(encoder_layer_kernel, num_heads=H, q_block=TQ,
                          kv_block=TK, exp_bf16=exp_bf16),
        out_shape=jax.ShapeDtypeStruct((B, S, D), jnp.float32),
        grid_spec=pltpu.PrefetchScalarGridSpec(
            num_scalar_prefetch=0,
            grid=(B, NQ),
            in_specs=in_specs,
            out_specs=pl.BlockSpec((1, TQ, D), lambda b, qi: (b, qi, 0)),
            scratch_shapes=[pltpu.VMEM((H, dh, S), jnp.bfloat16),   # K (head-major)
                            pltpu.VMEM((H, S, dh), jnp.bfloat16)],  # V (head-major)
        ),
        compiler_params=pltpu.CompilerParams(
            dimension_semantics=("parallel", "arbitrary"),
            vmem_limit_bytes=vmem_limit),
    )


@functools.partial(jax.jit,
                   static_argnames=("num_heads", "q_block", "kv_block",
                                    "use_buffered", "exp_bf16", "vmem_limit"))
def _encoder_layer_jit(x, params, *, num_heads, q_block, kv_block,
                       use_buffered, exp_bf16, vmem_limit):
    B, S, D = x.shape
    d_ff = params["w1"].shape[1]
    dh = D // num_heads
    scale = 1.0 / math.sqrt(dh)
    bf16 = jnp.bfloat16
    args = (
        x,
        (params["wq"] * scale).astype(bf16), params["bq"] * scale,
        params["wk"].astype(bf16), params["bk"],
        params["wv"].astype(bf16), params["bv"],
        params["wo"].astype(bf16), params["bo"],
        params["w1"].astype(bf16), params["b1"],
        params["w2"].astype(bf16), params["b2"],
        params["g1"], params["be1"], params["g2"], params["be2"],
    )
    call = _build_call(B, S, D, d_ff, q_block, kv_block, num_heads,
                       use_buffered, exp_bf16, vmem_limit)
    return call(*args)


def encoder_layer(x, params, num_heads, q_block=None, kv_block=None):
    B, S, D = x.shape
    d_ff = params["w1"].shape[1]
    assert D % num_heads == 0, "d_model must be divisible by num_heads"
    assert (D // num_heads) % 8 == 0, "head dim must be a multiple of 8 (sublane tiling)"
    assert S % 8 == 0, "sequence length must be a multiple of 8"

    capacity = _vmem_capacity_bytes()
    TK = kv_block if kv_block is not None else _choose_kv_block(S)
    assert S % TK == 0, "sequence length must be divisible by the KV block"
    TQ = q_block if q_block is not None else _choose_q_block(S, D, d_ff, num_heads,
                                                             TK, capacity)
    assert S % TQ == 0, "sequence length must be divisible by the query block"

    use_buffered = _probe_single_buffered()
    footprint = _footprint_bytes(S, D, d_ff, TQ, TK, num_heads, not use_buffered)
    if footprint > capacity:
        raise ValueError(
            f"EncoderLayer tile config needs ~{footprint >> 20} MiB VMEM but this "
            f"chip only has {capacity >> 20} MiB; reduce q_block / kv_block.")
    vmem_limit = _vmem_limit_bytes(footprint, capacity)

    return _encoder_layer_jit(x, params, num_heads=num_heads, q_block=TQ,
                              kv_block=TK, use_buffered=use_buffered,
                              exp_bf16=_supports_bf16_exp(),
                              vmem_limit=vmem_limit)


# --------------------------------------------------------------------------- #
# Pure-JAX reference + parameter init + self-test
# --------------------------------------------------------------------------- #
def reference_encoder_layer(x, p, num_heads):
    """Pure-JAX f32 reference mirroring the PyTorch module (dropout=0)."""
    B, S, D = x.shape
    dh = D // num_heads

    def ln(y, g, b):
        mu = jnp.mean(y, axis=-1, keepdims=True)
        var = jnp.mean((y - mu) ** 2, axis=-1, keepdims=True)
        return (y - mu) / jnp.sqrt(var + 1e-5) * g + b

    q = x @ p["wq"] + p["bq"]
    k = x @ p["wk"] + p["bk"]
    v = x @ p["wv"] + p["bv"]
    q = q.reshape(B, S, num_heads, dh).transpose(0, 2, 1, 3)
    k = k.reshape(B, S, num_heads, dh).transpose(0, 2, 1, 3)
    v = v.reshape(B, S, num_heads, dh).transpose(0, 2, 1, 3)
    s = jnp.einsum("bhqd,bhkd->bhqk", q, k) / math.sqrt(dh)
    a = jax.nn.softmax(s, axis=-1)
    o = jnp.einsum("bhqk,bhkd->bhqd", a, v).transpose(0, 2, 1, 3).reshape(B, S, D)
    attn = o @ p["wo"] + p["bo"]
    h1 = ln(x + attn, p["g1"], p["be1"])
    f = jnp.maximum(h1 @ p["w1"] + p["b1"], 0.0) @ p["w2"] + p["b2"]
    return ln(h1 + f, p["g2"], p["be2"])


def init_params(key, d_model, d_ff):
    ks = jax.random.split(key, 6)
    scale = 0.02
    return {
        "wq": jax.random.normal(ks[0], (d_model, d_model), jnp.float32) * scale,
        "wk": jax.random.normal(ks[1], (d_model, d_model), jnp.float32) * scale,
        "wv": jax.random.normal(ks[2], (d_model, d_model), jnp.float32) * scale,
        "wo": jax.random.normal(ks[3], (d_model, d_model), jnp.float32) * scale,
        "w1": jax.random.normal(ks[4], (d_model, d_ff), jnp.float32) * scale,
        "w2": jax.random.normal(ks[5], (d_ff, d_model), jnp.float32) * scale,
        "bq": jnp.zeros((1, d_model), jnp.float32),
        "bk": jnp.full((1, d_model), 0.01, jnp.float32),
        "bv": jnp.full((1, d_model), -0.01, jnp.float32),
        "bo": jnp.zeros((1, d_model), jnp.float32),
        "b1": jnp.full((1, d_ff), 0.02, jnp.float32),
        "b2": jnp.zeros((1, d_model), jnp.float32),
        "g1": jnp.ones((1, d_model), jnp.float32),
        "be1": jnp.zeros((1, d_model), jnp.float32),
        "g2": jnp.ones((1, d_model), jnp.float32),
        "be2": jnp.zeros((1, d_model), jnp.float32),
    }


if __name__ == "__main__":
    # Small but TPU-friendly shapes: D, d_ff multiples of 128; S multiple of 8.
    B, S, d_model, num_heads, d_ff = 2, 16, 128, 4, 256

    key = jax.random.PRNGKey(0)
    kx, kp = jax.random.split(key)
    x = jax.random.normal(kx, (B, S, d_model), jnp.float32)
    params = init_params(kp, d_model, d_ff)

    # q_block=8 -> 2 query tiles per batch row, exercising the persistent
    # head-major K/V VMEM scratch across the "arbitrary" grid axis.
    out = encoder_layer(x, params, num_heads, q_block=8)
    out = jax.block_until_ready(out)

    ref = reference_encoder_layer(x, params, num_heads)
    assert out.shape == (B, S, d_model)
    # bf16 MXU operands / bf16 exp (v6e+/v7x) vs the f32 reference -> loose tol.
    assert jnp.allclose(out, ref, atol=5e-2, rtol=5e-2), "mismatch vs JAX reference"

    print("KERNEL_OK")
</pallas_src>

<mosaic_0001>
module attributes {stable_mosaic.version = 11 : i64} {
  func.func @_probe_kernel(%arg0: i32, %arg1: memref<1x8x128xf32, #tpu.memory_space<vmem>>, %arg2: memref<1x8x128xf32, #tpu.memory_space<vmem>>, %arg3: memref<1x8x128xf32, #tpu.memory_space<vmem>>) attributes {dimension_semantics = [#tpu.dimension_semantics<arbitrary>], iteration_bounds = array<i64: 2>, scalar_prefetch = 0 : i64, scratch_operands = 0 : i64, tpu.core_type = #tpu.core_type<tc>, window_params = [{transform_indices = @transform_0, window_bounds = array<i64: 1, 8, 128>}, {pipeline_mode = #tpu.pipeline_mode<synchronous>, transform_indices = @transform_1, window_bounds = array<i64: 1, 8, 128>}, {transform_indices = @transform_2, window_bounds = array<i64: 1, 8, 128>}]} {
    %c0 = arith.constant 0 : index
    %c0_0 = arith.constant 0 : index
    %c0_1 = arith.constant 0 : index
    %0 = vector.load %arg1[%c0, %c0_0, %c0_1] : memref<1x8x128xf32, #tpu.memory_space<vmem>>, vector<1x8x128xf32>
    %c0_2 = arith.constant 0 : index
    %c0_3 = arith.constant 0 : index
    %c0_4 = arith.constant 0 : index
    %1 = vector.load %arg2[%c0_2, %c0_3, %c0_4] : memref<1x8x128xf32, #tpu.memory_space<vmem>>, vector<1x8x128xf32>
    %2 = arith.addf %0, %1 : vector<1x8x128xf32>
    %c0_5 = arith.constant 0 : index
    %c0_6 = arith.constant 0 : index
    %c0_7 = arith.constant 0 : index
    %3 = vector.load %arg3[%c0_5, %c0_6, %c0_7] : memref<1x8x128xf32, #tpu.memory_space<vmem>>, vector<1x8x128xf32>
    tpu.vector_store %arg3[%c0_5, %c0_6, %c0_7], %2 {strides = array<i32>} : memref<1x8x128xf32, #tpu.memory_space<vmem>>, vector<1x8x128xf32>,
    return
  }
  func.func @transform_0(%arg0: i32) -> (i32, i32, i32) {
    %c0_i32 = arith.constant 0 : i32
    %c0_i32_0 = arith.constant 0 : i32
    %c0_i32_1 = arith.constant 0 : i32
    return %arg0, %c0_i32, %c0_i32_0 : i32, i32, i32
  }
  func.func @transform_1(%arg0: i32) -> (i32, i32, i32) {
    %c0_i32 = arith.constant 0 : i32
    %c0_i32_0 = arith.constant 0 : i32
    %c0_i32_1 = arith.constant 0 : i32
    %c0_i32_2 = arith.constant 0 : i32
    return %c0_i32, %c0_i32_0, %c0_i32_1 : i32, i32, i32
  }
  func.func @transform_2(%arg0: i32) -> (i32, i32, i32) {
    %c0_i32 = arith.constant 0 : i32
    %c0_i32_0 = arith.constant 0 : i32
    %c0_i32_1 = arith.constant 0 : i32
    return %arg0, %c0_i32, %c0_i32_0 : i32, i32, i32
  }
}

module attributes {stable_mosaic.version = 11 : i64} {
  func.func @encoder_layer_kernel(%arg0: i32, %arg1: i32, %arg2: memref<1x16x128xf32, #tpu.memory_space<vmem>>, %arg3: memref<128x128xbf16, #tpu.memory_space<vmem>>, %arg4: memref<1x128xf32, #tpu.memory_space<vmem>>, %arg5: memref<128x128xbf16, #tpu.memory_space<vmem>>, %arg6: memref<1x128xf32, #tpu.memory_space<vmem>>, %arg7: memref<128x128xbf16, #tpu.memory_space<vmem>>, %arg8: memref<1x128xf32, #tpu.memory_space<vmem>>, %arg9: memref<128x128xbf16, #tpu.memory_space<vmem>>, %arg10: memref<1x128xf32, #tpu.memory_space<vmem>>, %arg11: memref<128x256xbf16, #tpu.memory_space<vmem>>, %arg12: memref<1x256xf32, #tpu.memory_space<vmem>>, %arg13: memref<256x128xbf16, #tpu.memory_space<vmem>>, %arg14: memref<1x128xf32, #tpu.memory_space<vmem>>, %arg15: memref<1x128xf32, #tpu.memory_space<vmem>>, %arg16: memref<1x128xf32, #tpu.memory_space<vmem>>, %arg17: memref<1x128xf32, #tpu.memory_space<vmem>>, %arg18: memref<1x128xf32, #tpu.memory_space<vmem>>, %arg19: memref<1x8x128xf32, #tpu.memory_space<vmem>>, %arg20: memref<4x32x16xbf16, #tpu.memory_space<vmem>>, %arg21: memref<4x16x32xbf16, #tpu.memory_space<vmem>>) attributes {dimension_semantics = [#tpu.dimension_semantics<parallel>, #tpu.dimension_semantics<arbitrary>], iteration_bounds = array<i64: 2, 2>, scalar_prefetch = 0 : i64, scratch_operands = 2 : i64, tpu.core_type = #tpu.core_type<tc>, window_params = [{transform_indices = @transform_0, window_bounds = array<i64: 1, 16, 128>}, {pipeline_mode = #tpu.pipeline_mode<synchronous>, transform_indices = @transform_1, window_bounds = array<i64: 128, 128>}, {pipeline_mode = #tpu.pipeline_mode<synchronous>, transform_indices = @transform_2, window_bounds = array<i64: 1, 128>}, {pipeline_mode = #tpu.pipeline_mode<synchronous>, transform_indices = @transform_3, window_bounds = array<i64: 128, 128>}, {pipeline_mode = #tpu.pipeline_mode<synchronous>, transform_indices = @transform_4, window_bounds = array<i64: 1, 128>}, {pipeline_mode = #tpu.pipeline_mode<synchronous>, transform_indices = @transform_5, window_bounds = array<i64: 128, 128>}, {pipeline_mode = #tpu.pipeline_mode<synchronous>, transform_indices = @transform_6, window_bounds = array<i64: 1, 128>}, {pipeline_mode = #tpu.pipeline_mode<synchronous>, transform_indices = @transform_7, window_bounds = array<i64: 128, 128>}, {pipeline_mode = #tpu.pipeline_mode<synchronous>, transform_indices = @transform_8, window_bounds = array<i64: 1, 128>}, {pipeline_mode = #tpu.pipeline_mode<synchronous>, transform_indices = @transform_9, window_bounds = array<i64: 128, 256>}, {pipeline_mode = #tpu.pipeline_mode<synchronous>, transform_indices = @transform_10, window_bounds = array<i64: 1, 256>}, {pipeline_mode = #tpu.pipeline_mode<synchronous>, transform_indices = @transform_11, window_bounds = array<i64: 256, 128>}, {pipeline_mode = #tpu.pipeline_mode<synchronous>, transform_indices = @transform_12, window_bounds = array<i64: 1, 128>}, {pipeline_mode = #tpu.pipeline_mode<synchronous>, transform_indices = @transform_13, window_bounds = array<i64: 1, 128>}, {pipeline_mode = #tpu.pipeline_mode<synchronous>, transform_indices = @transform_14, window_bounds = array<i64: 1, 128>}, {pipeline_mode = #tpu.pipeline_mode<synchronous>, transform_indices = @transform_15, window_bounds = array<i64: 1, 128>}, {pipeline_mode = #tpu.pipeline_mode<synchronous>, transform_indices = @transform_16, window_bounds = array<i64: 1, 128>}, {transform_indices = @transform_17, window_bounds = array<i64: 1, 8, 128>}]} {
    %c0_i32 = arith.constant 0 : i32
    %0 = arith.cmpi eq, %arg1, %c0_i32 : i32
    %1 = arith.extui %0 : i1 to i32
    %c0_i32_0 = arith.constant 0 : i32
    %c0_i32_1 = arith.constant 0 : i32
    %2 = arith.cmpi ne, %1, %c0_i32_1 : i32
    scf.if %2 {
      %119 = arith.index_cast %c0_i32_0 : i32 to index
      %c0_59 = arith.constant 0 : index
      %c0_60 = arith.constant 0 : index
      %120 = vector.load %arg2[%119, %c0_59, %c0_60] : memref<1x16x128xf32, #tpu.memory_space<vmem>>, vector<1x16x128xf32>
      %121 = vector.shape_cast %120 : vector<1x16x128xf32> to vector<16x128xf32>
      %122 = arith.truncf %121 : vector<16x128xf32> to vector<16x128xbf16>
      %c0_61 = arith.constant 0 : index
      %c0_62 = arith.constant 0 : index
      %123 = vector.load %arg5[%c0_61, %c0_62] : memref<128x128xbf16, #tpu.memory_space<vmem>>, vector<128x128xbf16>
      %cst_63 = arith.constant dense<0.000000e+00> : vector<16x128xf32>
      %124 = tpu.matmul %122, %123, %cst_63 {dimension_numbers = #tpu.dot_dimension_numbers<[1], [0], [0], [1], [0, 0, 1, 1], [], []>} : vector<16x128xbf16>, vector<128x128xbf16>, vector<16x128xf32> -> vector<16x128xf32>
      %c0_64 = arith.constant 0 : index
      %c0_65 = arith.constant 0 : index
      %125 = vector.load %arg6[%c0_64, %c0_65] : memref<1x128xf32, #tpu.memory_space<vmem>>, vector<1x128xf32>
      %126 = vector.broadcast %125 : vector<1x128xf32> to vector<16x128xf32>
      %127 = arith.addf %124, %126 : vector<16x128xf32>
      %c0_66 = arith.constant 0 : index
      %c0_67 = arith.constant 0 : index
      %128 = vector.load %arg7[%c0_66, %c0_67] : memref<128x128xbf16, #tpu.memory_space<vmem>>, vector<128x128xbf16>
      %cst_68 = arith.constant dense<0.000000e+00> : vector<16x128xf32>
      %129 = tpu.matmul %122, %128, %cst_68 {dimension_numbers = #tpu.dot_dimension_numbers<[1], [0], [0], [1], [0, 0, 1, 1], [], []>} : vector<16x128xbf16>, vector<128x128xbf16>, vector<16x128xf32> -> vector<16x128xf32>
      %c0_69 = arith.constant 0 : index
      %c0_70 = arith.constant 0 : index
      %130 = vector.load %arg8[%c0_69, %c0_70] : memref<1x128xf32, #tpu.memory_space<vmem>>, vector<1x128xf32>
      %131 = vector.broadcast %130 : vector<1x128xf32> to vector<16x128xf32>
      %132 = arith.addf %129, %131 : vector<16x128xf32>
      %133 = tpu.transpose %127, [1, 0] : vector<16x128xf32> -> vector<128x16xf32>
      %134 = arith.truncf %133 : vector<128x16xf32> to vector<128x16xbf16>
      %135 = vector.shape_cast %134 : vector<128x16xbf16> to vector<4x32x16xbf16>
      %c0_71 = arith.constant 0 : index
      %c0_72 = arith.constant 0 : index
      %c0_73 = arith.constant 0 : index
      %136 = vector.load %arg20[%c0_71, %c0_72, %c0_73] : memref<4x32x16xbf16, #tpu.memory_space<vmem>>, vector<4x32x16xbf16>
      tpu.vector_store %arg20[%c0_71, %c0_72, %c0_73], %135 {strides = array<i32>} : memref<4x32x16xbf16, #tpu.memory_space<vmem>>, vector<4x32x16xbf16>,
      %137 = vector.shape_cast %132 : vector<16x128xf32> to vector<16x4x32xf32>
      %138 = tpu.transpose %137, [1, 0, 2] : vector<16x4x32xf32> -> vector<4x16x32xf32>
      %139 = arith.truncf %138 : vector<4x16x32xf32> to vector<4x16x32xbf16>
      %c0_74 = arith.constant 0 : index
      %c0_75 = arith.constant 0 : index
      %c0_76 = arith.constant 0 : index
      %140 = vector.load %arg21[%c0_74, %c0_75, %c0_76] : memref<4x16x32xbf16, #tpu.memory_space<vmem>>, vector<4x16x32xbf16>
      tpu.vector_store %arg21[%c0_74, %c0_75, %c0_76], %139 {strides = array<i32>} : memref<4x16x32xbf16, #tpu.memory_space<vmem>>, vector<4x16x32xbf16>,
    } else {
    }
    %c8_i32 = arith.constant 8 : i32
    %3 = arith.muli %arg1, %c8_i32 : i32
    %4 = tpu.assume_multiple %3, 8 : i32
    %c0_i32_2 = arith.constant 0 : i32
    %c0_i32_3 = arith.constant 0 : i32
    %c0_i32_4 = arith.constant 0 : i32
    %5 = tpu.memref_slice %arg2[%c0_i32_2, %c0_i32_3, %c0_i32_4] : memref<1x16x128xf32, #tpu.memory_space<vmem>> -> memref<1x16x128xf32, #tpu.memory_space<vmem>>
    %6 = tpu.memref_squeeze %5 : memref<1x16x128xf32, #tpu.memory_space<vmem>> -> memref<16x128xf32, #tpu.memory_space<vmem>>
    %7 = arith.index_cast %4 : i32 to index
    %c0 = arith.constant 0 : index
    %8 = vector.load %6[%7, %c0] : memref<16x128xf32, #tpu.memory_space<vmem>>, vector<8x128xf32>
    %9 = arith.truncf %8 : vector<8x128xf32> to vector<8x128xbf16>
    %c0_5 = arith.constant 0 : index
    %c0_6 = arith.constant 0 : index
    %10 = vector.load %arg3[%c0_5, %c0_6] : memref<128x128xbf16, #tpu.memory_space<vmem>>, vector<128x128xbf16>
    %cst = arith.constant dense<0.000000e+00> : vector<8x128xf32>
    %11 = tpu.matmul %9, %10, %cst {dimension_numbers = #tpu.dot_dimension_numbers<[1], [0], [0], [1], [0, 0, 1, 1], [], []>} : vector<8x128xbf16>, vector<128x128xbf16>, vector<8x128xf32> -> vector<8x128xf32>
    %c0_7 = arith.constant 0 : index
    %c0_8 = arith.constant 0 : index
    %12 = vector.load %arg4[%c0_7, %c0_8] : memref<1x128xf32, #tpu.memory_space<vmem>>, vector<1x128xf32>
    %13 = vector.broadcast %12 : vector<1x128xf32> to vector<8x128xf32>
    %14 = arith.addf %11, %13 : vector<8x128xf32>
    %15 = arith.truncf %14 : vector<8x128xf32> to vector<8x128xbf16>
    %16 = vector.shape_cast %15 : vector<8x128xbf16> to vector<8x4x32xbf16>
    %17 = tpu.transpose %16, [1, 0, 2] : vector<8x4x32xbf16> -> vector<4x8x32xbf16>
    %cst_9 = arith.constant 0xFF800000 : f32
    %18 = vector.broadcast %cst_9 : f32 to vector<4x8x1xf32>
    %cst_10 = arith.constant 0.000000e+00 : f32
    %19 = vector.broadcast %cst_10 : f32 to vector<4x8x1xf32>
    %cst_11 = arith.constant 0.000000e+00 : f32
    %20 = vector.broadcast %cst_11 : f32 to vector<4x8x32xf32>
    %c0_12 = arith.constant 0 : index
    %c0_13 = arith.constant 0 : index
    %c0_14 = arith.constant 0 : index
    %21 = vector.load %arg20[%c0_12, %c0_13, %c0_14] : memref<4x32x16xbf16, #tpu.memory_space<vmem>>, vector<4x32x16xbf16>
    %c0_15 = arith.constant 0 : index
    %c0_16 = arith.constant 0 : index
    %c0_17 = arith.constant 0 : index
    %22 = vector.load %arg21[%c0_15, %c0_16, %c0_17] : memref<4x16x32xbf16, #tpu.memory_space<vmem>>, vector<4x16x32xbf16>
    "tpu.trace_start"() <{level = 10 : i32, message = "hqd,hdk->hqk"}> : () -> ()
    %cst_18 = arith.constant dense<0.000000e+00> : vector<4x8x16xf32>
    %23 = tpu.matmul %17, %21, %cst_18 {dimension_numbers = #tpu.dot_dimension_numbers<[2], [1], [1], [2], [0, 0, 0, 1, 1, 2], [0], [0]>} : vector<4x8x32xbf16>, vector<4x32x16xbf16>, vector<4x8x16xf32> -> vector<4x8x16xf32>
    "tpu.trace_stop"() : () -> ()
    %cst_19 = arith.constant dense<0xFF800000> : vector<4x8xf32>
    %24 = vector.multi_reduction <maximumf>, %23, %cst_19 [2] : vector<4x8x16xf32> to vector<4x8xf32>
    %25 = vector.shape_cast %24 : vector<4x8xf32> to vector<4x8x1xf32>
    %26 = arith.maximumf %18, %25 : vector<4x8x1xf32>
    %27 = arith.subf %18, %26 : vector<4x8x1xf32>
    %28 = math.exp %27 : vector<4x8x1xf32>
    %29 = vector.broadcast %26 : vector<4x8x1xf32> to vector<4x8x16xf32>
    %30 = arith.subf %23, %29 : vector<4x8x16xf32>
    %31 = math.exp %30 : vector<4x8x16xf32>
    %32 = arith.mulf %28, %19 : vector<4x8x1xf32>
    %cst_20 = arith.constant dense<0.000000e+00> : vector<4x8xf32>
    %33 = vector.multi_reduction <add>, %31, %cst_20 [2] : vector<4x8x16xf32> to vector<4x8xf32>
    %34 = vector.shape_cast %33 : vector<4x8xf32> to vector<4x8x1xf32>
    %35 = arith.addf %32, %34 : vector<4x8x1xf32>
    %36 = vector.broadcast %28 : vector<4x8x1xf32> to vector<4x8x32xf32>
    %37 = arith.mulf %36, %20 : vector<4x8x32xf32>
    %38 = arith.truncf %31 : vector<4x8x16xf32> to vector<4x8x16xbf16>
    "tpu.trace_start"() <{level = 10 : i32, message = "hqk,hkd->hqd"}> : () -> ()
    %cst_21 = arith.constant dense<0.000000e+00> : vector<4x8x32xf32>
    %39 = tpu.matmul %38, %22, %cst_21 {dimension_numbers = #tpu.dot_dimension_numbers<[2], [1], [1], [2], [0, 0, 0, 1, 1, 2], [0], [0]>} : vector<4x8x16xbf16>, vector<4x16x32xbf16>, vector<4x8x32xf32> -> vector<4x8x32xf32>
    "tpu.trace_stop"() : () -> ()
    %40 = arith.addf %37, %39 : vector<4x8x32xf32>
    %41 = tpu.reciprocal %35 {approx = true} : vector<4x8x1xf32> -> vector<4x8x1xf32>
    %42 = vector.broadcast %41 : vector<4x8x1xf32> to vector<4x8x32xf32>
    %43 = arith.mulf %40, %42 : vector<4x8x32xf32>
    %44 = tpu.transpose %43, [1, 0, 2] : vector<4x8x32xf32> -> vector<8x4x32xf32>
    %45 = vector.shape_cast %44 : vector<8x4x32xf32> to vector<8x128xf32>
    %46 = arith.truncf %45 : vector<8x128xf32> to vector<8x128xbf16>
    %c0_22 = arith.constant 0 : index
    %c0_23 = arith.constant 0 : index
    %47 = vector.load %arg9[%c0_22, %c0_23] : memref<128x128xbf16, #tpu.memory_space<vmem>>, vector<128x128xbf16>
    %cst_24 = arith.constant dense<0.000000e+00> : vector<8x128xf32>
    %48 = tpu.matmul %46, %47, %cst_24 {dimension_numbers = #tpu.dot_dimension_numbers<[1], [0], [0], [1], [0, 0, 1, 1], [], []>} : vector<8x128xbf16>, vector<128x128xbf16>, vector<8x128xf32> -> vector<8x128xf32>
    %c0_25 = arith.constant 0 : index
    %c0_26 = arith.constant 0 : index
    %49 = vector.load %arg10[%c0_25, %c0_26] : memref<1x128xf32, #tpu.memory_space<vmem>>, vector<1x128xf32>
    %50 = vector.broadcast %49 : vector<1x128xf32> to vector<8x128xf32>
    %51 = arith.addf %48, %50 : vector<8x128xf32>
    %52 = arith.addf %8, %51 : vector<8x128xf32>
    %c0_27 = arith.constant 0 : index
    %c0_28 = arith.constant 0 : index
    %53 = vector.load %arg15[%c0_27, %c0_28] : memref<1x128xf32, #tpu.memory_space<vmem>>, vector<1x128xf32>
    %c0_29 = arith.constant 0 : index
    %c0_30 = arith.constant 0 : index
    %54 = vector.load %arg16[%c0_29, %c0_30] : memref<1x128xf32, #tpu.memory_space<vmem>>, vector<1x128xf32>
    %cst_31 = arith.constant dense<0.000000e+00> : vector<8xf32>
    %55 = vector.multi_reduction <add>, %52, %cst_31 [1] : vector<8x128xf32> to vector<8xf32>
    %56 = vector.shape_cast %55 : vector<8xf32> to vector<8x1xf32>
    %cst_32 = arith.constant 1.280000e+02 : f32
    %57 = vector.broadcast %cst_32 : f32 to vector<8x1xf32>
    %58 = arith.divf %56, %57 : vector<8x1xf32>
    %59 = vector.broadcast %58 : vector<8x1xf32> to vector<8x128xf32>
    %60 = arith.subf %52, %59 : vector<8x128xf32>
    %61 = arith.mulf %60, %60 : vector<8x128xf32>
    %cst_33 = arith.constant dense<0.000000e+00> : vector<8xf32>
    %62 = vector.multi_reduction <add>, %61, %cst_33 [1] : vector<8x128xf32> to vector<8xf32>
    %63 = vector.shape_cast %62 : vector<8xf32> to vector<8x1xf32>
    %cst_34 = arith.constant 1.280000e+02 : f32
    %64 = vector.broadcast %cst_34 : f32 to vector<8x1xf32>
    %65 = arith.divf %63, %64 : vector<8x1xf32>
    %66 = vector.broadcast %58 : vector<8x1xf32> to vector<8x128xf32>
    %67 = arith.subf %52, %66 : vector<8x128xf32>
    %cst_35 = arith.constant 9.99999974E-6 : f32
    %68 = vector.broadcast %cst_35 : f32 to vector<8x1xf32>
    %69 = arith.addf %65, %68 : vector<8x1xf32>
    %70 = math.rsqrt %69 : vector<8x1xf32>
    %71 = vector.broadcast %70 : vector<8x1xf32> to vector<8x128xf32>
    %72 = arith.mulf %67, %71 : vector<8x128xf32>
    %73 = vector.broadcast %53 : vector<1x128xf32> to vector<8x128xf32>
    %74 = arith.mulf %72, %73 : vector<8x128xf32>
    %75 = vector.broadcast %54 : vector<1x128xf32> to vector<8x128xf32>
    %76 = arith.addf %74, %75 : vector<8x128xf32>
    %77 = arith.truncf %76 : vector<8x128xf32> to vector<8x128xbf16>
    %c0_36 = arith.constant 0 : index
    %c0_37 = arith.constant 0 : index
    %78 = vector.load %arg11[%c0_36, %c0_37] : memref<128x256xbf16, #tpu.memory_space<vmem>>, vector<128x256xbf16>
    %cst_38 = arith.constant dense<0.000000e+00> : vector<8x256xf32>
    %79 = tpu.matmul %77, %78, %cst_38 {dimension_numbers = #tpu.dot_dimension_numbers<[1], [0], [0], [1], [0, 0, 1, 1], [], []>} : vector<8x128xbf16>, vector<128x256xbf16>, vector<8x256xf32> -> vector<8x256xf32>
    %c0_39 = arith.constant 0 : index
    %c0_40 = arith.constant 0 : index
    %80 = vector.load %arg12[%c0_39, %c0_40] : memref<1x256xf32, #tpu.memory_space<vmem>>, vector<1x256xf32>
    %81 = vector.broadcast %80 : vector<1x256xf32> to vector<8x256xf32>
    %82 = arith.addf %79, %81 : vector<8x256xf32>
    %cst_41 = arith.constant 0.000000e+00 : f32
    %83 = vector.broadcast %cst_41 : f32 to vector<8x256xf32>
    %84 = arith.maximumf %82, %83 : vector<8x256xf32>
    %85 = arith.truncf %84 : vector<8x256xf32> to vector<8x256xbf16>
    %c0_42 = arith.constant 0 : index
    %c0_43 = arith.constant 0 : index
    %86 = vector.load %arg13[%c0_42, %c0_43] : memref<256x128xbf16, #tpu.memory_space<vmem>>, vector<256x128xbf16>
    %cst_44 = arith.constant dense<0.000000e+00> : vector<8x128xf32>
    %87 = tpu.matmul %85, %86, %cst_44 {dimension_numbers = #tpu.dot_dimension_numbers<[1], [0], [0], [1], [0, 0, 1, 1], [], []>} : vector<8x256xbf16>, vector<256x128xbf16>, vector<8x128xf32> -> vector<8x128xf32>
    %c0_45 = arith.constant 0 : index
    %c0_46 = arith.constant 0 : index
    %88 = vector.load %arg14[%c0_45, %c0_46] : memref<1x128xf32, #tpu.memory_space<vmem>>, vector<1x128xf32>
    %89 = vector.broadcast %88 : vector<1x128xf32> to vector<8x128xf32>
    %90 = arith.addf %87, %89 : vector<8x128xf32>
    %91 = arith.addf %76, %90 : vector<8x128xf32>
    %c0_47 = arith.constant 0 : index
    %c0_48 = arith.constant 0 : index
    %92 = vector.load %arg17[%c0_47, %c0_48] : memref<1x128xf32, #tpu.memory_space<vmem>>, vector<1x128xf32>
    %c0_49 = arith.constant 0 : index
    %c0_50 = arith.constant 0 : index
    %93 = vector.load %arg18[%c0_49, %c0_50] : memref<1x128xf32, #tpu.memory_space<vmem>>, vector<1x128xf32>
    %cst_51 = arith.constant dense<0.000000e+00> : vector<8xf32>
    %94 = vector.multi_reduction <add>, %91, %cst_51 [1] : vector<8x128xf32> to vector<8xf32>
    %95 = vector.shape_cast %94 : vector<8xf32> to vector<8x1xf32>
    %cst_52 = arith.constant 1.280000e+02 : f32
    %96 = vector.broadcast %cst_52 : f32 to vector<8x1xf32>
    %97 = arith.divf %95, %96 : vector<8x1xf32>
    %98 = vector.broadcast %97 : vector<8x1xf32> to vector<8x128xf32>
    %99 = arith.subf %91, %98 : vector<8x128xf32>
    %100 = arith.mulf %99, %99 : vector<8x128xf32>
    %cst_53 = arith.constant dense<0.000000e+00> : vector<8xf32>
    %101 = vector.multi_reduction <add>, %100, %cst_53 [1] : vector<8x128xf32> to vector<8xf32>
    %102 = vector.shape_cast %101 : vector<8xf32> to vector<8x1xf32>
    %cst_54 = arith.constant 1.280000e+02 : f32
    %103 = vector.broadcast %cst_54 : f32 to vector<8x1xf32>
    %104 = arith.divf %102, %103 : vector<8x1xf32>
    %105 = vector.broadcast %97 : vector<8x1xf32> to vector<8x128xf32>
    %106 = arith.subf %91, %105 : vector<8x128xf32>
    %cst_55 = arith.constant 9.99999974E-6 : f32
    %107 = vector.broadcast %cst_55 : f32 to vector<8x1xf32>
    %108 = arith.addf %104, %107 : vector<8x1xf32>
    %109 = math.rsqrt %108 : vector<8x1xf32>
    %110 = vector.broadcast %109 : vector<8x1xf32> to vector<8x128xf32>
    %111 = arith.mulf %106, %110 : vector<8x128xf32>
    %112 = vector.broadcast %92 : vector<1x128xf32> to vector<8x128xf32>
    %113 = arith.mulf %111, %112 : vector<8x128xf32>
    %114 = vector.broadcast %93 : vector<1x128xf32> to vector<8x128xf32>
    %115 = arith.addf %113, %114 : vector<8x128xf32>
    %c0_56 = arith.constant 0 : index
    %c0_57 = arith.constant 0 : index
    %c0_58 = arith.constant 0 : index
    %116 = vector.load %arg19[%c0_56, %c0_57, %c0_58] : memref<1x8x128xf32, #tpu.memory_space<vmem>>, vector<1x8x128xf32>
    %117 = vector.shape_cast %116 : vector<1x8x128xf32> to vector<8x128xf32>
    %118 = vector.shape_cast %115 : vector<8x128xf32> to vector<1x8x128xf32>
    tpu.vector_store %arg19[%c0_56, %c0_57, %c0_58], %118 {strides = array<i32>} : memref<1x8x128xf32, #tpu.memory_space<vmem>>, vector<1x8x128xf32>,
    return
  }
  func.func @transform_0(%arg0: i32, %arg1: i32) -> (i32, i32, i32) {
    %c0_i32 = arith.constant 0 : i32
    %c0_i32_0 = arith.constant 0 : i32
    %c0_i32_1 = arith.constant 0 : i32
    return %arg0, %c0_i32, %c0_i32_0 : i32, i32, i32
  }
  func.func @transform_1(%arg0: i32, %arg1: i32) -> (i32, i32) {
    %c0_i32 = arith.constant 0 : i32
    %c0_i32_0 = arith.constant 0 : i32
    %c0_i32_1 = arith.constant 0 : i32
    return %c0_i32, %c0_i32_0 : i32, i32
  }
  func.func @transform_2(%arg0: i32, %arg1: i32) -> (i32, i32) {
    %c0_i32 = arith.constant 0 : i32
    %c0_i32_0 = arith.constant 0 : i32
    %c0_i32_1 = arith.constant 0 : i32
    return %c0_i32, %c0_i32_0 : i32, i32
  }
  func.func @transform_3(%arg0: i32, %arg1: i32) -> (i32, i32) {
    %c0_i32 = arith.constant 0 : i32
    %c0_i32_0 = arith.constant 0 : i32
    %c0_i32_1 = arith.constant 0 : i32
    return %c0_i32, %c0_i32_0 : i32, i32
  }
  func.func @transform_4(%arg0: i32, %arg1: i32) -> (i32, i32) {
    %c0_i32 = arith.constant 0 : i32
    %c0_i32_0 = arith.constant 0 : i32
    %c0_i32_1 = arith.constant 0 : i32
    return %c0_i32, %c0_i32_0 : i32, i32
  }
  func.func @transform_5(%arg0: i32, %arg1: i32) -> (i32, i32) {
    %c0_i32 = arith.constant 0 : i32
    %c0_i32_0 = arith.constant 0 : i32
    %c0_i32_1 = arith.constant 0 : i32
    return %c0_i32, %c0_i32_0 : i32, i32
  }
  func.func @transform_6(%arg0: i32, %arg1: i32) -> (i32, i32) {
    %c0_i32 = arith.constant 0 : i32
    %c0_i32_0 = arith.constant 0 : i32
    %c0_i32_1 = arith.constant 0 : i32
    return %c0_i32, %c0_i32_0 : i32, i32
  }
  func.func @transform_7(%arg0: i32, %arg1: i32) -> (i32, i32) {
    %c0_i32 = arith.constant 0 : i32
    %c0_i32_0 = arith.constant 0 : i32
    %c0_i32_1 = arith.constant 0 : i32
    return %c0_i32, %c0_i32_0 : i32, i32
  }
  func.func @transform_8(%arg0: i32, %arg1: i32) -> (i32, i32) {
    %c0_i32 = arith.constant 0 : i32
    %c0_i32_0 = arith.constant 0 : i32
    %c0_i32_1 = arith.constant 0 : i32
    return %c0_i32, %c0_i32_0 : i32, i32
  }
  func.func @transform_9(%arg0: i32, %arg1: i32) -> (i32, i32) {
    %c0_i32 = arith.constant 0 : i32
    %c0_i32_0 = arith.constant 0 : i32
    %c0_i32_1 = arith.constant 0 : i32
    return %c0_i32, %c0_i32_0 : i32, i32
  }
  func.func @transform_10(%arg0: i32, %arg1: i32) -> (i32, i32) {
    %c0_i32 = arith.constant 0 : i32
    %c0_i32_0 = arith.constant 0 : i32
    %c0_i32_1 = arith.constant 0 : i32
    return %c0_i32, %c0_i32_0 : i32, i32
  }
  func.func @transform_11(%arg0: i32, %arg1: i32) -> (i32, i32) {
    %c0_i32 = arith.constant 0 : i32
    %c0_i32_0 = arith.constant 0 : i32
    %c0_i32_1 = arith.constant 0 : i32
    return %c0_i32, %c0_i32_0 : i32, i32
  }
  func.func @transform_12(%arg0: i32, %arg1: i32) -> (i32, i32) {
    %c0_i32 = arith.constant 0 : i32
    %c0_i32_0 = arith.constant 0 : i32
    %c0_i32_1 = arith.constant 0 : i32
    return %c0_i32, %c0_i32_0 : i32, i32
  }
  func.func @transform_13(%arg0: i32, %arg1: i32) -> (i32, i32) {
    %c0_i32 = arith.constant 0 : i32
    %c0_i32_0 = arith.constant 0 : i32
    %c0_i32_1 = arith.constant 0 : i32
    return %c0_i32, %c0_i32_0 : i32, i32
  }
  func.func @transform_14(%arg0: i32, %arg1: i32) -> (i32, i32) {
    %c0_i32 = arith.constant 0 : i32
    %c0_i32_0 = arith.constant 0 : i32
    %c0_i32_1 = arith.constant 0 : i32
    return %c0_i32, %c0_i32_0 : i32, i32
  }
  func.func @transform_15(%arg0: i32, %arg1: i32) -> (i32, i32) {
    %c0_i32 = arith.constant 0 : i32
    %c0_i32_0 = arith.constant 0 : i32
    %c0_i32_1 = arith.constant 0 : i32
    return %c0_i32, %c0_i32_0 : i32, i32
  }
  func.func @transform_16(%arg0: i32, %arg1: i32) -> (i32, i32) {
    %c0_i32 = arith.constant 0 : i32
    %c0_i32_0 = arith.constant 0 : i32
    %c0_i32_1 = arith.constant 0 : i32
    return %c0_i32, %c0_i32_0 : i32, i32
  }
  func.func @transform_17(%arg0: i32, %arg1: i32) -> (i32, i32, i32) {
    %c0_i32 = arith.constant 0 : i32
    %c0_i32_0 = arith.constant 0 : i32
    return %arg0, %arg1, %c0_i32 : i32, i32, i32
  }
}

</mosaic_0001>

<llo_original>
// kernel: tpu_custom_call.1
$region0: #{tpu_custom_call.1}
  #allocation0 [shape = 'u32[]', space=smem, size = 0x4, offset = 0x4, fixed_abs, tag = 'smem constant byte address 0x4 - core index']
  #allocation1 [shape = 'u32[144,128]{1,0:T(1,128)}', space=vmem, size = 0x12000, scoped, tag = 'internal scratch']
  %s0 = inlined_call_operand.hbm [shape: f32[2,8,128], index: 0, kind: input, shape index: {}]
  %s1 = inlined_call_operand.hbm [shape: f32[1,8,128], index: 1, kind: input, shape index: {}]
  %s2 = inlined_call_operand.hbm [shape: f32[2,8,128], index: 2, kind: output, shape index: {}]
  %s3 = sld [smem:[#allocation0]]
  $region49: #{tpu_custom_call.1} parent=0
    _
  %s5 = ssub.s32 1, %s3
  %s6 = scalar_select 0, %s5, %s3
  $region1: #{tpu_custom_call.1} parent=0
    #allocation2 [shape = 'u8[8192]{0}', space=vmem, size = 0x2000, scoped, tag = 'input window, operand 0']
    #allocation3 [shape = 's32[2]{0}', space=sflag, size = 0x8, scoped, tag = 'scoped memory for tpu_custom_call.1']
    #allocation4 [shape = 's32[2]{0}', space=sflag, size = 0x8, scoped, tag = 'scoped memory for tpu_custom_call.1']
    #allocation5 [shape = 'u8[4096]{0}', space=vmem, size = 0x1000, scoped, tag = 'input window, operand 1, single buffered']
    #allocation6 [shape = 's32[1]{0}', space=sflag, size = 0x4, scoped, tag = 'scoped memory for tpu_custom_call.1']
    #allocation7 [shape = 'u8[8192]{0}', space=vmem, size = 0x2000, scoped, tag = 'output window, operand 0']
    %7 = vsyncpa [#allocation3], 0
    %s8 = scalar_lea.sflag [#allocation3], 1
    %9 = vsyncpa %s8, 0
    %10 = vsyncpa [#allocation6], 0
    %11 = vsyncpa [#allocation4], 0
    %s12 = scalar_lea.sflag [#allocation4], 1
    %13 = vsyncpa %s12, 0
    loop: start=0, step=1, limit=4
    $region2: #{tpu_custom_call.1} parent=1 // loop_pre_header
      _
    $region3: #{tpu_custom_call.1} parent=1 // loop_header
      %s15 = sphi 0, %s19
      %p16 = scmp.ge.s32.totalorder %s15, 4
      %s25 = sphi 0, %s27
      %s28 = sphi 0, %s25
      %s29 = sphi 0, %s28
      %s45 = sphi 0, %s29
      %s49 = sphi 0, %s49
      %s51 = sphi 0, %s49
      %s52 = sphi 0, %s51
      %s66 = sphi 0, %s52
      %s72 = sphi 0, %s74
      %s75 = sphi 0, %s72
      %s76 = sphi 0, %s75
      %s92 = sphi 0, %s76
    $region4: #{tpu_custom_call.1} parent=1 // loop_header_branch
      %18 = sbr.rel (%p16) target = $region8
    $region5: #{tpu_custom_call.1} parent=1 // loop_body
      %s20 = ssub.s32 %s15, 1
      %s21 = ssub.s32 %s15, 2
      %s22 = sadd.s32 %s15, 1
      %s23 = ssub.s32 %s15, %s22
      %p24 = scmp.eq.s32.totalorder %s23, 0
      %s26 = sadd.s32 %s25, 1
      %s27 = scalar_select %p24, %s25, %s26
      %p30 = pneg %p24
      %p31 = scmp.eq.s32.totalorder %s15, 1
      %p32 = por %p30, %p31
      %p33 = scmp.ne.s32.totalorder %s25, %s28
      %p34 = scmp.eq.s32.totalorder %s15, 0
      %p35 = por %p33, %p34
      %p36 = scmp.ne.s32.totalorder %s25, %s28
      %p37 = scmp.eq.s32.totalorder %s20, 1
      %p38 = por %p36, %p37
      %p39 = scmp.ne.s32.totalorder %s28, %s29
      %p40 = scmp.eq.s32.totalorder %s20, 0
      %p41 = por %p39, %p40
      %p42 = scmp.ne.s32.totalorder %s28, %s29
      %p43 = scmp.eq.s32.totalorder %s21, 1
      %p44 = por %p42, %p43
      %p46 = scmp.ne.s32.totalorder %s29, %s45
      %p47 = scmp.eq.s32.totalorder %s21, 0
      %p48 = por %p46, %p47
      %s50 = sadd.s32 %s49, 1
      %p53 = scmp.eq.s32.totalorder %s15, 1
      %p54 = scmp.ne.s32.totalorder %s49, %s51
      %p55 = scmp.eq.s32.totalorder %s15, 0
      %p56 = por %p54, %p55
      %p57 = scmp.ne.s32.totalorder %s49, %s51
      %p58 = scmp.eq.s32.totalorder %s20, 1
      %p59 = por %p57, %p58
      %p60 = scmp.ne.s32.totalorder %s51, %s52
      %p61 = scmp.eq.s32.totalorder %s20, 0
      %p62 = por %p60, %p61
      %p63 = scmp.ne.s32.totalorder %s51, %s52
      %p64 = scmp.eq.s32.totalorder %s21, 1
      %p65 = por %p63, %p64
      %p67 = scmp.ne.s32.totalorder %s52, %s66
      %p68 = scmp.eq.s32.totalorder %s21, 0
      %p69 = por %p67, %p68
      %s70 = ssub.s32 %s15, %s22
      %p71 = scmp.eq.s32.totalorder %s70, 0
      %s73 = sadd.s32 %s72, 1
      %s74 = scalar_select %p71, %s72, %s73
      %p77 = pneg %p71
      %p78 = scmp.eq.s32.totalorder %s15, 1
      %p79 = por %p77, %p78
      %p80 = scmp.ne.s32.totalorder %s72, %s75
      %p81 = scmp.eq.s32.totalorder %s15, 0
      %p82 = por %p80, %p81
      %p83 = scmp.ne.s32.totalorder %s72, %s75
      %p84 = scmp.eq.s32.totalorder %s20, 1
      %p85 = por %p83, %p84
      %p86 = scmp.ne.s32.totalorder %s75, %s76
      %p87 = scmp.eq.s32.totalorder %s20, 0
      %p88 = por %p86, %p87
      %p89 = scmp.ne.s32.totalorder %s75, %s76
      %p90 = scmp.eq.s32.totalorder %s21, 1
      %p91 = por %p89, %p90
      %p93 = scmp.ne.s32.totalorder %s76, %s92
      %p94 = scmp.eq.s32.totalorder %s21, 0
      %p95 = por %p93, %p94
      %p96 = scmp.le.s32.totalorder 1, %s15
      %p97 = scmp.lt.s32.totalorder %s15, 3
      %p98 = pnand %p96, %p97
      %p99 = pneg %p98
      // Predicated region
      $region9: #{tpu_custom_call.1} parent=5 // pred_check
        _
      $region10: #{tpu_custom_call.1} parent=5 // pred_check_branch
        %101 = sbr.rel (%p98) target = $region12
      $region11: #{tpu_custom_call.1} parent=5 // pred_region
        %s102 = ssub.s32 %s15, 1
        // Predicated region
        $region13: #{tpu_custom_call.1} parent=11 // pred_check
          %p103 = pneg %p62
        $region14: #{tpu_custom_call.1} parent=11 // pred_check_branch
          %105 = sbr.rel (%p103) target = $region16
        $region15: #{tpu_custom_call.1} parent=11 // pred_region
          %s107 = ssub.s32 128, 128
          %108 = vsyncadd [#allocation6], %s107
          %s110 = sshll.u32 [#allocation5], 4
          %s111 = int_to_ptr.vmem [resolvable:$true] %s110
          %113 = dma.hbm_to_vmem [thread:$0]  %s1, 128, %s111, [#allocation6]
        $region16: #{tpu_custom_call.1} parent=11 // pred_fallthru
          _
      $region12: #{tpu_custom_call.1} parent=5 // pred_fallthru
        _
      %p114 = scmp.lt.s32.totalorder %s15, 2
      // Predicated region
      $region17: #{tpu_custom_call.1} parent=5 // pred_check
        %p115 = pneg %p114
      $region18: #{tpu_custom_call.1} parent=5 // pred_check_branch
        %117 = sbr.rel (%p115) target = $region20
      $region19: #{tpu_custom_call.1} parent=5 // pred_region
        // Predicated region
        $region21: #{tpu_custom_call.1} parent=19 // pred_check
          %p118 = pneg %p35
        $region22: #{tpu_custom_call.1} parent=19 // pred_check_branch
          %120 = sbr.rel (%p118) target = $region24
        $region23: #{tpu_custom_call.1} parent=19 // pred_region
          %s121 = sand.u32 %s25, 1
          %s122 = scalar_lea.sflag [#allocation3], %s121
          %s123 = sand.u32 %s25, 1
          %s124 = smul.addr %s123, 8
          %s125 = scalar_lea.vmem [#allocation2], %s124
          %s127 = ssub.s32 128, 128
          %128 = vsyncadd %s122, %s127
          %s129 = smul.addr %s15, 128
          %s130 = scalar_lea.hbm %s0, %s129
          %s132 = sshll.u32 %s125, 4
          %s133 = int_to_ptr.vmem [resolvable:$true] %s132
          %135 = dma.hbm_to_vmem [thread:$0]  %s130, 128, %s133, %s122
        $region24: #{tpu_custom_call.1} parent=19 // pred_fallthru
          _
      $region20: #{tpu_custom_call.1} parent=5 // pred_fallthru
        _
      %p136 = scmp.le.s32.totalorder 1, %s15
      %p137 = scmp.lt.s32.totalorder %s15, 3
      %p138 = pnand %p136, %p137
      %p139 = pneg %p138
      // Predicated region
      $region25: #{tpu_custom_call.1} parent=5 // pred_check
        _
      $region26: #{tpu_custom_call.1} parent=5 // pred_check_branch
        %141 = sbr.rel (%p138) target = $region28
      $region27: #{tpu_custom_call.1} parent=5 // pred_region
        %s142 = ssub.s32 %s15, 1
        %s143 = sand.u32 %s28, 1
        %s144 = scalar_lea.sflag [#allocation3], %s143
        %s145 = sand.u32 %s28, 1
        %s146 = smul.addr %s145, 8
        %s147 = scalar_lea.vmem [#allocation2], %s146
        // Predicated region
        $region29: #{tpu_custom_call.1} parent=27 // pred_check
          %p148 = pneg %p41
        $region30: #{tpu_custom_call.1} parent=27 // pred_check_branch
          %150 = sbr.rel (%p148) target = $region32
        $region31: #{tpu_custom_call.1} parent=27 // pred_region
          %151 = dma.done %s144, 128
        $region32: #{tpu_custom_call.1} parent=27 // pred_fallthru
          _
        // Predicated region
        $region33: #{tpu_custom_call.1} parent=27 // pred_check
          %p152 = pneg %p62
        $region34: #{tpu_custom_call.1} parent=27 // pred_check_branch
          %154 = sbr.rel (%p152) target = $region36
        $region35: #{tpu_custom_call.1} parent=27 // pred_region
          %155 = dma.done [#allocation6], 128
        $region36: #{tpu_custom_call.1} parent=27 // pred_fallthru
          _
        %s156 = sand.u32 %s28, 1
        %s157 = scalar_lea.sflag [#allocation3], %s156
        %s158 = sand.u32 %s28, 1
        %s159 = smul.addr %s158, 8
        %s160 = scalar_lea.vmem [#allocation2], %s159
        %p161 = pneg %p41
        %p162 = pneg %p38
        %p163 = pneg %p62
        %p164 = pneg %p59
        %p165 = pneg %p88
        %p166 = pneg %p85
        %s167 = sand.u32 %s75, 1
        %s168 = scalar_lea.sflag [#allocation4], %s167
        %s169 = sand.u32 %s75, 1
        %s170 = smul.addr %s169, 8
        %s171 = scalar_lea.vmem [#allocation7], %s170
        %v172 = vld [vmem:[%s147] sm:$0xff]
        %v173 = vld [vmem:[#allocation5] sm:$0xff]
        %v174 = vadd.f32 %v172, %v173
        %175 = vst [vmem:[%s171] sm:$0xff] %v174
        %s176 = sand.u32 %s75, 1
        %s177 = scalar_lea.sflag [#allocation4], %s176
        %s178 = sand.u32 %s75, 1
        %s179 = smul.addr %s178, 8
        %s180 = scalar_lea.vmem [#allocation7], %s179
        // Predicated region
        $region37: #{tpu_custom_call.1} parent=27 // pred_check
          %p181 = pneg %p85
        $region38: #{tpu_custom_call.1} parent=27 // pred_check_branch
          %183 = sbr.rel (%p181) target = $region40
        $region39: #{tpu_custom_call.1} parent=27 // pred_region
          %s185 = ssub.s32 128, 128
          %186 = vsyncadd %s177, %s185
          %s187 = smul.addr %s20, 128
          %s188 = scalar_lea.hbm %s2, %s187
          %s190 = sshll.u32 %s180, 4
          %s191 = int_to_ptr.vmem [resolvable:$true] %s190
          %193 = dma.vmem_to_hbm [thread:$0]  %s191, 128, %s188, %s177
        $region40: #{tpu_custom_call.1} parent=27 // pred_fallthru
          _
      $region28: #{tpu_custom_call.1} parent=5 // pred_fallthru
        _
      %p194 = scmp.le.s32.totalorder 2, %s15
      // Predicated region
      $region41: #{tpu_custom_call.1} parent=5 // pred_check
        %p195 = pneg %p194
      $region42: #{tpu_custom_call.1} parent=5 // pred_check_branch
        %197 = sbr.rel (%p195) target = $region44
      $region43: #{tpu_custom_call.1} parent=5 // pred_region
        %s198 = ssub.s32 %s15, 2
        // Predicated region
        $region45: #{tpu_custom_call.1} parent=43 // pred_check
          %p199 = pneg %p91
        $region46: #{tpu_custom_call.1} parent=43 // pred_check_branch
          %201 = sbr.rel (%p199) target = $region48
        $region47: #{tpu_custom_call.1} parent=43 // pred_region
          %s202 = sand.u32 %s76, 1
          %s203 = scalar_lea.sflag [#allocation4], %s202
          %s204 = sand.u32 %s76, 1
          %s205 = smul.addr %s204, 8
          %s206 = scalar_lea.vmem [#allocation7], %s205
          %207 = dma.done %s203, 128
        $region48: #{tpu_custom_call.1} parent=43 // pred_fallthru
          _
      $region44: #{tpu_custom_call.1} parent=5 // pred_fallthru
        _
    $region6: #{tpu_custom_call.1} parent=1 // loop_footer
      %s19 = sadd.s32 1, %s15
    $region7: #{tpu_custom_call.1} parent=1 // loop_footer_branch
      %14 = sbr.rel target = $region3
    $region8: #{tpu_custom_call.1} parent=1 // loop_exit
      _
    %208 = vsyncpa [#allocation3], 1
    %s209 = scalar_lea.sflag [#allocation3], 1
    %210 = vsyncpa %s209, 1
    %211 = vsyncpa [#allocation6], 1
    %212 = vsyncpa [#allocation4], 1
    %s213 = scalar_lea.sflag [#allocation4], 1
    %214 = vsyncpa %s213, 1

// kernel: _encoder_layer_jit.1
$region0: #{_encoder_layer_jit.1}
  #allocation0 [shape = 'u32[]', space=smem, size = 0x4, offset = 0x4, fixed_abs, tag = 'smem constant byte address 0x4 - core index']
  #allocation1 [shape = 'u32[144,128]{1,0:T(1,128)}', space=vmem, size = 0x12000, scoped, tag = 'internal scratch']
  #allocation2 [shape = 'bf16[4,32,16]{2,1,0:T(8,128)(2,1)}', space=vmem, size = 0x8000, scoped, tag = 'scratch operand']
  #allocation3 [shape = 'bf16[4,16,32]{2,1,0:T(8,128)(2,1)}', space=vmem, size = 0x4000, scoped, tag = 'scratch operand']
  %s0 = inlined_call_operand.vmem [shape: f32[2,16,128], index: 0, kind: input, shape index: {}]
  %s1 = inlined_call_operand.vmem [shape: bf16[128,128], index: 1, kind: input, shape index: {}]
  %s2 = inlined_call_operand.vmem [shape: f32[1,128], index: 2, kind: input, shape index: {}]
  %s3 = inlined_call_operand.vmem [shape: bf16[128,128], index: 3, kind: input, shape index: {}]
  %s4 = inlined_call_operand.vmem [shape: f32[1,128], index: 4, kind: input, shape index: {}]
  %s5 = inlined_call_operand.vmem [shape: bf16[128,128], index: 5, kind: input, shape index: {}]
  %s6 = inlined_call_operand.vmem [shape: f32[1,128], index: 6, kind: input, shape index: {}]
  %s7 = inlined_call_operand.vmem [shape: bf16[128,128], index: 7, kind: input, shape index: {}]
  %s8 = inlined_call_operand.vmem [shape: f32[1,128], index: 8, kind: input, shape index: {}]
  %s9 = inlined_call_operand.vmem [shape: bf16[128,256], index: 9, kind: input, shape index: {}]
  %s10 = inlined_call_operand.vmem [shape: f32[1,256], index: 10, kind: input, shape index: {}]
  %s11 = inlined_call_operand.vmem [shape: bf16[256,128], index: 11, kind: input, shape index: {}]
  %s12 = inlined_call_operand.vmem [shape: f32[1,128], index: 12, kind: input, shape index: {}]
  %s13 = inlined_call_operand.vmem [shape: f32[1,128], index: 13, kind: input, shape index: {}]
  %s14 = inlined_call_operand.vmem [shape: f32[1,128], index: 14, kind: input, shape index: {}]
  %s15 = inlined_call_operand.vmem [shape: f32[1,128], index: 15, kind: input, shape index: {}]
  %s16 = inlined_call_operand.vmem [shape: f32[1,128], index: 16, kind: input, shape index: {}]
  %s17 = inlined_call_operand.hbm [shape: f32[2,16,128], index: 17, kind: output, shape index: {}]
  %s18 = sld [smem:[#allocation0]]
  $region105: #{_encoder_layer_jit.1} parent=0
    _
  %s20 = ssub.s32 1, %s18
  %s21 = scalar_select 0, %s20, %s18
  $region1: #{_encoder_layer_jit.1} parent=0
    #allocation4 [shape = 'u8[8192]{0}', space=vmem, size = 0x2000, scoped, tag = 'output window, operand 0']
    #allocation5 [shape = 's32[2]{0}', space=sflag, size = 0x8, scoped, tag = 'scoped memory for _encoder_layer_jit.1']
    %22 = vsyncpa [#allocation5], 0
    %s23 = scalar_lea.sflag [#allocation5], 1
    %24 = vsyncpa %s23, 0
    loop: start=0, step=1, limit=6
    $region2: #{_encoder_layer_jit.1} parent=1 // loop_pre_header
      _
    $region3: #{_encoder_layer_jit.1} parent=1 // loop_header
      %s26 = sphi 0, %s30
      %p27 = scmp.ge.s32.totalorder %s26, 6
      %s33 = sphi 0, %s45
      %s34 = sphi 0, %s41
      %s35 = sphi 0, %s33
      %s36 = sphi 0, %s34
      %s37 = sphi 0, %s35
      %s38 = sphi 0, %s36
      %s48 = sphi 0, %s50
      %s51 = sphi 0, %s48
      %s52 = sphi 0, %s51
      %s68 = sphi 0, %s52
      %s72 = sphi 0, %s72
      %s74 = sphi 0, %s72
      %s75 = sphi 0, %s74
      %s89 = sphi 0, %s75
      %s93 = sphi 0, %s93
      %s95 = sphi 0, %s93
      %s96 = sphi 0, %s95
      %s110 = sphi 0, %s96
      %s114 = sphi 0, %s114
      %s116 = sphi 0, %s114
      %s117 = sphi 0, %s116
      %s131 = sphi 0, %s117
      %s135 = sphi 0, %s135
      %s137 = sphi 0, %s135
      %s138 = sphi 0, %s137
      %s152 = sphi 0, %s138
      %s156 = sphi 0, %s156
      %s158 = sphi 0, %s156
      %s159 = sphi 0, %s158
      %s173 = sphi 0, %s159
      %s177 = sphi 0, %s177
      %s179 = sphi 0, %s177
      %s180 = sphi 0, %s179
      %s194 = sphi 0, %s180
      %s198 = sphi 0, %s198
      %s200 = sphi 0, %s198
      %s201 = sphi 0, %s200
      %s215 = sphi 0, %s201
      %s219 = sphi 0, %s219
      %s221 = sphi 0, %s219
      %s222 = sphi 0, %s221
      %s236 = sphi 0, %s222
      %s240 = sphi 0, %s240
      %s242 = sphi 0, %s240
      %s243 = sphi 0, %s242
      %s257 = sphi 0, %s243
      %s261 = sphi 0, %s261
      %s263 = sphi 0, %s261
      %s264 = sphi 0, %s263
      %s278 = sphi 0, %s264
      %s282 = sphi 0, %s282
      %s284 = sphi 0, %s282
      %s285 = sphi 0, %s284
      %s299 = sphi 0, %s285
      %s303 = sphi 0, %s303
      %s305 = sphi 0, %s303
      %s306 = sphi 0, %s305
      %s320 = sphi 0, %s306
      %s324 = sphi 0, %s324
      %s326 = sphi 0, %s324
      %s327 = sphi 0, %s326
      %s341 = sphi 0, %s327
      %s345 = sphi 0, %s345
      %s347 = sphi 0, %s345
      %s348 = sphi 0, %s347
      %s362 = sphi 0, %s348
      %s366 = sphi 0, %s366
      %s368 = sphi 0, %s366
      %s369 = sphi 0, %s368
      %s383 = sphi 0, %s369
      %s387 = sphi 0, %s387
      %s389 = sphi 0, %s387
      %s390 = sphi 0, %s389
      %s404 = sphi 0, %s390
      %s412 = sphi 0, %s414
      %s415 = sphi 0, %s412
      %s416 = sphi 0, %s415
      %s432 = sphi 0, %s416
    $region4: #{_encoder_layer_jit.1} parent=1 // loop_header_branch
      %29 = sbr.rel (%p27) target = $region8
    $region5: #{_encoder_layer_jit.1} parent=1 // loop_body
      %s31 = ssub.s32 %s26, 1
      %s32 = ssub.s32 %s26, 2
      %s39 = sadd.s32 1, %s34
      %p40 = scmp.ge.s32.totalorder %s39, 2
      %s41 = scalar_select %p40, 0, %s39
      %s42 = sadd.s32 1, %s33
      %s43 = scalar_select %p40, %s42, %s33
      %p44 = scmp.ge.s32.totalorder %s43, 2
      %s45 = scalar_select %p44, 0, %s43
      %s46 = ssub.s32 %s33, %s45
      %p47 = scmp.eq.s32.totalorder %s46, 0
      %s49 = sadd.s32 %s48, 1
      %s50 = scalar_select %p47, %s48, %s49
      %p53 = pneg %p47
      %p54 = scmp.eq.s32.totalorder %s26, 3
      %p55 = por %p53, %p54
      %p56 = scmp.ne.s32.totalorder %s48, %s51
      %p57 = scmp.eq.s32.totalorder %s26, 0
      %p58 = por %p56, %p57
      %p59 = scmp.ne.s32.totalorder %s48, %s51
      %p60 = scmp.eq.s32.totalorder %s31, 3
      %p61 = por %p59, %p60
      %p62 = scmp.ne.s32.totalorder %s51, %s52
      %p63 = scmp.eq.s32.totalorder %s31, 0
      %p64 = por %p62, %p63
      %p65 = scmp.ne.s32.totalorder %s51, %s52
      %p66 = scmp.eq.s32.totalorder %s32, 3
      %p67 = por %p65, %p66
      %p69 = scmp.ne.s32.totalorder %s52, %s68
      %p70 = scmp.eq.s32.totalorder %s32, 0
      %p71 = por %p69, %p70
      %s73 = sadd.s32 %s72, 1
      %p76 = scmp.eq.s32.totalorder %s26, 3
      %p77 = scmp.ne.s32.totalorder %s72, %s74
      %p78 = scmp.eq.s32.totalorder %s26, 0
      %p79 = por %p77, %p78
      %p80 = scmp.ne.s32.totalorder %s72, %s74
      %p81 = scmp.eq.s32.totalorder %s31, 3
      %p82 = por %p80, %p81
      %p83 = scmp.ne.s32.totalorder %s74, %s75
      %p84 = scmp.eq.s32.totalorder %s31, 0
      %p85 = por %p83, %p84
      %p86 = scmp.ne.s32.totalorder %s74, %s75
      %p87 = scmp.eq.s32.totalorder %s32, 3
      %p88 = por %p86, %p87
      %p90 = scmp.ne.s32.totalorder %s75, %s89
      %p91 = scmp.eq.s32.totalorder %s32, 0
      %p92 = por %p90, %p91
      %s94 = sadd.s32 %s93, 1
      %p97 = scmp.eq.s32.totalorder %s26, 3
      %p98 = scmp.ne.s32.totalorder %s93, %s95
      %p99 = scmp.eq.s32.totalorder %s26, 0
      %p100 = por %p98, %p99
      %p101 = scmp.ne.s32.totalorder %s93, %s95
      %p102 = scmp.eq.s32.totalorder %s31, 3
      %p103 = por %p101, %p102
      %p104 = scmp.ne.s32.totalorder %s95, %s96
      %p105 = scmp.eq.s32.totalorder %s31, 0
      %p106 = por %p104, %p105
      %p107 = scmp.ne.s32.totalorder %s95, %s96
      %p108 = scmp.eq.s32.totalorder %s32, 3
      %p109 = por %p107, %p108
      %p111 = scmp.ne.s32.totalorder %s96, %s110
      %p112 = scmp.eq.s32.totalorder %s32, 0
      %p113 = por %p111, %p112
      %s115 = sadd.s32 %s114, 1
      %p118 = scmp.eq.s32.totalorder %s26, 3
      %p119 = scmp.ne.s32.totalorder %s114, %s116
      %p120 = scmp.eq.s32.totalorder %s26, 0
      %p121 = por %p119, %p120
      %p122 = scmp.ne.s32.totalorder %s114, %s116
      %p123 = scmp.eq.s32.totalorder %s31, 3
      %p124 = por %p122, %p123
      %p125 = scmp.ne.s32.totalorder %s116, %s117
      %p126 = scmp.eq.s32.totalorder %s31, 0
      %p127 = por %p125, %p126
      %p128 = scmp.ne.s32.totalorder %s116, %s117
      %p129 = scmp.eq.s32.totalorder %s32, 3
      %p130 = por %p128, %p129
      %p132 = scmp.ne.s32.totalorder %s117, %s131
      %p133 = scmp.eq.s32.totalorder %s32, 0
      %p134 = por %p132, %p133
      %s136 = sadd.s32 %s135, 1
      %p139 = scmp.eq.s32.totalorder %s26, 3
      %p140 = scmp.ne.s32.totalorder %s135, %s137
      %p141 = scmp.eq.s32.totalorder %s26, 0
      %p142 = por %p140, %p141
      %p143 = scmp.ne.s32.totalorder %s135, %s137
      %p144 = scmp.eq.s32.totalorder %s31, 3
      %p145 = por %p143, %p144
      %p146 = scmp.ne.s32.totalorder %s137, %s138
      %p147 = scmp.eq.s32.totalorder %s31, 0
      %p148 = por %p146, %p147
      %p149 = scmp.ne.s32.totalorder %s137, %s138
      %p150 = scmp.eq.s32.totalorder %s32, 3
      %p151 = por %p149, %p150
      %p153 = scmp.ne.s32.totalorder %s138, %s152
      %p154 = scmp.eq.s32.totalorder %s32, 0
      %p155 = por %p153, %p154
      %s157 = sadd.s32 %s156, 1
      %p160 = scmp.eq.s32.totalorder %s26, 3
      %p161 = scmp.ne.s32.totalorder %s156, %s158
      %p162 = scmp.eq.s32.totalorder %s26, 0
      %p163 = por %p161, %p162
      %p164 = scmp.ne.s32.totalorder %s156, %s158
      %p165 = scmp.eq.s32.totalorder %s31, 3
      %p166 = por %p164, %p165
      %p167 = scmp.ne.s32.totalorder %s158, %s159
      %p168 = scmp.eq.s32.totalorder %s31, 0
      %p169 = por %p167, %p168
      %p170 = scmp.ne.s32.totalorder %s158, %s159
      %p171 = scmp.eq.s32.totalorder %s32, 3
      %p172 = por %p170, %p171
      %p174 = scmp.ne.s32.totalorder %s159, %s173
      %p175 = scmp.eq.s32.totalorder %s32, 0
      %p176 = por %p174, %p175
      %s178 = sadd.s32 %s177, 1
      %p181 = scmp.eq.s32.totalorder %s26, 3
      %p182 = scmp.ne.s32.totalorder %s177, %s179
      %p183 = scmp.eq.s32.totalorder %s26, 0
      %p184 = por %p182, %p183
      %p185 = scmp.ne.s32.totalorder %s177, %s179
      %p186 = scmp.eq.s32.totalorder %s31, 3
      %p187 = por %p185, %p186
      %p188 = scmp.ne.s32.totalorder %s179, %s180
      %p189 = scmp.eq.s32.totalorder %s31, 0
      %p190 = por %p188, %p189
      %p191 = scmp.ne.s32.totalorder %s179, %s180
      %p192 = scmp.eq.s32.totalorder %s32, 3
      %p193 = por %p191, %p192
      %p195 = scmp.ne.s32.totalorder %s180, %s194
      %p196 = scmp.eq.s32.totalorder %s32, 0
      %p197 = por %p195, %p196
      %s199 = sadd.s32 %s198, 1
      %p202 = scmp.eq.s32.totalorder %s26, 3
      %p203 = scmp.ne.s32.totalorder %s198, %s200
      %p204 = scmp.eq.s32.totalorder %s26, 0
      %p205 = por %p203, %p204
      %p206 = scmp.ne.s32.totalorder %s198, %s200
      %p207 = scmp.eq.s32.totalorder %s31, 3
      %p208 = por %p206, %p207
      %p209 = scmp.ne.s32.totalorder %s200, %s201
      %p210 = scmp.eq.s32.totalorder %s31, 0
      %p211 = por %p209, %p210
      %p212 = scmp.ne.s32.totalorder %s200, %s201
      %p213 = scmp.eq.s32.totalorder %s32, 3
      %p214 = por %p212, %p213
      %p216 = scmp.ne.s32.totalorder %s201, %s215
      %p217 = scmp.eq.s32.totalorder %s32, 0
      %p218 = por %p216, %p217
      %s220 = sadd.s32 %s219, 1
      %p223 = scmp.eq.s32.totalorder %s26, 3
      %p224 = scmp.ne.s32.totalorder %s219, %s221
      %p225 = scmp.eq.s32.totalorder %s26, 0
      %p226 = por %p224, %p225
      %p227 = scmp.ne.s32.totalorder %s219, %s221
      %p228 = scmp.eq.s32.totalorder %s31, 3
      %p229 = por %p227, %p228
      %p230 = scmp.ne.s32.totalorder %s221, %s222
      %p231 = scmp.eq.s32.totalorder %s31, 0
      %p232 = por %p230, %p231
      %p233 = scmp.ne.s32.totalorder %s221, %s222
      %p234 = scmp.eq.s32.totalorder %s32, 3
      %p235 = por %p233, %p234
      %p237 = scmp.ne.s32.totalorder %s222, %s236
      %p238 = scmp.eq.s32.totalorder %s32, 0
      %p239 = por %p237, %p238
      %s241 = sadd.s32 %s240, 1
      %p244 = scmp.eq.s32.totalorder %s26, 3
      %p245 = scmp.ne.s32.totalorder %s240, %s242
      %p246 = scmp.eq.s32.totalorder %s26, 0
      %p247 = por %p245, %p246
      %p248 = scmp.ne.s32.totalorder %s240, %s242
      %p249 = scmp.eq.s32.totalorder %s31, 3
      %p250 = por %p248, %p249
      %p251 = scmp.ne.s32.totalorder %s242, %s243
      %p252 = scmp.eq.s32.totalorder %s31, 0
      %p253 = por %p251, %p252
      %p254 = scmp.ne.s32.totalorder %s242, %s243
      %p255 = scmp.eq.s32.totalorder %s32, 3
      %p256 = por %p254, %p255
      %p258 = scmp.ne.s32.totalorder %s243, %s257
      %p259 = scmp.eq.s32.totalorder %s32, 0
      %p260 = por %p258, %p259
      %s262 = sadd.s32 %s261, 1
      %p265 = scmp.eq.s32.totalorder %s26, 3
      %p266 = scmp.ne.s32.totalorder %s261, %s263
      %p267 = scmp.eq.s32.totalorder %s26, 0
      %p268 = por %p266, %p267
      %p269 = scmp.ne.s32.totalorder %s261, %s263
      %p270 = scmp.eq.s32.totalorder %s31, 3
      %p271 = por %p269, %p270
      %p272 = scmp.ne.s32.totalorder %s263, %s264
      %p273 = scmp.eq.s32.totalorder %s31, 0
      %p274 = por %p272, %p273
      %p275 = scmp.ne.s32.totalorder %s263, %s264
      %p276 = scmp.eq.s32.totalorder %s32, 3
      %p277 = por %p275, %p276
      %p279 = scmp.ne.s32.totalorder %s264, %s278
      %p280 = scmp.eq.s32.totalorder %s32, 0
      %p281 = por %p279, %p280
      %s283 = sadd.s32 %s282, 1
      %p286 = scmp.eq.s32.totalorder %s26, 3
      %p287 = scmp.ne.s32.totalorder %s282, %s284
      %p288 = scmp.eq.s32.totalorder %s26, 0
      %p289 = por %p287, %p288
      %p290 = scmp.ne.s32.totalorder %s282, %s284
      %p291 = scmp.eq.s32.totalorder %s31, 3
      %p292 = por %p290, %p291
      %p293 = scmp.ne.s32.totalorder %s284, %s285
      %p294 = scmp.eq.s32.totalorder %s31, 0
      %p295 = por %p293, %p294
      %p296 = scmp.ne.s32.totalorder %s284, %s285
      %p297 = scmp.eq.s32.totalorder %s32, 3
      %p298 = por %p296, %p297
      %p300 = scmp.ne.s32.totalorder %s285, %s299
      %p301 = scmp.eq.s32.totalorder %s32, 0
      %p302 = por %p300, %p301
      %s304 = sadd.s32 %s303, 1
      %p307 = scmp.eq.s32.totalorder %s26, 3
      %p308 = scmp.ne.s32.totalorder %s303, %s305
      %p309 = scmp.eq.s32.totalorder %s26, 0
      %p310 = por %p308, %p309
      %p311 = scmp.ne.s32.totalorder %s303, %s305
      %p312 = scmp.eq.s32.totalorder %s31, 3
      %p313 = por %p311, %p312
      %p314 = scmp.ne.s32.totalorder %s305, %s306
      %p315 = scmp.eq.s32.totalorder %s31, 0
      %p316 = por %p314, %p315
      %p317 = scmp.ne.s32.totalorder %s305, %s306
      %p318 = scmp.eq.s32.totalorder %s32, 3
      %p319 = por %p317, %p318
      %p321 = scmp.ne.s32.totalorder %s306, %s320
      %p322 = scmp.eq.s32.totalorder %s32, 0
      %p323 = por %p321, %p322
      %s325 = sadd.s32 %s324, 1
      %p328 = scmp.eq.s32.totalorder %s26, 3
      %p329 = scmp.ne.s32.totalorder %s324, %s326
      %p330 = scmp.eq.s32.totalorder %s26, 0
      %p331 = por %p329, %p330
      %p332 = scmp.ne.s32.totalorder %s324, %s326
      %p333 = scmp.eq.s32.totalorder %s31, 3
      %p334 = por %p332, %p333
      %p335 = scmp.ne.s32.totalorder %s326, %s327
      %p336 = scmp.eq.s32.totalorder %s31, 0
      %p337 = por %p335, %p336
      %p338 = scmp.ne.s32.totalorder %s326, %s327
      %p339 = scmp.eq.s32.totalorder %s32, 3
      %p340 = por %p338, %p339
      %p342 = scmp.ne.s32.totalorder %s327, %s341
      %p343 = scmp.eq.s32.totalorder %s32, 0
      %p344 = por %p342, %p343
      %s346 = sadd.s32 %s345, 1
      %p349 = scmp.eq.s32.totalorder %s26, 3
      %p350 = scmp.ne.s32.totalorder %s345, %s347
      %p351 = scmp.eq.s32.totalorder %s26, 0
      %p352 = por %p350, %p351
      %p353 = scmp.ne.s32.totalorder %s345, %s347
      %p354 = scmp.eq.s32.totalorder %s31, 3
      %p355 = por %p353, %p354
      %p356 = scmp.ne.s32.totalorder %s347, %s348
      %p357 = scmp.eq.s32.totalorder %s31, 0
      %p358 = por %p356, %p357
      %p359 = scmp.ne.s32.totalorder %s347, %s348
      %p360 = scmp.eq.s32.totalorder %s32, 3
      %p361 = por %p359, %p360
      %p363 = scmp.ne.s32.totalorder %s348, %s362
      %p364 = scmp.eq.s32.totalorder %s32, 0
      %p365 = por %p363, %p364
      %s367 = sadd.s32 %s366, 1
      %p370 = scmp.eq.s32.totalorder %s26, 3
      %p371 = scmp.ne.s32.totalorder %s366, %s368
      %p372 = scmp.eq.s32.totalorder %s26, 0
      %p373 = por %p371, %p372
      %p374 = scmp.ne.s32.totalorder %s366, %s368
      %p375 = scmp.eq.s32.totalorder %s31, 3
      %p376 = por %p374, %p375
      %p377 = scmp.ne.s32.totalorder %s368, %s369
      %p378 = scmp.eq.s32.totalorder %s31, 0
      %p379 = por %p377, %p378
      %p380 = scmp.ne.s32.totalorder %s368, %s369
      %p381 = scmp.eq.s32.totalorder %s32, 3
      %p382 = por %p380, %p381
      %p384 = scmp.ne.s32.totalorder %s369, %s383
      %p385 = scmp.eq.s32.totalorder %s32, 0
      %p386 = por %p384, %p385
      %s388 = sadd.s32 %s387, 1
      %p391 = scmp.eq.s32.totalorder %s26, 3
      %p392 = scmp.ne.s32.totalorder %s387, %s389
      %p393 = scmp.eq.s32.totalorder %s26, 0
      %p394 = por %p392, %p393
      %p395 = scmp.ne.s32.totalorder %s387, %s389
      %p396 = scmp.eq.s32.totalorder %s31, 3
      %p397 = por %p395, %p396
      %p398 = scmp.ne.s32.totalorder %s389, %s390
      %p399 = scmp.eq.s32.totalorder %s31, 0
      %p400 = por %p398, %p399
      %p401 = scmp.ne.s32.totalorder %s389, %s390
      %p402 = scmp.eq.s32.totalorder %s32, 3
      %p403 = por %p401, %p402
      %p405 = scmp.ne.s32.totalorder %s390, %s404
      %p406 = scmp.eq.s32.totalorder %s32, 0
      %p407 = por %p405, %p406
      %s408 = ssub.s32 %s33, %s45
      %s409 = ssub.s32 %s34, %s41
      %s410 = sor.u32 %s408, %s409
      %p411 = scmp.eq.s32.totalorder %s410, 0
      %s413 = sadd.s32 %s412, 1
      %s414 = scalar_select %p411, %s412, %s413
      %p417 = pneg %p411
      %p418 = scmp.eq.s32.totalorder %s26, 3
      %p419 = por %p417, %p418
      %p420 = scmp.ne.s32.totalorder %s412, %s415
      %p421 = scmp.eq.s32.totalorder %s26, 0
      %p422 = por %p420, %p421
      %p423 = scmp.ne.s32.totalorder %s412, %s415
      %p424 = scmp.eq.s32.totalorder %s31, 3
      %p425 = por %p423, %p424
      %p426 = scmp.ne.s32.totalorder %s415, %s416
      %p427 = scmp.eq.s32.totalorder %s31, 0
      %p428 = por %p426, %p427
      %p429 = scmp.ne.s32.totalorder %s415, %s416
      %p430 = scmp.eq.s32.totalorder %s32, 3
      %p431 = por %p429, %p430
      %p433 = scmp.ne.s32.totalorder %s416, %s432
      %p434 = scmp.eq.s32.totalorder %s32, 0
      %p435 = por %p433, %p434
      %p436 = scmp.le.s32.totalorder 1, %s26
      %p437 = scmp.lt.s32.totalorder %s26, 5
      %p438 = pnand %p436, %p437
      %p439 = pneg %p438
      // Predicated region
      $region9: #{_encoder_layer_jit.1} parent=5 // pred_check
        _
      $region10: #{_encoder_layer_jit.1} parent=5 // pred_check_branch
        %441 = sbr.rel (%p438) target = $region12
      $region11: #{_encoder_layer_jit.1} parent=5 // pred_region
        %s442 = ssub.s32 %s26, 1
        // Predicated region
        $region13: #{_encoder_layer_jit.1} parent=11 // pred_check
          %p443 = pneg %p85
        $region14: #{_encoder_layer_jit.1} parent=11 // pred_check_branch
          %445 = sbr.rel (%p443) target = $region16
        $region15: #{_encoder_layer_jit.1} parent=11 // pred_region
          _
        $region16: #{_encoder_layer_jit.1} parent=11 // pred_fallthru
          _
        // Predicated region
        $region17: #{_encoder_layer_jit.1} parent=11 // pred_check
          %p446 = pneg %p106
        $region18: #{_encoder_layer_jit.1} parent=11 // pred_check_branch
          %448 = sbr.rel (%p446) target = $region20
        $region19: #{_encoder_layer_jit.1} parent=11 // pred_region
          _
        $region20: #{_encoder_layer_jit.1} parent=11 // pred_fallthru
          _
        // Predicated region
        $region21: #{_encoder_layer_jit.1} parent=11 // pred_check
          %p449 = pneg %p127
        $region22: #{_encoder_layer_jit.1} parent=11 // pred_check_branch
          %451 = sbr.rel (%p449) target = $region24
        $region23: #{_encoder_layer_jit.1} parent=11 // pred_region
          _
        $region24: #{_encoder_layer_jit.1} parent=11 // pred_fallthru
          _
        // Predicated region
        $region25: #{_encoder_layer_jit.1} parent=11 // pred_check
          %p452 = pneg %p148
        $region26: #{_encoder_layer_jit.1} parent=11 // pred_check_branch
          %454 = sbr.rel (%p452) target = $region28
        $region27: #{_encoder_layer_jit.1} parent=11 // pred_region
          _
        $region28: #{_encoder_layer_jit.1} parent=11 // pred_fallthru
          _
        // Predicated region
        $region29: #{_encoder_layer_jit.1} parent=11 // pred_check
          %p455 = pneg %p169
        $region30: #{_encoder_layer_jit.1} parent=11 // pred_check_branch
          %457 = sbr.rel (%p455) target = $region32
        $region31: #{_encoder_layer_jit.1} parent=11 // pred_region
          _
        $region32: #{_encoder_layer_jit.1} parent=11 // pred_fallthru
          _
        // Predicated region
        $region33: #{_encoder_layer_jit.1} parent=11 // pred_check
          %p458 = pneg %p190
        $region34: #{_encoder_layer_jit.1} parent=11 // pred_check_branch
          %460 = sbr.rel (%p458) target = $region36
        $region35: #{_encoder_layer_jit.1} parent=11 // pred_region
          _
        $region36: #{_encoder_layer_jit.1} parent=11 // pred_fallthru
          _
        // Predicated region
        $region37: #{_encoder_layer_jit.1} parent=11 // pred_check
          %p461 = pneg %p211
        $region38: #{_encoder_layer_jit.1} parent=11 // pred_check_branch
          %463 = sbr.rel (%p461) target = $region40
        $region39: #{_encoder_layer_jit.1} parent=11 // pred_region
          _
        $region40: #{_encoder_layer_jit.1} parent=11 // pred_fallthru
          _
        // Predicated region
        $region41: #{_encoder_layer_jit.1} parent=11 // pred_check
          %p464 = pneg %p232
        $region42: #{_encoder_layer_jit.1} parent=11 // pred_check_branch
          %466 = sbr.rel (%p464) target = $region44
        $region43: #{_encoder_layer_jit.1} parent=11 // pred_region
          _
        $region44: #{_encoder_layer_jit.1} parent=11 // pred_fallthru
          _
        // Predicated region
        $region45: #{_encoder_layer_jit.1} parent=11 // pred_check
          %p467 = pneg %p253
        $region46: #{_encoder_layer_jit.1} parent=11 // pred_check_branch
          %469 = sbr.rel (%p467) target = $region48
        $region47: #{_encoder_layer_jit.1} parent=11 // pred_region
          _
        $region48: #{_encoder_layer_jit.1} parent=11 // pred_fallthru
          _
        // Predicated region
        $region49: #{_encoder_layer_jit.1} parent=11 // pred_check
          %p470 = pneg %p274
        $region50: #{_encoder_layer_jit.1} parent=11 // pred_check_branch
          %472 = sbr.rel (%p470) target = $region52
        $region51: #{_encoder_layer_jit.1} parent=11 // pred_region
          _
        $region52: #{_encoder_layer_jit.1} parent=11 // pred_fallthru
          _
        // Predicated region
        $region53: #{_encoder_layer_jit.1} parent=11 // pred_check
          %p473 = pneg %p295
        $region54: #{_encoder_layer_jit.1} parent=11 // pred_check_branch
          %475 = sbr.rel (%p473) target = $region56
        $region55: #{_encoder_layer_jit.1} parent=11 // pred_region
          _
        $region56: #{_encoder_layer_jit.1} parent=11 // pred_fallthru
          _
        // Predicated region
        $region57: #{_encoder_layer_jit.1} parent=11 // pred_check
          %p476 = pneg %p316
        $region58: #{_encoder_layer_jit.1} parent=11 // pred_check_branch
          %478 = sbr.rel (%p476) target = $region60
        $region59: #{_encoder_layer_jit.1} parent=11 // pred_region
          _
        $region60: #{_encoder_layer_jit.1} parent=11 // pred_fallthru
          _
        // Predicated region
        $region61: #{_encoder_layer_jit.1} parent=11 // pred_check
          %p479 = pneg %p337
        $region62: #{_encoder_layer_jit.1} parent=11 // pred_check_branch
          %481 = sbr.rel (%p479) target = $region64
        $region63: #{_encoder_layer_jit.1} parent=11 // pred_region
          _
        $region64: #{_encoder_layer_jit.1} parent=11 // pred_fallthru
          _
        // Predicated region
        $region65: #{_encoder_layer_jit.1} parent=11 // pred_check
          %p482 = pneg %p358
        $region66: #{_encoder_layer_jit.1} parent=11 // pred_check_branch
          %484 = sbr.rel (%p482) target = $region68
        $region67: #{_encoder_layer_jit.1} parent=11 // pred_region
          _
        $region68: #{_encoder_layer_jit.1} parent=11 // pred_fallthru
          _
        // Predicated region
        $region69: #{_encoder_layer_jit.1} parent=11 // pred_check
          %p485 = pneg %p379
        $region70: #{_encoder_layer_jit.1} parent=11 // pred_check_branch
          %487 = sbr.rel (%p485) target = $region72
        $region71: #{_encoder_layer_jit.1} parent=11 // pred_region
          _
        $region72: #{_encoder_layer_jit.1} parent=11 // pred_fallthru
          _
        // Predicated region
        $region73: #{_encoder_layer_jit.1} parent=11 // pred_check
          %p488 = pneg %p400
        $region74: #{_encoder_layer_jit.1} parent=11 // pred_check_branch
          %490 = sbr.rel (%p488) target = $region76
        $region75: #{_encoder_layer_jit.1} parent=11 // pred_region
          _
        $region76: #{_encoder_layer_jit.1} parent=11 // pred_fallthru
          _
      $region12: #{_encoder_layer_jit.1} parent=5 // pred_fallthru
        _
      %p491 = scmp.lt.s32.totalorder %s26, 4
      // Predicated region
      $region77: #{_encoder_layer_jit.1} parent=5 // pred_check
        %p492 = pneg %p491
      $region78: #{_encoder_layer_jit.1} parent=5 // pred_check_branch
        %494 = sbr.rel (%p492) target = $region80
      $region79: #{_encoder_layer_jit.1} parent=5 // pred_region
        // Predicated region
        $region81: #{_encoder_layer_jit.1} parent=79 // pred_check
          %p495 = pneg %p58
        $region82: #{_encoder_layer_jit.1} parent=79 // pred_check_branch
          %497 = sbr.rel (%p495) target = $region84
        $region83: #{_encoder_layer_jit.1} parent=79 // pred_region
          %p498 = scmp.lt.s32.totalorder %s33, 1
          %s499 = scalar_select %p498, %s33, 1
          %s500 = smul.addr %s499, 2
          %s501 = smul.addr %s500, 8
          %s502 = scalar_lea.vmem %s0, %s501
        $region84: #{_encoder_layer_jit.1} parent=79 // pred_fallthru
          _
      $region80: #{_encoder_layer_jit.1} parent=5 // pred_fallthru
        _
      %p503 = scmp.le.s32.totalorder 1, %s26
      %p504 = scmp.lt.s32.totalorder %s26, 5
      %p505 = pnand %p503, %p504
      %p506 = pneg %p505
      // Predicated region
      $region85: #{_encoder_layer_jit.1} parent=5 // pred_check
        _
      $region86: #{_encoder_layer_jit.1} parent=5 // pred_check_branch
        %508 = sbr.rel (%p505) target = $region88
      $region87: #{_encoder_layer_jit.1} parent=5 // pred_region
        %s509 = ssub.s32 %s26, 1
        %p510 = scmp.lt.s32.totalorder %s35, 1
        %s511 = scalar_select %p510, %s35, 1
        %s512 = smul.addr %s511, 2
        %s513 = smul.addr %s512, 8
        %s514 = scalar_lea.vmem %s0, %s513
        %p515 = pneg %p64
        %p516 = pneg %p61
        %p517 = pneg %p85
        %p518 = pneg %p82
        %p519 = pneg %p106
        %p520 = pneg %p103
        %p521 = pneg %p127
        %p522 = pneg %p124
        %p523 = pneg %p148
        %p524 = pneg %p145
        %p525 = pneg %p169
        %p526 = pneg %p166
        %p527 = pneg %p190
        %p528 = pneg %p187
        %p529 = pneg %p211
        %p530 = pneg %p208
        %p531 = pneg %p232
        %p532 = pneg %p229
        %p533 = pneg %p253
        %p534 = pneg %p250
        %p535 = pneg %p274
        %p536 = pneg %p271
        %p537 = pneg %p295
        %p538 = pneg %p292
        %p539 = pneg %p316
        %p540 = pneg %p313
        %p541 = pneg %p337
        %p542 = pneg %p334
        %p543 = pneg %p358
        %p544 = pneg %p355
        %p545 = pneg %p379
        %p546 = pneg %p376
        %p547 = pneg %p400
        %p548 = pneg %p397
        %p549 = pneg %p428
        %p550 = pneg %p425
        %s551 = sand.u32 %s415, 1
        %s552 = scalar_lea.sflag [#allocation5], %s551
        %s553 = sand.u32 %s415, 1
        %s554 = smul.addr %s553, 8
        %s555 = scalar_lea.vmem [#allocation4], %s554
        %p556 = scmp.lt.s32.totalorder %s35, 1
        %s557 = scalar_select %p556, %s35, 1
        %s558 = smul.addr %s557, 2
        %s559 = smul.addr %s558, 8
        %s560 = scalar_lea.vmem %s0, %s559
        %p562 = scmp.eq.s32.totalorder %s36, 0
        // Predicated region
        $region89: #{_encoder_layer_jit.1} parent=87 // pred_check
          %p563 = pneg %p562
        $region90: #{_encoder_layer_jit.1} parent=87 // pred_check_branch
          %565 = sbr.rel (%p563) target = $region92
        $region91: #{_encoder_layer_jit.1} parent=87 // pred_region
          %v566 = vld [vmem:[%s560] sm:$0xff]
          %v567 = vld [vmem:[%s560 + $0x8] sm:$0xff]
          %v568 = vpack.c.bf16 %v567, %v566
          %v569 = vld [vmem:[%s3] sm:$0xf]
          %v570 = vld [vmem:[%s3 + $0x4] sm:$0xf]
          %v571 = vld [vmem:[%s3 + $0x8] sm:$0xf]
          %v572 = vld [vmem:[%s3 + $0xc] sm:$0xf]
          %v573 = vld [vmem:[%s3 + $0x10] sm:$0xf]
          %v574 = vld [vmem:[%s3 + $0x14] sm:$0xf]
          %v575 = vld [vmem:[%s3 + $0x18] sm:$0xf]
          %v576 = vld [vmem:[%s3 + $0x1c] sm:$0xf]
          %v577 = vld [vmem:[%s3 + $0x20] sm:$0xf]
          %v578 = vld [vmem:[%s3 + $0x24] sm:$0xf]
          %v579 = vld [vmem:[%s3 + $0x28] sm:$0xf]
          %v580 = vld [vmem:[%s3 + $0x2c] sm:$0xf]
          %v581 = vld [vmem:[%s3 + $0x30] sm:$0xf]
          %v582 = vld [vmem:[%s3 + $0x34] sm:$0xf]
          %v583 = vld [vmem:[%s3 + $0x38] sm:$0xf]
          %v584 = vld [vmem:[%s3 + $0x3c] sm:$0xf]
          %v585 = vld [vmem:[%s4] sm:$0x1]
          %v587 = vlaneseq
          %v588 = vshrl.u32 %v587, 7
          %v589 = vsub.s32 0, %v588
          %v590 = vrot.slane %v585, %v589
          %v608 = vunpack.c.l.b16 %v569
          %v609 = vunpack.c.l.b16 %v570
          %v610 = vunpack.c.l.b16 %v571
          %v611 = vunpack.c.l.b16 %v572
          %v612 = vunpack.c.l.b16 %v573
          %v613 = vunpack.c.l.b16 %v574
          %v614 = vunpack.c.l.b16 %v575
          %v615 = vunpack.c.l.b16 %v576
          %v616 = vunpack.c.l.b16 %v577
          %v617 = vunpack.c.l.b16 %v578
          %v618 = vunpack.c.l.b16 %v579
          %v619 = vunpack.c.l.b16 %v580
          %v620 = vunpack.c.l.b16 %v581
          %v621 = vunpack.c.l.b16 %v582
          %v622 = vunpack.c.l.b16 %v583
          %v623 = vunpack.c.l.b16 %v584
          %v624 = vpack.c.b16 %v609, %v608
          %v625 = vpack.c.b16 %v611, %v610
          %v626 = vpack.c.b16 %v613, %v612
          %v627 = vpack.c.b16 %v615, %v614
          %v628 = vpack.c.b16 %v617, %v616
          %v629 = vpack.c.b16 %v619, %v618
          %v630 = vpack.c.b16 %v621, %v620
          %v631 = vpack.c.b16 %v623, %v622
          %640 = vmatprep.subr.bf16.mxu0 0
          %641 = vmatpush1.bf16.msra.mxu0 %v631
          %642 = vmatprep.subr.bf16.mxu0 0
          %643 = vmatpush1.bf16.msra.mxu0 %v630
          %644 = vmatprep.subr.bf16.mxu0 0
          %645 = vmatpush1.bf16.msra.mxu0 %v629
          %646 = vmatprep.subr.bf16.mxu0 0
          %647 = vmatpush1.bf16.msra.mxu0 %v628
          %648 = vmatprep.subr.bf16.mxu0 0
          %649 = vmatpush1.bf16.msra.mxu0 %v627
          %650 = vmatprep.subr.bf16.mxu0 0
          %651 = vmatpush1.bf16.msra.mxu0 %v626
          %652 = vmatprep.subr.bf16.mxu0 0
          %653 = vmatpush1.bf16.msra.mxu0 %v625
          %654 = vmatprep.subr.bf16.mxu0 0
          %655 = vmatpush1.bf16.msra.mxu0 %v624
          %656 = vmatprep.subr.bf16.mxu0 0
          %657 = vmatpush2.bf16.msra.mxu0 0
          %658 = vmatprep.subr.bf16.mxu0 0
          %659 = vmatpush2.bf16.msra.mxu0 0
          %660 = vmatprep.subr.bf16.mxu0 0
          %661 = vmatpush2.bf16.msra.mxu0 0
          %662 = vmatprep.subr.bf16.mxu0 0
          %663 = vmatpush2.bf16.msra.mxu0 0
          %664 = vmatprep.subr.bf16.mxu0 0
          %665 = vmatpush2.bf16.msra.mxu0 0
          %666 = vmatprep.subr.bf16.mxu0 0
          %667 = vmatpush2.bf16.msra.mxu0 0
          %668 = vmatprep.subr.bf16.mxu0 0
          %669 = vmatpush2.bf16.msra.mxu0 0
          %670 = vmatprep.subr.bf16.mxu0 0
          %671 = vmatpush2.bf16.msra.mxu0 0
          %672 = vmatprep.mubr.bf16.mxu0 0
          %673 = vmatmul.mubr.bf16.gmra.mxu0 %v568
          %v674 = vpop.f32.mrf.mxu0
          %v675 = vadd.f32 %v590, %v674
          %v676 = vpop.f32.mrf.mxu0
          %v677 = vpop.f32.mrf.mxu0
          %v678 = vadd.f32 %v590, %v677
          %v679 = vpop.f32.mrf.mxu0
          %680 = vdwg.mxu0
          %v681 = vld [vmem:[%s5] sm:$0xf]
          %v682 = vld [vmem:[%s5 + $0x4] sm:$0xf]
          %v683 = vld [vmem:[%s5 + $0x8] sm:$0xf]
          %v684 = vld [vmem:[%s5 + $0xc] sm:$0xf]
          %v685 = vld [vmem:[%s5 + $0x10] sm:$0xf]
          %v686 = vld [vmem:[%s5 + $0x14] sm:$0xf]
          %v687 = vld [vmem:[%s5 + $0x18] sm:$0xf]
          %v688 = vld [vmem:[%s5 + $0x1c] sm:$0xf]
          %v689 = vld [vmem:[%s5 + $0x20] sm:$0xf]
          %v690 = vld [vmem:[%s5 + $0x24] sm:$0xf]
          %v691 = vld [vmem:[%s5 + $0x28] sm:$0xf]
          %v692 = vld [vmem:[%s5 + $0x2c] sm:$0xf]
          %v693 = vld [vmem:[%s5 + $0x30] sm:$0xf]
          %v694 = vld [vmem:[%s5 + $0x34] sm:$0xf]
          %v695 = vld [vmem:[%s5 + $0x38] sm:$0xf]
          %v696 = vld [vmem:[%s5 + $0x3c] sm:$0xf]
          %v697 = vld [vmem:[%s6] sm:$0x1]
          %v699 = vlaneseq
          %v700 = vshrl.u32 %v699, 7
          %v701 = vsub.s32 0, %v700
          %v702 = vrot.slane %v697, %v701
          %v720 = vunpack.c.l.b16 %v681
          %v721 = vunpack.c.l.b16 %v682
          %v722 = vunpack.c.l.b16 %v683
          %v723 = vunpack.c.l.b16 %v684
          %v724 = vunpack.c.l.b16 %v685
          %v725 = vunpack.c.l.b16 %v686
          %v726 = vunpack.c.l.b16 %v687
          %v727 = vunpack.c.l.b16 %v688
          %v728 = vunpack.c.l.b16 %v689
          %v729 = vunpack.c.l.b16 %v690
          %v730 = vunpack.c.l.b16 %v691
          %v731 = vunpack.c.l.b16 %v692
          %v732 = vunpack.c.l.b16 %v693
          %v733 = vunpack.c.l.b16 %v694
          %v734 = vunpack.c.l.b16 %v695
          %v735 = vunpack.c.l.b16 %v696
          %v736 = vpack.c.b16 %v721, %v720
          %v737 = vpack.c.b16 %v723, %v722
          %v738 = vpack.c.b16 %v725, %v724
          %v739 = vpack.c.b16 %v727, %v726
          %v740 = vpack.c.b16 %v729, %v728
          %v741 = vpack.c.b16 %v731, %v730
          %v742 = vpack.c.b16 %v733, %v732
          %v743 = vpack.c.b16 %v735, %v734
          %752 = vmatprep.subr.bf16.mxu0 0
          %753 = vmatpush1.bf16.msra.mxu0 %v743
          %754 = vmatprep.subr.bf16.mxu0 0
          %755 = vmatpush1.bf16.msra.mxu0 %v742
          %756 = vmatprep.subr.bf16.mxu0 0
          %757 = vmatpush1.bf16.msra.mxu0 %v741
          %758 = vmatprep.subr.bf16.mxu0 0
          %759 = vmatpush1.bf16.msra.mxu0 %v740
          %760 = vmatprep.subr.bf16.mxu0 0
          %761 = vmatpush1.bf16.msra.mxu0 %v739
          %762 = vmatprep.subr.bf16.mxu0 0
          %763 = vmatpush1.bf16.msra.mxu0 %v738
          %764 = vmatprep.subr.bf16.mxu0 0
          %765 = vmatpush1.bf16.msra.mxu0 %v737
          %766 = vmatprep.subr.bf16.mxu0 0
          %767 = vmatpush1.bf16.msra.mxu0 %v736
          %768 = vmatprep.subr.bf16.mxu0 0
          %769 = vmatpush2.bf16.msra.mxu0 0
          %770 = vmatprep.subr.bf16.mxu0 0
          %771 = vmatpush2.bf16.msra.mxu0 0
          %772 = vmatprep.subr.bf16.mxu0 0
          %773 = vmatpush2.bf16.msra.mxu0 0
          %774 = vmatprep.subr.bf16.mxu0 0
          %775 = vmatpush2.bf16.msra.mxu0 0
          %776 = vmatprep.subr.bf16.mxu0 0
          %777 = vmatpush2.bf16.msra.mxu0 0
          %778 = vmatprep.subr.bf16.mxu0 0
          %779 = vmatpush2.bf16.msra.mxu0 0
          %780 = vmatprep.subr.bf16.mxu0 0
          %781 = vmatpush2.bf16.msra.mxu0 0
          %782 = vmatprep.subr.bf16.mxu0 0
          %783 = vmatpush2.bf16.msra.mxu0 0
          %784 = vmatprep.mubr.bf16.mxu0 0
          %785 = vmatmul.mubr.bf16.gmra.mxu0 %v568
          %v786 = vpop.f32.mrf.mxu0
          %v787 = vadd.f32 %v702, %v786
          %v788 = vpop.f32.mrf.mxu0
          %v789 = vpop.f32.mrf.mxu0
          %v790 = vadd.f32 %v702, %v789
          %v791 = vpop.f32.mrf.mxu0
          %792 = vdwg.mxu0
          %793 = vxpose.xlu0.b32.start [1/16] %v675, 128
          %794 = vxpose.xlu0.b32.cont [2/16] %v678, 128
          %795 = vxpose.xlu0.b32.cont [3/16] 0.0, 128
          %796 = vxpose.xlu0.b32.cont [4/16] 0.0, 128
          %797 = vxpose.xlu0.b32.cont [5/16] 0.0, 128
          %798 = vxpose.xlu0.b32.cont [6/16] 0.0, 128
          %799 = vxpose.xlu0.b32.cont [7/16] 0.0, 128
          %800 = vxpose.xlu0.b32.cont [8/16] 0.0, 128
          %801 = vxpose.xlu0.b32.cont [9/16] 0.0, 128
          %802 = vxpose.xlu0.b32.cont [10/16] 0.0, 128
          %803 = vxpose.xlu0.b32.cont [11/16] 0.0, 128
          %804 = vxpose.xlu0.b32.cont [12/16] 0.0, 128
          %805 = vxpose.xlu0.b32.cont [13/16] 0.0, 128
          %806 = vxpose.xlu0.b32.cont [14/16] 0.0, 128
          %807 = vxpose.xlu0.b32.cont [15/16] 0.0, 128
          %808 = vxpose.xlu0.b32.end [16/16] 0.0, 128
          %v809 = vpop.trf.xlu0
          %v810 = vpop.trf.xlu0
          %v811 = vpop.trf.xlu0
          %v812 = vpop.trf.xlu0
          %v813 = vpop.trf.xlu0
          %v814 = vpop.trf.xlu0
          %v815 = vpop.trf.xlu0
          %v816 = vpop.trf.xlu0
          %v817 = vpop.trf.xlu0
          %v818 = vpop.trf.xlu0
          %v819 = vpop.trf.xlu0
          %v820 = vpop.trf.xlu0
          %v821 = vpop.trf.xlu0
          %v822 = vpop.trf.xlu0
          %v823 = vpop.trf.xlu0
          %v824 = vpop.trf.xlu0
          %v825 = vpack.c.bf16 %v810, %v809
          %v826 = vpack.c.bf16 %v812, %v811
          %v827 = vpack.c.bf16 %v814, %v813
          %v828 = vpack.c.bf16 %v816, %v815
          %v829 = vpack.c.bf16 %v818, %v817
          %v830 = vpack.c.bf16 %v820, %v819
          %v831 = vpack.c.bf16 %v822, %v821
          %v832 = vpack.c.bf16 %v824, %v823
          %v841 = vunpack.c.l.b16 %v825
          %v842 = vunpack.c.h.b16 %v825
          %v843 = vunpack.c.l.b16 %v826
          %v844 = vunpack.c.h.b16 %v826
          %v845 = vunpack.c.l.b16 %v827
          %v846 = vunpack.c.h.b16 %v827
          %v847 = vunpack.c.l.b16 %v828
          %v848 = vunpack.c.h.b16 %v828
          %v849 = vunpack.c.l.b16 %v829
          %v850 = vunpack.c.h.b16 %v829
          %v851 = vunpack.c.l.b16 %v830
          %v852 = vunpack.c.h.b16 %v830
          %v853 = vunpack.c.l.b16 %v831
          %v854 = vunpack.c.h.b16 %v831
          %v855 = vunpack.c.l.b16 %v832
          %v856 = vunpack.c.h.b16 %v832
          %v857 = vpack.c.b16 %v841, %v841
          %v858 = vpack.c.b16 %v842, %v842
          %v859 = vpack.c.b16 %v843, %v843
          %v860 = vpack.c.b16 %v844, %v844
          %v861 = vpack.c.b16 %v845, %v845
          %v862 = vpack.c.b16 %v846, %v846
          %v863 = vpack.c.b16 %v847, %v847
          %v864 = vpack.c.b16 %v848, %v848
          %v865 = vpack.c.b16 %v849, %v849
          %v866 = vpack.c.b16 %v850, %v850
          %v867 = vpack.c.b16 %v851, %v851
          %v868 = vpack.c.b16 %v852, %v852
          %v869 = vpack.c.b16 %v853, %v853
          %v870 = vpack.c.b16 %v854, %v854
          %v871 = vpack.c.b16 %v855, %v855
          %v872 = vpack.c.b16 %v856, %v856
          %vm889 = vcmask 125952
          %890 = vst.msk [vmem:[#allocation2] sm:$0xf] %vm889, %v857
          %891 = vst.msk [vmem:[#allocation2 + $0x4] sm:$0xf] %vm889, %v858
          %892 = vst.msk [vmem:[#allocation2 + $0x8] sm:$0xf] %vm889, %v859
          %893 = vst.msk [vmem:[#allocation2 + $0xc] sm:$0xf] %vm889, %v860
          %894 = vst.msk [vmem:[#allocation2 + $0x10] sm:$0xf] %vm889, %v861
          %895 = vst.msk [vmem:[#allocation2 + $0x14] sm:$0xf] %vm889, %v862
          %896 = vst.msk [vmem:[#allocation2 + $0x18] sm:$0xf] %vm889, %v863
          %897 = vst.msk [vmem:[#allocation2 + $0x1c] sm:$0xf] %vm889, %v864
          %898 = vst.msk [vmem:[#allocation2 + $0x20] sm:$0xf] %vm889, %v865
          %899 = vst.msk [vmem:[#allocation2 + $0x24] sm:$0xf] %vm889, %v866
          %900 = vst.msk [vmem:[#allocation2 + $0x28] sm:$0xf] %vm889, %v867
          %901 = vst.msk [vmem:[#allocation2 + $0x2c] sm:$0xf] %vm889, %v868
          %902 = vst.msk [vmem:[#allocation2 + $0x30] sm:$0xf] %vm889, %v869
          %903 = vst.msk [vmem:[#allocation2 + $0x34] sm:$0xf] %vm889, %v870
          %904 = vst.msk [vmem:[#allocation2 + $0x38] sm:$0xf] %vm889, %v871
          %905 = vst.msk [vmem:[#allocation2 + $0x3c] sm:$0xf] %vm889, %v872
          %908 = vrot.lane.b32.xlu0 %v787, 96
          %v909 = vpop.permute.xlu0 %908
          %910 = vrot.lane.b32.xlu0 %v790, 96
          %v911 = vpop.permute.xlu0 %910
          %914 = vrot.lane.b32.xlu0 %v787, 64
          %v915 = vpop.permute.xlu0 %914
          %916 = vrot.lane.b32.xlu0 %v790, 64
          %v917 = vpop.permute.xlu0 %916
          %920 = vrot.lane.b32.xlu0 %v787, 32
          %v921 = vpop.permute.xlu0 %920
          %922 = vrot.lane.b32.xlu0 %v790, 32
          %v923 = vpop.permute.xlu0 %922
          %v926 = vcombine.low %v787, %v915
          %v927 = vcombine.high %v787, %v915
          %v929 = vunpack.c.l.s4 1983009808
          %v930 = vunpack.c.0.s8 %v929
          %v931 = vlaneseq
          %v932 = vshrl.u32 %v931, 7
          %v933 = vsub.s32 %v930, %v932
          %v934 = vrot.slane %v926, %v933
          %v936 = vunpack.c.l.s4 1983009808
          %v937 = vunpack.c.0.s8 %v936
          %v938 = vlaneseq
          %v939 = vshrl.u32 %v938, 7
          %v940 = vsub.s32 %v937, %v939
          %v941 = vrot.slane %v927, %v940
          %v942 = vcombine.low %v909, %v921
          %v943 = vcombine.high %v909, %v921
          %v945 = vunpack.c.l.s4 1983009808
          %v946 = vunpack.c.0.s8 %v945
          %v947 = vlaneseq
          %v948 = vshrl.u32 %v947, 7
          %v949 = vsub.s32 %v946, %v948
          %v950 = vrot.slane %v942, %v949
          %v952 = vunpack.c.l.s4 1983009808
          %v953 = vunpack.c.0.s8 %v952
          %v954 = vlaneseq
          %v955 = vshrl.u32 %v954, 7
          %v956 = vsub.s32 %v953, %v955
          %v957 = vrot.slane %v943, %v956
          %v958 = vcombine.low %v934, %v950
          %v959 = vcombine.high %v934, %v950
          %v961 = vunpack.c.l.s4 1934713408
          %v962 = vunpack.c.0.s8 %v961
          %v963 = vlaneseq
          %v964 = vshrl.u32 %v963, 7
          %v965 = vsub.s32 %v962, %v964
          %v966 = vrot.slane %v958, %v965
          %v968 = vunpack.c.l.s4 1934713408
          %v969 = vunpack.c.0.s8 %v968
          %v970 = vlaneseq
          %v971 = vshrl.u32 %v970, 7
          %v972 = vsub.s32 %v969, %v971
          %v973 = vrot.slane %v959, %v972
          %v974 = vcombine.low %v941, %v957
          %v975 = vcombine.high %v941, %v957
          %v977 = vunpack.c.l.s4 1934713408
          %v978 = vunpack.c.0.s8 %v977
          %v979 = vlaneseq
          %v980 = vshrl.u32 %v979, 7
          %v981 = vsub.s32 %v978, %v980
          %v982 = vrot.slane %v974, %v981
          %v984 = vunpack.c.l.s4 1934713408
          %v985 = vunpack.c.0.s8 %v984
          %v986 = vlaneseq
          %v987 = vshrl.u32 %v986, 7
          %v988 = vsub.s32 %v985, %v987
          %v989 = vrot.slane %v975, %v988
          %v990 = vcombine.high %v966, 0.0
          %v991 = vcombine.high %v973, 0.0
          %v992 = vcombine.high %v982, 0.0
          %v993 = vcombine.high %v989, 0.0
          %v994 = vcombine.low %v790, %v917
          %v995 = vcombine.high %v790, %v917
          %v997 = vunpack.c.l.s4 1983009808
          %v998 = vunpack.c.0.s8 %v997
          %v999 = vlaneseq
          %v1000 = vshrl.u32 %v999, 7
          %v1001 = vsub.s32 %v998, %v1000
          %v1002 = vrot.slane %v994, %v1001
          %v1004 = vunpack.c.l.s4 1983009808
          %v1005 = vunpack.c.0.s8 %v1004
          %v1006 = vlaneseq
          %v1007 = vshrl.u32 %v1006, 7
          %v1008 = vsub.s32 %v1005, %v1007
          %v1009 = vrot.slane %v995, %v1008
          %v1010 = vcombine.low %v911, %v923
          %v1011 = vcombine.high %v911, %v923
          %v1013 = vunpack.c.l.s4 1983009808
          %v1014 = vunpack.c.0.s8 %v1013
          %v1015 = vlaneseq
          %v1016 = vshrl.u32 %v1015, 7
          %v1017 = vsub.s32 %v1014, %v1016
          %v1018 = vrot.slane %v1010, %v1017
          %v1020 = vunpack.c.l.s4 1983009808
          %v1021 = vunpack.c.0.s8 %v1020
          %v1022 = vlaneseq
          %v1023 = vshrl.u32 %v1022, 7
          %v1024 = vsub.s32 %v1021, %v1023
          %v1025 = vrot.slane %v1011, %v1024
          %v1026 = vcombine.low %v1002, %v1018
          %v1027 = vcombine.high %v1002, %v1018
          %v1029 = vunpack.c.l.s4 1934713408
          %v1030 = vunpack.c.0.s8 %v1029
          %v1031 = vlaneseq
          %v1032 = vshrl.u32 %v1031, 7
          %v1033 = vsub.s32 %v1030, %v1032
          %v1034 = vrot.slane %v1026, %v1033
          %v1036 = vunpack.c.l.s4 1934713408
          %v1037 = vunpack.c.0.s8 %v1036
          %v1038 = vlaneseq
          %v1039 = vshrl.u32 %v1038, 7
          %v1040 = vsub.s32 %v1037, %v1039
          %v1041 = vrot.slane %v1027, %v1040
          %v1042 = vcombine.low %v1009, %v1025
          %v1043 = vcombine.high %v1009, %v1025
          %v1045 = vunpack.c.l.s4 1934713408
          %v1046 = vunpack.c.0.s8 %v1045
          %v1047 = vlaneseq
          %v1048 = vshrl.u32 %v1047, 7
          %v1049 = vsub.s32 %v1046, %v1048
          %v1050 = vrot.slane %v1042, %v1049
          %v1052 = vunpack.c.l.s4 1934713408
          %v1053 = vunpack.c.0.s8 %v1052
          %v1054 = vlaneseq
          %v1055 = vshrl.u32 %v1054, 7
          %v1056 = vsub.s32 %v1053, %v1055
          %v1057 = vrot.slane %v1043, %v1056
          %v1058 = vcombine.high %v1034, 0.0
          %v1059 = vcombine.high %v1041, 0.0
          %v1060 = vcombine.high %v1050, 0.0
          %v1061 = vcombine.high %v1057, 0.0
          %v1062 = vcombine.low %v966, %v973
          %v1064 = vunpack.c.l.s4 1983009808
          %v1065 = vunpack.c.0.s8 %v1064
          %v1066 = vlaneseq
          %v1067 = vshrl.u32 %v1066, 7
          %v1068 = vsub.s32 %v1065, %v1067
          %v1069 = vrot.slane %v1062, %v1068
          %v1070 = vcombine.low %v990, %v991
          %v1072 = vunpack.c.l.s4 1983009808
          %v1073 = vunpack.c.0.s8 %v1072
          %v1074 = vlaneseq
          %v1075 = vshrl.u32 %v1074, 7
          %v1076 = vsub.s32 %v1073, %v1075
          %v1077 = vrot.slane %v1070, %v1076
          %v1078 = vcombine.low %v982, %v989
          %v1080 = vunpack.c.l.s4 1983009808
          %v1081 = vunpack.c.0.s8 %v1080
          %v1082 = vlaneseq
          %v1083 = vshrl.u32 %v1082, 7
          %v1084 = vsub.s32 %v1081, %v1083
          %v1085 = vrot.slane %v1078, %v1084
          %v1086 = vcombine.low %v992, %v993
          %v1088 = vunpack.c.l.s4 1983009808
          %v1089 = vunpack.c.0.s8 %v1088
          %v1090 = vlaneseq
          %v1091 = vshrl.u32 %v1090, 7
          %v1092 = vsub.s32 %v1089, %v1091
          %v1093 = vrot.slane %v1086, %v1092
          %v1094 = vcombine.low %v1069, %v1077
          %v1095 = vcombine.high %v1069, %v1077
          %v1097 = vunpack.c.l.s4 1934713408
          %v1098 = vunpack.c.0.s8 %v1097
          %v1099 = vlaneseq
          %v1100 = vshrl.u32 %v1099, 7
          %v1101 = vsub.s32 %v1098, %v1100
          %v1102 = vrot.slane %v1094, %v1101
          %v1104 = vunpack.c.l.s4 1934713408
          %v1105 = vunpack.c.0.s8 %v1104
          %v1106 = vlaneseq
          %v1107 = vshrl.u32 %v1106, 7
          %v1108 = vsub.s32 %v1105, %v1107
          %v1109 = vrot.slane %v1095, %v1108
          %v1110 = vcombine.low %v1085, %v1093
          %v1111 = vcombine.high %v1085, %v1093
          %v1113 = vunpack.c.l.s4 1934713408
          %v1114 = vunpack.c.0.s8 %v1113
          %v1115 = vlaneseq
          %v1116 = vshrl.u32 %v1115, 7
          %v1117 = vsub.s32 %v1114, %v1116
          %v1118 = vrot.slane %v1110, %v1117
          %v1120 = vunpack.c.l.s4 1934713408
          %v1121 = vunpack.c.0.s8 %v1120
          %v1122 = vlaneseq
          %v1123 = vshrl.u32 %v1122, 7
          %v1124 = vsub.s32 %v1121, %v1123
          %v1125 = vrot.slane %v1111, %v1124
          %v1126 = vcombine.low %v1102, %v1118
          %v1127 = vcombine.high %v1102, %v1118
          %v1128 = vcombine.low %v1109, %v1125
          %v1129 = vcombine.high %v1109, %v1125
          %v1130 = vcombine.low %v1034, %v1041
          %v1132 = vunpack.c.l.s4 1983009808
          %v1133 = vunpack.c.0.s8 %v1132
          %v1134 = vlaneseq
          %v1135 = vshrl.u32 %v1134, 7
          %v1136 = vsub.s32 %v1133, %v1135
          %v1137 = vrot.slane %v1130, %v1136
          %v1138 = vcombine.low %v1058, %v1059
          %v1140 = vunpack.c.l.s4 1983009808
          %v1141 = vunpack.c.0.s8 %v1140
          %v1142 = vlaneseq
          %v1143 = vshrl.u32 %v1142, 7
          %v1144 = vsub.s32 %v1141, %v1143
          %v1145 = vrot.slane %v1138, %v1144
          %v1146 = vcombine.low %v1050, %v1057
          %v1148 = vunpack.c.l.s4 1983009808
          %v1149 = vunpack.c.0.s8 %v1148
          %v1150 = vlaneseq
          %v1151 = vshrl.u32 %v1150, 7
          %v1152 = vsub.s32 %v1149, %v1151
          %v1153 = vrot.slane %v1146, %v1152
          %v1154 = vcombine.low %v1060, %v1061
          %v1156 = vunpack.c.l.s4 1983009808
          %v1157 = vunpack.c.0.s8 %v1156
          %v1158 = vlaneseq
          %v1159 = vshrl.u32 %v1158, 7
          %v1160 = vsub.s32 %v1157, %v1159
          %v1161 = vrot.slane %v1154, %v1160
          %v1162 = vcombine.low %v1137, %v1145
          %v1163 = vcombine.high %v1137, %v1145
          %v1165 = vunpack.c.l.s4 1934713408
          %v1166 = vunpack.c.0.s8 %v1165
          %v1167 = vlaneseq
          %v1168 = vshrl.u32 %v1167, 7
          %v1169 = vsub.s32 %v1166, %v1168
          %v1170 = vrot.slane %v1162, %v1169
          %v1172 = vunpack.c.l.s4 1934713408
          %v1173 = vunpack.c.0.s8 %v1172
          %v1174 = vlaneseq
          %v1175 = vshrl.u32 %v1174, 7
          %v1176 = vsub.s32 %v1173, %v1175
          %v1177 = vrot.slane %v1163, %v1176
          %v1178 = vcombine.low %v1153, %v1161
          %v1179 = vcombine.high %v1153, %v1161
          %v1181 = vunpack.c.l.s4 1934713408
          %v1182 = vunpack.c.0.s8 %v1181
          %v1183 = vlaneseq
          %v1184 = vshrl.u32 %v1183, 7
          %v1185 = vsub.s32 %v1182, %v1184
          %v1186 = vrot.slane %v1178, %v1185
          %v1188 = vunpack.c.l.s4 1934713408
          %v1189 = vunpack.c.0.s8 %v1188
          %v1190 = vlaneseq
          %v1191 = vshrl.u32 %v1190, 7
          %v1192 = vsub.s32 %v1189, %v1191
          %v1193 = vrot.slane %v1179, %v1192
          %v1194 = vcombine.low %v1170, %v1186
          %v1195 = vcombine.high %v1170, %v1186
          %v1196 = vcombine.low %v1177, %v1193
          %v1197 = vcombine.high %v1177, %v1193
          %v1198 = vpack.c.bf16 %v1194, %v1126
          %v1199 = vpack.c.bf16 %v1195, %v1127
          %v1200 = vpack.c.bf16 %v1196, %v1128
          %v1201 = vpack.c.bf16 %v1197, %v1129
          %v1206 = vunpack.c.l.b16 %v1198
          %v1207 = vunpack.c.h.b16 %v1198
          %v1208 = vunpack.c.l.b16 %v1199
          %v1209 = vunpack.c.h.b16 %v1199
          %v1210 = vunpack.c.l.b16 %v1200
          %v1211 = vunpack.c.h.b16 %v1200
          %v1212 = vunpack.c.l.b16 %v1201
          %v1213 = vunpack.c.h.b16 %v1201
          %v1214 = vpack.c.b16 %v1206, %v1206
          %v1215 = vpack.c.b16 %v1207, %v1207
          %v1216 = vpack.c.b16 %v1208, %v1208
          %v1217 = vpack.c.b16 %v1209, %v1209
          %v1218 = vpack.c.b16 %v1210, %v1210
          %v1219 = vpack.c.b16 %v1211, %v1211
          %v1220 = vpack.c.b16 %v1212, %v1212
          %v1221 = vpack.c.b16 %v1213, %v1213
          %vm1230 = vcmask 257024
          %1231 = vst.msk [vmem:[#allocation3] sm:$0xf] %vm1230, %v1214
          %1232 = vst.msk [vmem:[#allocation3 + $0x4] sm:$0xf] %vm1230, %v1215
          %1233 = vst.msk [vmem:[#allocation3 + $0x8] sm:$0xf] %vm1230, %v1216
          %1234 = vst.msk [vmem:[#allocation3 + $0xc] sm:$0xf] %vm1230, %v1217
          %1235 = vst.msk [vmem:[#allocation3 + $0x10] sm:$0xf] %vm1230, %v1218
          %1236 = vst.msk [vmem:[#allocation3 + $0x14] sm:$0xf] %vm1230, %v1219
          %1237 = vst.msk [vmem:[#allocation3 + $0x18] sm:$0xf] %vm1230, %v1220
          %1238 = vst.msk [vmem:[#allocation3 + $0x1c] sm:$0xf] %vm1230, %v1221
        $region92: #{_encoder_layer_jit.1} parent=87 // pred_fallthru
          _
        %s1239 = smul.u32 %s36, 8
        %s1240 = scalar_lea.vmem %s560, %s1239
        %v1241 = vld [vmem:[%s1240] sm:$0xff]
        %v1242 = vpack.c.bf16 %v1241, %v1241
        %v1243 = vld [vmem:[%s1] sm:$0xf]
        %v1244 = vld [vmem:[%s1 + $0x4] sm:$0xf]
        %v1245 = vld [vmem:[%s1 + $0x8] sm:$0xf]
        %v1246 = vld [vmem:[%s1 + $0xc] sm:$0xf]
        %v1247 = vld [vmem:[%s1 + $0x10] sm:$0xf]
        %v1248 = vld [vmem:[%s1 + $0x14] sm:$0xf]
        %v1249 = vld [vmem:[%s1 + $0x18] sm:$0xf]
        %v1250 = vld [vmem:[%s1 + $0x1c] sm:$0xf]
        %v1251 = vld [vmem:[%s1 + $0x20] sm:$0xf]
        %v1252 = vld [vmem:[%s1 + $0x24] sm:$0xf]
        %v1253 = vld [vmem:[%s1 + $0x28] sm:$0xf]
        %v1254 = vld [vmem:[%s1 + $0x2c] sm:$0xf]
        %v1255 = vld [vmem:[%s1 + $0x30] sm:$0xf]
        %v1256 = vld [vmem:[%s1 + $0x34] sm:$0xf]
        %v1257 = vld [vmem:[%s1 + $0x38] sm:$0xf]
        %v1258 = vld [vmem:[%s1 + $0x3c] sm:$0xf]
        %v1259 = vld [vmem:[%s2] sm:$0x1]
        %v1261 = vlaneseq
        %v1262 = vshrl.u32 %v1261, 7
        %v1263 = vsub.s32 0, %v1262
        %v1264 = vrot.slane %v1259, %v1263
        %v1282 = vunpack.c.l.b16 %v1243
        %v1283 = vunpack.c.l.b16 %v1244
        %v1284 = vunpack.c.l.b16 %v1245
        %v1285 = vunpack.c.l.b16 %v1246
        %v1286 = vunpack.c.l.b16 %v1247
        %v1287 = vunpack.c.l.b16 %v1248
        %v1288 = vunpack.c.l.b16 %v1249
        %v1289 = vunpack.c.l.b16 %v1250
        %v1290 = vunpack.c.l.b16 %v1251
        %v1291 = vunpack.c.l.b16 %v1252
        %v1292 = vunpack.c.l.b16 %v1253
        %v1293 = vunpack.c.l.b16 %v1254
        %v1294 = vunpack.c.l.b16 %v1255
        %v1295 = vunpack.c.l.b16 %v1256
        %v1296 = vunpack.c.l.b16 %v1257
        %v1297 = vunpack.c.l.b16 %v1258
        %v1298 = vpack.c.b16 %v1283, %v1282
        %v1299 = vpack.c.b16 %v1285, %v1284
        %v1300 = vpack.c.b16 %v1287, %v1286
        %v1301 = vpack.c.b16 %v1289, %v1288
        %v1302 = vpack.c.b16 %v1291, %v1290
        %v1303 = vpack.c.b16 %v1293, %v1292
        %v1304 = vpack.c.b16 %v1295, %v1294
        %v1305 = vpack.c.b16 %v1297, %v1296
        %1314 = vmatprep.subr.bf16.mxu0 0
        %1315 = vmatpush1.bf16.msra.mxu0 %v1305
        %1316 = vmatprep.subr.bf16.mxu0 0
        %1317 = vmatpush1.bf16.msra.mxu0 %v1304
        %1318 = vmatprep.subr.bf16.mxu0 0
        %1319 = vmatpush1.bf16.msra.mxu0 %v1303
        %1320 = vmatprep.subr.bf16.mxu0 0
        %1321 = vmatpush1.bf16.msra.mxu0 %v1302
        %1322 = vmatprep.subr.bf16.mxu0 0
        %1323 = vmatpush1.bf16.msra.mxu0 %v1301
        %1324 = vmatprep.subr.bf16.mxu0 0
        %1325 = vmatpush1.bf16.msra.mxu0 %v1300
        %1326 = vmatprep.subr.bf16.mxu0 0
        %1327 = vmatpush1.bf16.msra.mxu0 %v1299
        %1328 = vmatprep.subr.bf16.mxu0 0
        %1329 = vmatpush1.bf16.msra.mxu0 %v1298
        %1330 = vmatprep.subr.bf16.mxu0 0
        %1331 = vmatpush2.bf16.msra.mxu0 0
        %1332 = vmatprep.subr.bf16.mxu0 0
        %1333 = vmatpush2.bf16.msra.mxu0 0
        %1334 = vmatprep.subr.bf16.mxu0 0
        %1335 = vmatpush2.bf16.msra.mxu0 0
        %1336 = vmatprep.subr.bf16.mxu0 0
        %1337 = vmatpush2.bf16.msra.mxu0 0
        %1338 = vmatprep.subr.bf16.mxu0 0
        %1339 = vmatpush2.bf16.msra.mxu0 0
        %1340 = vmatprep.subr.bf16.mxu0 0
        %1341 = vmatpush2.bf16.msra.mxu0 0
        %1342 = vmatprep.subr.bf16.mxu0 0
        %1343 = vmatpush2.bf16.msra.mxu0 0
        %1344 = vmatprep.subr.bf16.mxu0 0
        %1345 = vmatpush2.bf16.msra.mxu0 0
        %1346 = vmatprep.mubr.bf16.mxu0 0
        %1347 = vmatmul.mubr.bf16.gmra.mxu0 %v1242
        %v1348 = vpop.f32.mrf.mxu0
        %v1349 = vadd.f32 %v1264, %v1348
        %v1350 = vpop.f32.mrf.mxu0
        %v1351 = vpop.f32.mrf.mxu0
        %v1352 = vpop.f32.mrf.mxu0
        %1353 = vdwg.mxu0
        %v1354 = vpack.c.bf16 %v1349, %v1349
        %1356 = vrot.lane.b32.xlu0 %v1354, 96
        %v1357 = vpop.permute.xlu0 %1356
        %1358 = vrot.lane.b32.xlu0 %v1354, 64
        %v1359 = vpop.permute.xlu0 %1358
        %1360 = vrot.lane.b32.xlu0 %v1354, 32
        %v1361 = vpop.permute.xlu0 %1360
        %v1363 = vunpack.c.l.s4 1983009808
        %v1364 = vunpack.c.0.s8 %v1363
        %v1365 = vlaneseq
        %v1366 = vshrl.u32 %v1365, 7
        %v1367 = vsub.s32 %v1364, %v1366
        %v1368 = vrot.slane %v1354, %v1367
        %v1371 = vunpack.c.l.s4 1983009808
        %v1372 = vunpack.c.0.s8 %v1371
        %v1373 = vlaneseq
        %v1374 = vshrl.u32 %v1373, 7
        %v1375 = vsub.s32 %v1372, %v1374
        %v1376 = vrot.slane %v1359, %v1375
        %v1377 = vcombine.low %v1368, %v1376
        %v1378 = vcombine.high %v1368, %v1376
        %v1380 = vunpack.c.l.s4 1934713408
        %v1381 = vunpack.c.0.s8 %v1380
        %v1382 = vlaneseq
        %v1383 = vshrl.u32 %v1382, 7
        %v1384 = vsub.s32 %v1381, %v1383
        %v1385 = vrot.slane %v1377, %v1384
        %v1387 = vunpack.c.l.s4 1934713408
        %v1388 = vunpack.c.0.s8 %v1387
        %v1389 = vlaneseq
        %v1390 = vshrl.u32 %v1389, 7
        %v1391 = vsub.s32 %v1388, %v1390
        %v1392 = vrot.slane %v1378, %v1391
        %v1393 = vcombine.high %v1385, 0
        %v1394 = vcombine.high %v1392, 0
        %v1397 = vunpack.c.l.s4 1983009808
        %v1398 = vunpack.c.0.s8 %v1397
        %v1399 = vlaneseq
        %v1400 = vshrl.u32 %v1399, 7
        %v1401 = vsub.s32 %v1398, %v1400
        %v1402 = vrot.slane %v1357, %v1401
        %v1405 = vunpack.c.l.s4 1983009808
        %v1406 = vunpack.c.0.s8 %v1405
        %v1407 = vlaneseq
        %v1408 = vshrl.u32 %v1407, 7
        %v1409 = vsub.s32 %v1406, %v1408
        %v1410 = vrot.slane %v1361, %v1409
        %v1411 = vcombine.low %v1402, %v1410
        %v1412 = vcombine.high %v1402, %v1410
        %v1414 = vunpack.c.l.s4 1934713408
        %v1415 = vunpack.c.0.s8 %v1414
        %v1416 = vlaneseq
        %v1417 = vshrl.u32 %v1416, 7
        %v1418 = vsub.s32 %v1415, %v1417
        %v1419 = vrot.slane %v1411, %v1418
        %v1421 = vunpack.c.l.s4 1934713408
        %v1422 = vunpack.c.0.s8 %v1421
        %v1423 = vlaneseq
        %v1424 = vshrl.u32 %v1423, 7
        %v1425 = vsub.s32 %v1422, %v1424
        %v1426 = vrot.slane %v1412, %v1425
        %v1427 = vcombine.high %v1419, 0
        %v1428 = vcombine.high %v1426, 0
        %v1431 = vpack.i.b16 %v1419, %v1385
        %v1433 = vshrl.u32 %v1385, 16
        %v1434 = vshrl.u32 %v1419, 16
        %v1435 = vpack.i.b16 %v1434, %v1433
        %v1439 = vpack.i.b16 %v1427, %v1393
        %v1441 = vshrl.u32 %v1393, 16
        %v1442 = vshrl.u32 %v1427, 16
        %v1443 = vpack.i.b16 %v1442, %v1441
        %v1447 = vpack.i.b16 %v1426, %v1392
        %v1449 = vshrl.u32 %v1392, 16
        %v1450 = vshrl.u32 %v1426, 16
        %v1451 = vpack.i.b16 %v1450, %v1449
        %v1455 = vpack.i.b16 %v1428, %v1394
        %v1457 = vshrl.u32 %v1394, 16
        %v1458 = vshrl.u32 %v1428, 16
        %v1459 = vpack.i.b16 %v1458, %v1457
        %v1461 = vcombine.low %v1431, %v1447
        %v1463 = vunpack.c.l.s4 1983009808
        %v1464 = vunpack.c.0.s8 %v1463
        %v1465 = vlaneseq
        %v1466 = vshrl.u32 %v1465, 7
        %v1467 = vsub.s32 %v1464, %v1466
        %v1468 = vrot.slane %v1461, %v1467
        %v1469 = vcombine.low %v1439, %v1455
        %v1471 = vunpack.c.l.s4 1983009808
        %v1472 = vunpack.c.0.s8 %v1471
        %v1473 = vlaneseq
        %v1474 = vshrl.u32 %v1473, 7
        %v1475 = vsub.s32 %v1472, %v1474
        %v1476 = vrot.slane %v1469, %v1475
        %v1477 = vcombine.low %v1468, %v1476
        %v1479 = vunpack.c.l.s4 1934713408
        %v1480 = vunpack.c.0.s8 %v1479
        %v1481 = vlaneseq
        %v1482 = vshrl.u32 %v1481, 7
        %v1483 = vsub.s32 %v1480, %v1482
        %v1484 = vrot.slane %v1477, %v1483
        %v1485 = vcombine.high %v1484, 0
        %v1486 = vcombine.low %v1435, %v1451
        %v1488 = vunpack.c.l.s4 1983009808
        %v1489 = vunpack.c.0.s8 %v1488
        %v1490 = vlaneseq
        %v1491 = vshrl.u32 %v1490, 7
        %v1492 = vsub.s32 %v1489, %v1491
        %v1493 = vrot.slane %v1486, %v1492
        %v1494 = vcombine.low %v1443, %v1459
        %v1496 = vunpack.c.l.s4 1983009808
        %v1497 = vunpack.c.0.s8 %v1496
        %v1498 = vlaneseq
        %v1499 = vshrl.u32 %v1498, 7
        %v1500 = vsub.s32 %v1497, %v1499
        %v1501 = vrot.slane %v1494, %v1500
        %v1502 = vcombine.low %v1493, %v1501
        %v1504 = vunpack.c.l.s4 1934713408
        %v1505 = vunpack.c.0.s8 %v1504
        %v1506 = vlaneseq
        %v1507 = vshrl.u32 %v1506, 7
        %v1508 = vsub.s32 %v1505, %v1507
        %v1509 = vrot.slane %v1502, %v1508
        %v1510 = vcombine.high %v1509, 0
        %v1513 = vpack.i.b16 %v1509, %v1484
        %v1514 = vshrl.u32 %v1484, 16
        %v1515 = vshrl.u32 %v1509, 16
        %v1516 = vpack.i.b16 %v1515, %v1514
        %v1519 = vpack.i.b16 %v1510, %v1485
        %v1520 = vshrl.u32 %v1485, 16
        %v1521 = vshrl.u32 %v1510, 16
        %v1522 = vpack.i.b16 %v1521, %v1520
        %v1523 = vld [vmem:[#allocation2] sm:$0xf]
        %v1524 = vld [vmem:[#allocation2 + $0x4] sm:$0xf]
        %v1525 = vld [vmem:[#allocation2 + $0x8] sm:$0xf]
        %v1526 = vld [vmem:[#allocation2 + $0xc] sm:$0xf]
        %v1527 = vld [vmem:[#allocation2 + $0x10] sm:$0xf]
        %v1528 = vld [vmem:[#allocation2 + $0x14] sm:$0xf]
        %v1529 = vld [vmem:[#allocation2 + $0x18] sm:$0xf]
        %v1530 = vld [vmem:[#allocation2 + $0x1c] sm:$0xf]
        %v1531 = vld [vmem:[#allocation2 + $0x20] sm:$0xf]
        %v1532 = vld [vmem:[#allocation2 + $0x24] sm:$0xf]
        %v1533 = vld [vmem:[#allocation2 + $0x28] sm:$0xf]
        %v1534 = vld [vmem:[#allocation2 + $0x2c] sm:$0xf]
        %v1535 = vld [vmem:[#allocation2 + $0x30] sm:$0xf]
        %v1536 = vld [vmem:[#allocation2 + $0x34] sm:$0xf]
        %v1537 = vld [vmem:[#allocation2 + $0x38] sm:$0xf]
        %v1538 = vld [vmem:[#allocation2 + $0x3c] sm:$0xf]
        %v1539 = vld [vmem:[#allocation3] sm:$0xf]
        %v1540 = vld [vmem:[#allocation3 + $0x4] sm:$0xf]
        %v1541 = vld [vmem:[#allocation3 + $0x8] sm:$0xf]
        %v1542 = vld [vmem:[#allocation3 + $0xc] sm:$0xf]
        %v1543 = vld [vmem:[#allocation3 + $0x10] sm:$0xf]
        %v1544 = vld [vmem:[#allocation3 + $0x14] sm:$0xf]
        %v1545 = vld [vmem:[#allocation3 + $0x18] sm:$0xf]
        %v1546 = vld [vmem:[#allocation3 + $0x1c] sm:$0xf]
        %v1551 = vunpack.c.l.b16 %v1523
        %v1552 = vunpack.c.l.b16 %v1524
        %v1553 = vunpack.c.l.b16 %v1525
        %v1554 = vunpack.c.l.b16 %v1526
        %v1555 = vpack.c.b16 %v1552, %v1551
        %v1556 = vpack.c.b16 %v1554, %v1553
        %vm1559 = vcmask 261120
        %v1561 = vsel %vm1559, %v1513, 0
        %1563 = vmatprep.subr.bf16.mxu0 0
        %1564 = vmatpush1.bf16.msra.mxu0 0
        %1565 = vmatprep.subr.bf16.mxu0 0
        %1566 = vmatpush1.bf16.msra.mxu0 0
        %1567 = vmatprep.subr.bf16.mxu0 0
        %1568 = vmatpush1.bf16.msra.mxu0 0
        %1569 = vmatprep.subr.bf16.mxu0 0
        %1570 = vmatpush1.bf16.msra.mxu0 0
        %1571 = vmatprep.subr.bf16.mxu0 0
        %1572 = vmatpush1.bf16.msra.mxu0 0
        %1573 = vmatprep.subr.bf16.mxu0 0
        %1574 = vmatpush1.bf16.msra.mxu0 0
        %1575 = vmatprep.subr.bf16.mxu0 0
        %1576 = vmatpush1.bf16.msra.mxu0 %v1556
        %1577 = vmatprep.subr.bf16.mxu0 0
        %1578 = vmatpush1.bf16.msra.mxu0 %v1555
        %1579 = vmatprep.subr.bf16.mxu0 0
        %1580 = vmatpush2.bf16.msra.mxu0 0
        %1581 = vmatprep.subr.bf16.mxu0 0
        %1582 = vmatpush2.bf16.msra.mxu0 0
        %1583 = vmatprep.subr.bf16.mxu0 0
        %1584 = vmatpush2.bf16.msra.mxu0 0
        %1585 = vmatprep.subr.bf16.mxu0 0
        %1586 = vmatpush2.bf16.msra.mxu0 0
        %1587 = vmatprep.subr.bf16.mxu0 0
        %1588 = vmatpush2.bf16.msra.mxu0 0
        %1589 = vmatprep.subr.bf16.mxu0 0
        %1590 = vmatpush2.bf16.msra.mxu0 0
        %1591 = vmatprep.subr.bf16.mxu0 0
        %1592 = vmatpush2.bf16.msra.mxu0 0
        %1593 = vmatprep.subr.bf16.mxu0 0
        %1594 = vmatpush2.bf16.msra.mxu0 0
        %1595 = vmatprep.mubr.bf16.mxu0 0
        %1596 = vmatmul.mubr.bf16.gmra.mxu0 %v1561
        %v1597 = vpop.f32.mrf.mxu0
        %v1598 = vadd.f32 0.0, %v1597
        %v1599 = vpop.f32.mrf.mxu0
        %v1600 = vpop.f32.mrf.mxu0
        %v1601 = vpop.f32.mrf.mxu0
        %1602 = vdwg.mxu0
        %v1607 = vunpack.c.l.b16 %v1527
        %v1608 = vunpack.c.l.b16 %v1528
        %v1609 = vunpack.c.l.b16 %v1529
        %v1610 = vunpack.c.l.b16 %v1530
        %v1611 = vpack.c.b16 %v1608, %v1607
        %v1612 = vpack.c.b16 %v1610, %v1609
        %v1616 = vsel %vm1559, %v1516, 0
        %1618 = vmatprep.subr.bf16.mxu0 0
        %1619 = vmatpush1.bf16.msra.mxu0 0
        %1620 = vmatprep.subr.bf16.mxu0 0
        %1621 = vmatpush1.bf16.msra.mxu0 0
        %1622 = vmatprep.subr.bf16.mxu0 0
        %1623 = vmatpush1.bf16.msra.mxu0 0
        %1624 = vmatprep.subr.bf16.mxu0 0
        %1625 = vmatpush1.bf16.msra.mxu0 0
        %1626 = vmatprep.subr.bf16.mxu0 0
        %1627 = vmatpush1.bf16.msra.mxu0 0
        %1628 = vmatprep.subr.bf16.mxu0 0
        %1629 = vmatpush1.bf16.msra.mxu0 0
        %1630 = vmatprep.subr.bf16.mxu0 0
        %1631 = vmatpush1.bf16.msra.mxu0 %v1612
        %1632 = vmatprep.subr.bf16.mxu0 0
        %1633 = vmatpush1.bf16.msra.mxu0 %v1611
        %1634 = vmatprep.subr.bf16.mxu0 0
        %1635 = vmatpush2.bf16.msra.mxu0 0
        %1636 = vmatprep.subr.bf16.mxu0 0
        %1637 = vmatpush2.bf16.msra.mxu0 0
        %1638 = vmatprep.subr.bf16.mxu0 0
        %1639 = vmatpush2.bf16.msra.mxu0 0
        %1640 = vmatprep.subr.bf16.mxu0 0
        %1641 = vmatpush2.bf16.msra.mxu0 0
        %1642 = vmatprep.subr.bf16.mxu0 0
        %1643 = vmatpush2.bf16.msra.mxu0 0
        %1644 = vmatprep.subr.bf16.mxu0 0
        %1645 = vmatpush2.bf16.msra.mxu0 0
        %1646 = vmatprep.subr.bf16.mxu0 0
        %1647 = vmatpush2.bf16.msra.mxu0 0
        %1648 = vmatprep.subr.bf16.mxu0 0
        %1649 = vmatpush2.bf16.msra.mxu0 0
        %1650 = vmatprep.mubr.bf16.mxu0 0
        %1651 = vmatmul.mubr.bf16.gmra.mxu0 %v1616
        %v1652 = vpop.f32.mrf.mxu0
        %v1653 = vadd.f32 0.0, %v1652
        %v1654 = vpop.f32.mrf.mxu0
        %v1655 = vpop.f32.mrf.mxu0
        %v1656 = vpop.f32.mrf.mxu0
        %1657 = vdwg.mxu0
        %v1662 = vunpack.c.l.b16 %v1531
        %v1663 = vunpack.c.l.b16 %v1532
        %v1664 = vunpack.c.l.b16 %v1533
        %v1665 = vunpack.c.l.b16 %v1534
        %v1666 = vpack.c.b16 %v1663, %v1662
        %v1667 = vpack.c.b16 %v1665, %v1664
        %v1671 = vsel %vm1559, %v1519, 0
        %1673 = vmatprep.subr.bf16.mxu0 0
        %1674 = vmatpush1.bf16.msra.mxu0 0
        %1675 = vmatprep.subr.bf16.mxu0 0
        %1676 = vmatpush1.bf16.msra.mxu0 0
        %1677 = vmatprep.subr.bf16.mxu0 0
        %1678 = vmatpush1.bf16.msra.mxu0 0
        %1679 = vmatprep.subr.bf16.mxu0 0
        %1680 = vmatpush1.bf16.msra.mxu0 0
        %1681 = vmatprep.subr.bf16.mxu0 0
        %1682 = vmatpush1.bf16.msra.mxu0 0
        %1683 = vmatprep.subr.bf16.mxu0 0
        %1684 = vmatpush1.bf16.msra.mxu0 0
        %1685 = vmatprep.subr.bf16.mxu0 0
        %1686 = vmatpush1.bf16.msra.mxu0 %v1667
        %1687 = vmatprep.subr.bf16.mxu0 0
        %1688 = vmatpush1.bf16.msra.mxu0 %v1666
        %1689 = vmatprep.subr.bf16.mxu0 0
        %1690 = vmatpush2.bf16.msra.mxu0 0
        %1691 = vmatprep.subr.bf16.mxu0 0
        %1692 = vmatpush2.bf16.msra.mxu0 0
        %1693 = vmatprep.subr.bf16.mxu0 0
        %1694 = vmatpush2.bf16.msra.mxu0 0
        %1695 = vmatprep.subr.bf16.mxu0 0
        %1696 = vmatpush2.bf16.msra.mxu0 0
        %1697 = vmatprep.subr.bf16.mxu0 0
        %1698 = vmatpush2.bf16.msra.mxu0 0
        %1699 = vmatprep.subr.bf16.mxu0 0
        %1700 = vmatpush2.bf16.msra.mxu0 0
        %1701 = vmatprep.subr.bf16.mxu0 0
        %1702 = vmatpush2.bf16.msra.mxu0 0
        %1703 = vmatprep.subr.bf16.mxu0 0
        %1704 = vmatpush2.bf16.msra.mxu0 0
        %1705 = vmatprep.mubr.bf16.mxu0 0
        %1706 = vmatmul.mubr.bf16.gmra.mxu0 %v1671
        %v1707 = vpop.f32.mrf.mxu0
        %v1708 = vadd.f32 0.0, %v1707
        %v1709 = vpop.f32.mrf.mxu0
        %v1710 = vpop.f32.mrf.mxu0
        %v1711 = vpop.f32.mrf.mxu0
        %1712 = vdwg.mxu0
        %v1717 = vunpack.c.l.b16 %v1535
        %v1718 = vunpack.c.l.b16 %v1536
        %v1719 = vunpack.c.l.b16 %v1537
        %v1720 = vunpack.c.l.b16 %v1538
        %v1721 = vpack.c.b16 %v1718, %v1717
        %v1722 = vpack.c.b16 %v1720, %v1719
        %v1726 = vsel %vm1559, %v1522, 0
        %1728 = vmatprep.subr.bf16.mxu0 0
        %1729 = vmatpush1.bf16.msra.mxu0 0
        %1730 = vmatprep.subr.bf16.mxu0 0
        %1731 = vmatpush1.bf16.msra.mxu0 0
        %1732 = vmatprep.subr.bf16.mxu0 0
        %1733 = vmatpush1.bf16.msra.mxu0 0
        %1734 = vmatprep.subr.bf16.mxu0 0
        %1735 = vmatpush1.bf16.msra.mxu0 0
        %1736 = vmatprep.subr.bf16.mxu0 0
        %1737 = vmatpush1.bf16.msra.mxu0 0
        %1738 = vmatprep.subr.bf16.mxu0 0
        %1739 = vmatpush1.bf16.msra.mxu0 0
        %1740 = vmatprep.subr.bf16.mxu0 0
        %1741 = vmatpush1.bf16.msra.mxu0 %v1722
        %1742 = vmatprep.subr.bf16.mxu0 0
        %1743 = vmatpush1.bf16.msra.mxu0 %v1721
        %1744 = vmatprep.subr.bf16.mxu0 0
        %1745 = vmatpush2.bf16.msra.mxu0 0
        %1746 = vmatprep.subr.bf16.mxu0 0
        %1747 = vmatpush2.bf16.msra.mxu0 0
        %1748 = vmatprep.subr.bf16.mxu0 0
        %1749 = vmatpush2.bf16.msra.mxu0 0
        %1750 = vmatprep.subr.bf16.mxu0 0
        %1751 = vmatpush2.bf16.msra.mxu0 0
        %1752 = vmatprep.subr.bf16.mxu0 0
        %1753 = vmatpush2.bf16.msra.mxu0 0
        %1754 = vmatprep.subr.bf16.mxu0 0
        %1755 = vmatpush2.bf16.msra.mxu0 0
        %1756 = vmatprep.subr.bf16.mxu0 0
        %1757 = vmatpush2.bf16.msra.mxu0 0
        %1758 = vmatprep.subr.bf16.mxu0 0
        %1759 = vmatpush2.bf16.msra.mxu0 0
        %1760 = vmatprep.mubr.bf16.mxu0 0
        %1761 = vmatmul.mubr.bf16.gmra.mxu0 %v1726
        %v1762 = vpop.f32.mrf.mxu0
        %v1763 = vadd.f32 0.0, %v1762
        %v1764 = vpop.f32.mrf.mxu0
        %v1765 = vpop.f32.mrf.mxu0
        %v1766 = vpop.f32.mrf.mxu0
        %1767 = vdwg.mxu0
        %vm1768 = vcmask 130048
        %v1769 = vsel %vm1768, %v1598, -inf
        %1770 = vmax.xlane.f32.xlu0 %v1769
        %v1771 = vpop.xlane.xlu0 %1770
        %v1772 = vsel %vm1768, %v1653, -inf
        %1773 = vmax.xlane.f32.xlu0 %v1772
        %v1774 = vpop.xlane.xlu0 %1773
        %v1775 = vsel %vm1768, %v1708, -inf
        %1776 = vmax.xlane.f32.xlu0 %v1775
        %v1777 = vpop.xlane.xlu0 %1776
        %v1778 = vsel %vm1768, %v1763, -inf
        %1779 = vmax.xlane.f32.xlu0 %v1778
        %v1780 = vpop.xlane.xlu0 %1779
        %v1781 = vsub.f32 -inf, %v1771
        %v1782 = vsub.f32 -inf, %v1774
        %v1783 = vsub.f32 -inf, %v1777
        %v1784 = vsub.f32 -inf, %v1780
        %v1785 = vmul.f32 %v1781, 1.442695
        %v1786 = vpow.pop %v1785
        %v1787 = vmul.f32 %v1782, 1.442695
        %v1788 = vpow.pop %v1787
        %v1789 = vmul.f32 %v1783, 1.442695
        %v1790 = vpow.pop %v1789
        %v1791 = vmul.f32 %v1784, 1.442695
        %v1792 = vpow.pop %v1791
        %v1793 = vsub.f32 %v1598, %v1771
        %v1794 = vsub.f32 %v1653, %v1774
        %v1795 = vsub.f32 %v1708, %v1777
        %v1796 = vsub.f32 %v1763, %v1780
        %v1797 = vmul.f32 %v1793, 1.442695
        %v1798 = vpow.pop %v1797
        %v1799 = vmul.f32 %v1794, 1.442695
        %v1800 = vpow.pop %v1799
        %v1801 = vmul.f32 %v1795, 1.442695
        %v1802 = vpow.pop %v1801
        %v1803 = vmul.f32 %v1796, 1.442695
        %v1804 = vpow.pop %v1803
        %v1805 = vmul.f32 %v1786, 0.0
        %v1806 = vmul.f32 %v1788, 0.0
        %v1807 = vmul.f32 %v1790, 0.0
        %v1808 = vmul.f32 %v1792, 0.0
        %v1809 = vsel %vm1768, %v1798, 0.0
        %1810 = vadd.xlane.f32.xlu0 %v1809
        %v1811 = vpop.xlane.xlu0 %1810
        %v1812 = vsel %vm1768, %v1800, 0.0
        %1813 = vadd.xlane.f32.xlu0 %v1812
        %v1814 = vpop.xlane.xlu0 %1813
        %v1815 = vsel %vm1768, %v1802, 0.0
        %1816 = vadd.xlane.f32.xlu0 %v1815
        %v1817 = vpop.xlane.xlu0 %1816
        %v1818 = vsel %vm1768, %v1804, 0.0
        %1819 = vadd.xlane.f32.xlu0 %v1818
        %v1820 = vpop.xlane.xlu0 %1819
        %v1821 = vadd.f32 %v1805, %v1811
        %v1822 = vadd.f32 %v1806, %v1814
        %v1823 = vadd.f32 %v1807, %v1817
        %v1824 = vadd.f32 %v1808, %v1820
        %v1825 = vpack.c.bf16 %v1798, %v1798
        %v1826 = vpack.c.bf16 %v1800, %v1800
        %v1827 = vpack.c.bf16 %v1802, %v1802
        %v1828 = vpack.c.bf16 %v1804, %v1804
        %v1831 = vunpack.c.l.b16 %v1539
        %v1832 = vunpack.c.l.b16 %v1540
        %v1833 = vpack.c.b16 %v1832, %v1831
        %v1836 = vsel %vm1768, %v1825, 0
        %1838 = vmatprep.subr.bf16.mxu0 0
        %1839 = vmatpush1.bf16.msra.mxu0 0
        %1840 = vmatprep.subr.bf16.mxu0 0
        %1841 = vmatpush1.bf16.msra.mxu0 0
        %1842 = vmatprep.subr.bf16.mxu0 0
        %1843 = vmatpush1.bf16.msra.mxu0 0
        %1844 = vmatprep.subr.bf16.mxu0 0
        %1845 = vmatpush1.bf16.msra.mxu0 0
        %1846 = vmatprep.subr.bf16.mxu0 0
        %1847 = vmatpush1.bf16.msra.mxu0 0
        %1848 = vmatprep.subr.bf16.mxu0 0
        %1849 = vmatpush1.bf16.msra.mxu0 0
        %1850 = vmatprep.subr.bf16.mxu0 0
        %1851 = vmatpush1.bf16.msra.mxu0 0
        %1852 = vmatprep.subr.bf16.mxu0 0
        %1853 = vmatpush1.bf16.msra.mxu0 %v1833
        %1854 = vmatprep.subr.bf16.mxu0 0
        %1855 = vmatpush2.bf16.msra.mxu0 0
        %1856 = vmatprep.subr.bf16.mxu0 0
        %1857 = vmatpush2.bf16.msra.mxu0 0
        %1858 = vmatprep.subr.bf16.mxu0 0
        %1859 = vmatpush2.bf16.msra.mxu0 0
        %1860 = vmatprep.subr.bf16.mxu0 0
        %1861 = vmatpush2.bf16.msra.mxu0 0
        %1862 = vmatprep.subr.bf16.mxu0 0
        %1863 = vmatpush2.bf16.msra.mxu0 0
        %1864 = vmatprep.subr.bf16.mxu0 0
        %1865 = vmatpush2.bf16.msra.mxu0 0
        %1866 = vmatprep.subr.bf16.mxu0 0
        %1867 = vmatpush2.bf16.msra.mxu0 0
        %1868 = vmatprep.subr.bf16.mxu0 0
        %1869 = vmatpush2.bf16.msra.mxu0 0
        %1870 = vmatprep.mubr.bf16.mxu0 0
        %1871 = vmatmul.mubr.bf16.gmra.mxu0 %v1836
        %v1872 = vpop.f32.mrf.mxu0
        %v1873 = vadd.f32 0.0, %v1872
        %v1874 = vpop.f32.mrf.mxu0
        %v1875 = vpop.f32.mrf.mxu0
        %v1876 = vpop.f32.mrf.mxu0
        %1877 = vdwg.mxu0
        %v1880 = vunpack.c.l.b16 %v1541
        %v1881 = vunpack.c.l.b16 %v1542
        %v1882 = vpack.c.b16 %v1881, %v1880
        %v1885 = vsel %vm1768, %v1826, 0
        %1887 = vmatprep.subr.bf16.mxu0 0
        %1888 = vmatpush1.bf16.msra.mxu0 0
        %1889 = vmatprep.subr.bf16.mxu0 0
        %1890 = vmatpush1.bf16.msra.mxu0 0
        %1891 = vmatprep.subr.bf16.mxu0 0
        %1892 = vmatpush1.bf16.msra.mxu0 0
        %1893 = vmatprep.subr.bf16.mxu0 0
        %1894 = vmatpush1.bf16.msra.mxu0 0
        %1895 = vmatprep.subr.bf16.mxu0 0
        %1896 = vmatpush1.bf16.msra.mxu0 0
        %1897 = vmatprep.subr.bf16.mxu0 0
        %1898 = vmatpush1.bf16.msra.mxu0 0
        %1899 = vmatprep.subr.bf16.mxu0 0
        %1900 = vmatpush1.bf16.msra.mxu0 0
        %1901 = vmatprep.subr.bf16.mxu0 0
        %1902 = vmatpush1.bf16.msra.mxu0 %v1882
        %1903 = vmatprep.subr.bf16.mxu0 0
        %1904 = vmatpush2.bf16.msra.mxu0 0
        %1905 = vmatprep.subr.bf16.mxu0 0
        %1906 = vmatpush2.bf16.msra.mxu0 0
        %1907 = vmatprep.subr.bf16.mxu0 0
        %1908 = vmatpush2.bf16.msra.mxu0 0
        %1909 = vmatprep.subr.bf16.mxu0 0
        %1910 = vmatpush2.bf16.msra.mxu0 0
        %1911 = vmatprep.subr.bf16.mxu0 0
        %1912 = vmatpush2.bf16.msra.mxu0 0
        %1913 = vmatprep.subr.bf16.mxu0 0
        %1914 = vmatpush2.bf16.msra.mxu0 0
        %1915 = vmatprep.subr.bf16.mxu0 0
        %1916 = vmatpush2.bf16.msra.mxu0 0
        %1917 = vmatprep.subr.bf16.mxu0 0
        %1918 = vmatpush2.bf16.msra.mxu0 0
        %1919 = vmatprep.mubr.bf16.mxu0 0
        %1920 = vmatmul.mubr.bf16.gmra.mxu0 %v1885
        %v1921 = vpop.f32.mrf.mxu0
        %v1922 = vadd.f32 0.0, %v1921
        %v1923 = vpop.f32.mrf.mxu0
        %v1924 = vpop.f32.mrf.mxu0
        %v1925 = vpop.f32.mrf.mxu0
        %1926 = vdwg.mxu0
        %v1929 = vunpack.c.l.b16 %v1543
        %v1930 = vunpack.c.l.b16 %v1544
        %v1931 = vpack.c.b16 %v1930, %v1929
        %v1934 = vsel %vm1768, %v1827, 0
        %1936 = vmatprep.subr.bf16.mxu0 0
        %1937 = vmatpush1.bf16.msra.mxu0 0
        %1938 = vmatprep.subr.bf16.mxu0 0
        %1939 = vmatpush1.bf16.msra.mxu0 0
        %1940 = vmatprep.subr.bf16.mxu0 0
        %1941 = vmatpush1.bf16.msra.mxu0 0
        %1942 = vmatprep.subr.bf16.mxu0 0
        %1943 = vmatpush1.bf16.msra.mxu0 0
        %1944 = vmatprep.subr.bf16.mxu0 0
        %1945 = vmatpush1.bf16.msra.mxu0 0
        %1946 = vmatprep.subr.bf16.mxu0 0
        %1947 = vmatpush1.bf16.msra.mxu0 0
        %1948 = vmatprep.subr.bf16.mxu0 0
        %1949 = vmatpush1.bf16.msra.mxu0 0
        %1950 = vmatprep.subr.bf16.mxu0 0
        %1951 = vmatpush1.bf16.msra.mxu0 %v1931
        %1952 = vmatprep.subr.bf16.mxu0 0
        %1953 = vmatpush2.bf16.msra.mxu0 0
        %1954 = vmatprep.subr.bf16.mxu0 0
        %1955 = vmatpush2.bf16.msra.mxu0 0
        %1956 = vmatprep.subr.bf16.mxu0 0
        %1957 = vmatpush2.bf16.msra.mxu0 0
        %1958 = vmatprep.subr.bf16.mxu0 0
        %1959 = vmatpush2.bf16.msra.mxu0 0
        %1960 = vmatprep.subr.bf16.mxu0 0
        %1961 = vmatpush2.bf16.msra.mxu0 0
        %1962 = vmatprep.subr.bf16.mxu0 0
        %1963 = vmatpush2.bf16.msra.mxu0 0
        %1964 = vmatprep.subr.bf16.mxu0 0
        %1965 = vmatpush2.bf16.msra.mxu0 0
        %1966 = vmatprep.subr.bf16.mxu0 0
        %1967 = vmatpush2.bf16.msra.mxu0 0
        %1968 = vmatprep.mubr.bf16.mxu0 0
        %1969 = vmatmul.mubr.bf16.gmra.mxu0 %v1934
        %v1970 = vpop.f32.mrf.mxu0
        %v1971 = vadd.f32 0.0, %v1970
        %v1972 = vpop.f32.mrf.mxu0
        %v1973 = vpop.f32.mrf.mxu0
        %v1974 = vpop.f32.mrf.mxu0
        %1975 = vdwg.mxu0
        %v1978 = vunpack.c.l.b16 %v1545
        %v1979 = vunpack.c.l.b16 %v1546
        %v1980 = vpack.c.b16 %v1979, %v1978
        %v1983 = vsel %vm1768, %v1828, 0
        %1985 = vmatprep.subr.bf16.mxu0 0
        %1986 = vmatpush1.bf16.msra.mxu0 0
        %1987 = vmatprep.subr.bf16.mxu0 0
        %1988 = vmatpush1.bf16.msra.mxu0 0
        %1989 = vmatprep.subr.bf16.mxu0 0
        %1990 = vmatpush1.bf16.msra.mxu0 0
        %1991 = vmatprep.subr.bf16.mxu0 0
        %1992 = vmatpush1.bf16.msra.mxu0 0
        %1993 = vmatprep.subr.bf16.mxu0 0
        %1994 = vmatpush1.bf16.msra.mxu0 0
        %1995 = vmatprep.subr.bf16.mxu0 0
        %1996 = vmatpush1.bf16.msra.mxu0 0
        %1997 = vmatprep.subr.bf16.mxu0 0
        %1998 = vmatpush1.bf16.msra.mxu0 0
        %1999 = vmatprep.subr.bf16.mxu0 0
        %2000 = vmatpush1.bf16.msra.mxu0 %v1980
        %2001 = vmatprep.subr.bf16.mxu0 0
        %2002 = vmatpush2.bf16.msra.mxu0 0
        %2003 = vmatprep.subr.bf16.mxu0 0
        %2004 = vmatpush2.bf16.msra.mxu0 0
        %2005 = vmatprep.subr.bf16.mxu0 0
        %2006 = vmatpush2.bf16.msra.mxu0 0
        %2007 = vmatprep.subr.bf16.mxu0 0
        %2008 = vmatpush2.bf16.msra.mxu0 0
        %2009 = vmatprep.subr.bf16.mxu0 0
        %2010 = vmatpush2.bf16.msra.mxu0 0
        %2011 = vmatprep.subr.bf16.mxu0 0
        %2012 = vmatpush2.bf16.msra.mxu0 0
        %2013 = vmatprep.subr.bf16.mxu0 0
        %2014 = vmatpush2.bf16.msra.mxu0 0
        %2015 = vmatprep.subr.bf16.mxu0 0
        %2016 = vmatpush2.bf16.msra.mxu0 0
        %2017 = vmatprep.mubr.bf16.mxu0 0
        %2018 = vmatmul.mubr.bf16.gmra.mxu0 %v1983
        %v2019 = vpop.f32.mrf.mxu0
        %v2020 = vadd.f32 0.0, %v2019
        %v2021 = vpop.f32.mrf.mxu0
        %v2022 = vpop.f32.mrf.mxu0
        %v2023 = vpop.f32.mrf.mxu0
        %2024 = vdwg.mxu0
        %v2025 = vadd.f32 %v1805, %v1873
        %v2026 = vadd.f32 %v1806, %v1922
        %v2027 = vadd.f32 %v1807, %v1971
        %v2028 = vadd.f32 %v1808, %v2020
        %v2029 = vrcp.pop %v1821
        %v2030 = vrcp.pop %v1822
        %v2031 = vrcp.pop %v1823
        %v2032 = vrcp.pop %v1824
        %v2033 = vmul.f32 %v2025, %v2029
        %v2034 = vmul.f32 %v2026, %v2030
        %v2035 = vmul.f32 %v2027, %v2031
        %v2036 = vmul.f32 %v2028, %v2032
        %v2037 = vcombine.low %v2033, %v2035
        %v2038 = vcombine.high %v2033, %v2035
        %v2040 = vunpack.c.l.s4 1983009808
        %v2041 = vunpack.c.0.s8 %v2040
        %v2042 = vlaneseq
        %v2043 = vshrl.u32 %v2042, 7
        %v2044 = vsub.s32 %v2041, %v2043
        %v2045 = vrot.slane %v2037, %v2044
        %v2047 = vunpack.c.l.s4 1983009808
        %v2048 = vunpack.c.0.s8 %v2047
        %v2049 = vlaneseq
        %v2050 = vshrl.u32 %v2049, 7
        %v2051 = vsub.s32 %v2048, %v2050
        %v2052 = vrot.slane %v2038, %v2051
        %v2053 = vcombine.low %v2034, %v2036
        %v2054 = vcombine.high %v2034, %v2036
        %v2056 = vunpack.c.l.s4 1983009808
        %v2057 = vunpack.c.0.s8 %v2056
        %v2058 = vlaneseq
        %v2059 = vshrl.u32 %v2058, 7
        %v2060 = vsub.s32 %v2057, %v2059
        %v2061 = vrot.slane %v2053, %v2060
        %v2063 = vunpack.c.l.s4 1983009808
        %v2064 = vunpack.c.0.s8 %v2063
        %v2065 = vlaneseq
        %v2066 = vshrl.u32 %v2065, 7
        %v2067 = vsub.s32 %v2064, %v2066
        %v2068 = vrot.slane %v2054, %v2067
        %v2069 = vcombine.low %v2045, %v2061
        %v2070 = vcombine.high %v2045, %v2061
        %v2072 = vunpack.c.l.s4 1934713408
        %v2073 = vunpack.c.0.s8 %v2072
        %v2074 = vlaneseq
        %v2075 = vshrl.u32 %v2074, 7
        %v2076 = vsub.s32 %v2073, %v2075
        %v2077 = vrot.slane %v2069, %v2076
        %v2079 = vunpack.c.l.s4 1934713408
        %v2080 = vunpack.c.0.s8 %v2079
        %v2081 = vlaneseq
        %v2082 = vshrl.u32 %v2081, 7
        %v2083 = vsub.s32 %v2080, %v2082
        %v2084 = vrot.slane %v2070, %v2083
        %v2085 = vcombine.low %v2052, %v2068
        %v2086 = vcombine.high %v2052, %v2068
        %v2088 = vunpack.c.l.s4 1934713408
        %v2089 = vunpack.c.0.s8 %v2088
        %v2090 = vlaneseq
        %v2091 = vshrl.u32 %v2090, 7
        %v2092 = vsub.s32 %v2089, %v2091
        %v2093 = vrot.slane %v2085, %v2092
        %v2095 = vunpack.c.l.s4 1934713408
        %v2096 = vunpack.c.0.s8 %v2095
        %v2097 = vlaneseq
        %v2098 = vshrl.u32 %v2097, 7
        %v2099 = vsub.s32 %v2096, %v2098
        %v2100 = vrot.slane %v2086, %v2099
        %v2101 = vcombine.high %v2077, 0.0
        %v2102 = vcombine.high %v2084, 0.0
        %v2103 = vcombine.high %v2093, 0.0
        %v2104 = vcombine.high %v2100, 0.0
        %v2105 = vcombine.low %v2077, %v2084
        %v2107 = vunpack.c.l.s4 1983009808
        %v2108 = vunpack.c.0.s8 %v2107
        %v2109 = vlaneseq
        %v2110 = vshrl.u32 %v2109, 7
        %v2111 = vsub.s32 %v2108, %v2110
        %v2112 = vrot.slane %v2105, %v2111
        %v2113 = vcombine.low %v2101, %v2102
        %v2115 = vunpack.c.l.s4 1983009808
        %v2116 = vunpack.c.0.s8 %v2115
        %v2117 = vlaneseq
        %v2118 = vshrl.u32 %v2117, 7
        %v2119 = vsub.s32 %v2116, %v2118
        %v2120 = vrot.slane %v2113, %v2119
        %v2121 = vcombine.low %v2093, %v2100
        %v2123 = vunpack.c.l.s4 1983009808
        %v2124 = vunpack.c.0.s8 %v2123
        %v2125 = vlaneseq
        %v2126 = vshrl.u32 %v2125, 7
        %v2127 = vsub.s32 %v2124, %v2126
        %v2128 = vrot.slane %v2121, %v2127
        %v2129 = vcombine.low %v2103, %v2104
        %v2131 = vunpack.c.l.s4 1983009808
        %v2132 = vunpack.c.0.s8 %v2131
        %v2133 = vlaneseq
        %v2134 = vshrl.u32 %v2133, 7
        %v2135 = vsub.s32 %v2132, %v2134
        %v2136 = vrot.slane %v2129, %v2135
        %v2137 = vcombine.low %v2112, %v2120
        %v2138 = vcombine.high %v2112, %v2120
        %v2140 = vunpack.c.l.s4 1934713408
        %v2141 = vunpack.c.0.s8 %v2140
        %v2142 = vlaneseq
        %v2143 = vshrl.u32 %v2142, 7
        %v2144 = vsub.s32 %v2141, %v2143
        %v2145 = vrot.slane %v2137, %v2144
        %v2147 = vunpack.c.l.s4 1934713408
        %v2148 = vunpack.c.0.s8 %v2147
        %v2149 = vlaneseq
        %v2150 = vshrl.u32 %v2149, 7
        %v2151 = vsub.s32 %v2148, %v2150
        %v2152 = vrot.slane %v2138, %v2151
        %v2153 = vcombine.low %v2128, %v2136
        %v2154 = vcombine.high %v2128, %v2136
        %v2156 = vunpack.c.l.s4 1934713408
        %v2157 = vunpack.c.0.s8 %v2156
        %v2158 = vlaneseq
        %v2159 = vshrl.u32 %v2158, 7
        %v2160 = vsub.s32 %v2157, %v2159
        %v2161 = vrot.slane %v2153, %v2160
        %v2163 = vunpack.c.l.s4 1934713408
        %v2164 = vunpack.c.0.s8 %v2163
        %v2165 = vlaneseq
        %v2166 = vshrl.u32 %v2165, 7
        %v2167 = vsub.s32 %v2164, %v2166
        %v2168 = vrot.slane %v2154, %v2167
        %v2169 = vcombine.low %v2145, %v2161
        %v2170 = vcombine.high %v2145, %v2161
        %v2171 = vcombine.low %v2152, %v2168
        %v2172 = vcombine.high %v2152, %v2168
        %2174 = vrot.lane.b32.xlu0 %v2170, 32
        %v2175 = vpop.permute.xlu0 %2174
        %2178 = vrot.lane.b32.xlu0 %v2171, 64
        %v2179 = vpop.permute.xlu0 %2178
        %2182 = vrot.lane.b32.xlu0 %v2172, 96
        %v2183 = vpop.permute.xlu0 %2182
        %v2185 = vsel %vm1559, %v2169, %v2175
        %vm2186 = vcmask 523264
        %v2187 = vsel %vm2186, %v2185, %v2179
        %vm2188 = vcmask 785408
        %v2189 = vsel %vm2188, %v2187, %v2183
        %v2190 = vpack.c.bf16 %v2189, %v2189
        %v2191 = vld [vmem:[%s7] sm:$0xf]
        %v2192 = vld [vmem:[%s7 + $0x4] sm:$0xf]
        %v2193 = vld [vmem:[%s7 + $0x8] sm:$0xf]
        %v2194 = vld [vmem:[%s7 + $0xc] sm:$0xf]
        %v2195 = vld [vmem:[%s7 + $0x10] sm:$0xf]
        %v2196 = vld [vmem:[%s7 + $0x14] sm:$0xf]
        %v2197 = vld [vmem:[%s7 + $0x18] sm:$0xf]
        %v2198 = vld [vmem:[%s7 + $0x1c] sm:$0xf]
        %v2199 = vld [vmem:[%s7 + $0x20] sm:$0xf]
        %v2200 = vld [vmem:[%s7 + $0x24] sm:$0xf]
        %v2201 = vld [vmem:[%s7 + $0x28] sm:$0xf]
        %v2202 = vld [vmem:[%s7 + $0x2c] sm:$0xf]
        %v2203 = vld [vmem:[%s7 + $0x30] sm:$0xf]
        %v2204 = vld [vmem:[%s7 + $0x34] sm:$0xf]
        %v2205 = vld [vmem:[%s7 + $0x38] sm:$0xf]
        %v2206 = vld [vmem:[%s7 + $0x3c] sm:$0xf]
        %v2207 = vld [vmem:[%s8] sm:$0x1]
        %v2209 = vlaneseq
        %v2210 = vshrl.u32 %v2209, 7
        %v2211 = vsub.s32 0, %v2210
        %v2212 = vrot.slane %v2207, %v2211
        %v2230 = vunpack.c.l.b16 %v2191
        %v2231 = vunpack.c.l.b16 %v2192
        %v2232 = vunpack.c.l.b16 %v2193
        %v2233 = vunpack.c.l.b16 %v2194
        %v2234 = vunpack.c.l.b16 %v2195
        %v2235 = vunpack.c.l.b16 %v2196
        %v2236 = vunpack.c.l.b16 %v2197
        %v2237 = vunpack.c.l.b16 %v2198
        %v2238 = vunpack.c.l.b16 %v2199
        %v2239 = vunpack.c.l.b16 %v2200
        %v2240 = vunpack.c.l.b16 %v2201
        %v2241 = vunpack.c.l.b16 %v2202
        %v2242 = vunpack.c.l.b16 %v2203
        %v2243 = vunpack.c.l.b16 %v2204
        %v2244 = vunpack.c.l.b16 %v2205
        %v2245 = vunpack.c.l.b16 %v2206
        %v2246 = vpack.c.b16 %v2231, %v2230
        %v2247 = vpack.c.b16 %v2233, %v2232
        %v2248 = vpack.c.b16 %v2235, %v2234
        %v2249 = vpack.c.b16 %v2237, %v2236
        %v2250 = vpack.c.b16 %v2239, %v2238
        %v2251 = vpack.c.b16 %v2241, %v2240
        %v2252 = vpack.c.b16 %v2243, %v2242
        %v2253 = vpack.c.b16 %v2245, %v2244
        %2262 = vmatprep.subr.bf16.mxu0 0
        %2263 = vmatpush1.bf16.msra.mxu0 %v2253
        %2264 = vmatprep.subr.bf16.mxu0 0
        %2265 = vmatpush1.bf16.msra.mxu0 %v2252
        %2266 = vmatprep.subr.bf16.mxu0 0
        %2267 = vmatpush1.bf16.msra.mxu0 %v2251
        %2268 = vmatprep.subr.bf16.mxu0 0
        %2269 = vmatpush1.bf16.msra.mxu0 %v2250
        %2270 = vmatprep.subr.bf16.mxu0 0
        %2271 = vmatpush1.bf16.msra.mxu0 %v2249
        %2272 = vmatprep.subr.bf16.mxu0 0
        %2273 = vmatpush1.bf16.msra.mxu0 %v2248
        %2274 = vmatprep.subr.bf16.mxu0 0
        %2275 = vmatpush1.bf16.msra.mxu0 %v2247
        %2276 = vmatprep.subr.bf16.mxu0 0
        %2277 = vmatpush1.bf16.msra.mxu0 %v2246
        %2278 = vmatprep.subr.bf16.mxu0 0
        %2279 = vmatpush2.bf16.msra.mxu0 0
        %2280 = vmatprep.subr.bf16.mxu0 0
        %2281 = vmatpush2.bf16.msra.mxu0 0
        %2282 = vmatprep.subr.bf16.mxu0 0
        %2283 = vmatpush2.bf16.msra.mxu0 0
        %2284 = vmatprep.subr.bf16.mxu0 0
        %2285 = vmatpush2.bf16.msra.mxu0 0
        %2286 = vmatprep.subr.bf16.mxu0 0
        %2287 = vmatpush2.bf16.msra.mxu0 0
        %2288 = vmatprep.subr.bf16.mxu0 0
        %2289 = vmatpush2.bf16.msra.mxu0 0
        %2290 = vmatprep.subr.bf16.mxu0 0
        %2291 = vmatpush2.bf16.msra.mxu0 0
        %2292 = vmatprep.subr.bf16.mxu0 0
        %2293 = vmatpush2.bf16.msra.mxu0 0
        %2294 = vmatprep.mubr.bf16.mxu0 0
        %2295 = vmatmul.mubr.bf16.gmra.mxu0 %v2190
        %v2296 = vpop.f32.mrf.mxu0
        %v2297 = vadd.f32 %v2212, %v2296
        %v2298 = vpop.f32.mrf.mxu0
        %v2299 = vpop.f32.mrf.mxu0
        %v2300 = vpop.f32.mrf.mxu0
        %2301 = vdwg.mxu0
        %v2302 = vadd.f32 %v1241, %v2297
        %v2303 = vld [vmem:[%s13] sm:$0x1]
        %v2304 = vld [vmem:[%s14] sm:$0x1]
        %2305 = vadd.xlane.f32.xlu0 %v2302
        %v2306 = vpop.xlane.xlu0 %2305
        %v2307 = vrcp.pop 128.0
        %v2308 = vmul.f32 %v2306, %v2307
        %v2309 = vsub.f32 %v2302, %v2308
        %v2310 = vmul.f32 %v2309, %v2309
        %2311 = vadd.xlane.f32.xlu0 %v2310
        %v2312 = vpop.xlane.xlu0 %2311
        %v2313 = vmul.f32 %v2312, %v2307
        %v2314 = vadd.f32 %v2313, 1e-05
        %v2315 = vrsqrt.pop %v2314
        %v2316 = vmul.f32 %v2309, %v2315
        %v2318 = vlaneseq
        %v2319 = vshrl.u32 %v2318, 7
        %v2320 = vsub.s32 0, %v2319
        %v2321 = vrot.slane %v2303, %v2320
        %v2323 = vmul.f32 %v2316, %v2321
        %v2325 = vlaneseq
        %v2326 = vshrl.u32 %v2325, 7
        %v2327 = vsub.s32 0, %v2326
        %v2328 = vrot.slane %v2304, %v2327
        %v2330 = vadd.f32 %v2323, %v2328
        %v2331 = vpack.c.bf16 %v2330, %v2330
        %v2332 = vld [vmem:[%s9] sm:$0xff]
        %v2333 = vld [vmem:[%s9 + $0x8] sm:$0xff]
        %v2334 = vld [vmem:[%s9 + $0x10] sm:$0xff]
        %v2335 = vld [vmem:[%s9 + $0x18] sm:$0xff]
        %v2336 = vld [vmem:[%s9 + $0x20] sm:$0xff]
        %v2337 = vld [vmem:[%s9 + $0x28] sm:$0xff]
        %v2338 = vld [vmem:[%s9 + $0x30] sm:$0xff]
        %v2339 = vld [vmem:[%s9 + $0x38] sm:$0xff]
        %v2340 = vld [vmem:[%s9 + $0x40] sm:$0xff]
        %v2341 = vld [vmem:[%s9 + $0x48] sm:$0xff]
        %v2342 = vld [vmem:[%s9 + $0x50] sm:$0xff]
        %v2343 = vld [vmem:[%s9 + $0x58] sm:$0xff]
        %v2344 = vld [vmem:[%s9 + $0x60] sm:$0xff]
        %v2345 = vld [vmem:[%s9 + $0x68] sm:$0xff]
        %v2346 = vld [vmem:[%s9 + $0x70] sm:$0xff]
        %v2347 = vld [vmem:[%s9 + $0x78] sm:$0xff]
        %v2348 = vld [vmem:[%s10] sm:$0x3]
        %v2350 = vlaneseq
        %v2351 = vshrl.u32 %v2350, 7
        %v2352 = vsub.s32 0, %v2351
        %v2353 = vrot.slane %v2348, %v2352
        %v2354 = vlaneseq
        %v2355 = vshrl.u32 %v2354, 7
        %v2356 = vsub.s32 1, %v2355
        %v2357 = vrot.slane %v2348, %v2356
        %v2376 = vunpack.c.l.b16 %v2332
        %v2377 = vunpack.c.h.b16 %v2332
        %v2378 = vunpack.c.l.b16 %v2333
        %v2379 = vunpack.c.h.b16 %v2333
        %v2380 = vunpack.c.l.b16 %v2334
        %v2381 = vunpack.c.h.b16 %v2334
        %v2382 = vunpack.c.l.b16 %v2335
        %v2383 = vunpack.c.h.b16 %v2335
        %v2384 = vunpack.c.l.b16 %v2336
        %v2385 = vunpack.c.h.b16 %v2336
        %v2386 = vunpack.c.l.b16 %v2337
        %v2387 = vunpack.c.h.b16 %v2337
        %v2388 = vunpack.c.l.b16 %v2338
        %v2389 = vunpack.c.h.b16 %v2338
        %v2390 = vunpack.c.l.b16 %v2339
        %v2391 = vunpack.c.h.b16 %v2339
        %v2392 = vunpack.c.l.b16 %v2340
        %v2393 = vunpack.c.h.b16 %v2340
        %v2394 = vunpack.c.l.b16 %v2341
        %v2395 = vunpack.c.h.b16 %v2341
        %v2396 = vunpack.c.l.b16 %v2342
        %v2397 = vunpack.c.h.b16 %v2342
        %v2398 = vunpack.c.l.b16 %v2343
        %v2399 = vunpack.c.h.b16 %v2343
        %v2400 = vunpack.c.l.b16 %v2344
        %v2401 = vunpack.c.h.b16 %v2344
        %v2402 = vunpack.c.l.b16 %v2345
        %v2403 = vunpack.c.h.b16 %v2345
        %v2404 = vunpack.c.l.b16 %v2346
        %v2405 = vunpack.c.h.b16 %v2346
        %v2406 = vunpack.c.l.b16 %v2347
        %v2407 = vunpack.c.h.b16 %v2347
        %v2408 = vpack.c.b16 %v2378, %v2376
        %v2409 = vpack.c.b16 %v2379, %v2377
        %v2410 = vpack.c.b16 %v2382, %v2380
        %v2411 = vpack.c.b16 %v2383, %v2381
        %v2412 = vpack.c.b16 %v2386, %v2384
        %v2413 = vpack.c.b16 %v2387, %v2385
        %v2414 = vpack.c.b16 %v2390, %v2388
        %v2415 = vpack.c.b16 %v2391, %v2389
        %v2416 = vpack.c.b16 %v2394, %v2392
        %v2417 = vpack.c.b16 %v2395, %v2393
        %v2418 = vpack.c.b16 %v2398, %v2396
        %v2419 = vpack.c.b16 %v2399, %v2397
        %v2420 = vpack.c.b16 %v2402, %v2400
        %v2421 = vpack.c.b16 %v2403, %v2401
        %v2422 = vpack.c.b16 %v2406, %v2404
        %v2423 = vpack.c.b16 %v2407, %v2405
        %2440 = vmatprep.subr.bf16.mxu0 %v2423
        %2441 = vmatpush1.bf16.msra.mxu0 %v2422
        %2442 = vmatprep.subr.bf16.mxu0 %v2421
        %2443 = vmatpush1.bf16.msra.mxu0 %v2420
        %2444 = vmatprep.subr.bf16.mxu0 %v2419
        %2445 = vmatpush1.bf16.msra.mxu0 %v2418
        %2446 = vmatprep.subr.bf16.mxu0 %v2417
        %2447 = vmatpush1.bf16.msra.mxu0 %v2416
        %2448 = vmatprep.subr.bf16.mxu0 %v2415
        %2449 = vmatpush1.bf16.msra.mxu0 %v2414
        %2450 = vmatprep.subr.bf16.mxu0 %v2413
        %2451 = vmatpush1.bf16.msra.mxu0 %v2412
        %2452 = vmatprep.subr.bf16.mxu0 %v2411
        %2453 = vmatpush1.bf16.msra.mxu0 %v2410
        %2454 = vmatprep.subr.bf16.mxu0 %v2409
        %2455 = vmatpush1.bf16.msra.mxu0 %v2408
        %2456 = vmatprep.subr.bf16.mxu0 0
        %2457 = vmatpush2.bf16.msra.mxu0 0
        %2458 = vmatprep.subr.bf16.mxu0 0
        %2459 = vmatpush2.bf16.msra.mxu0 0
        %2460 = vmatprep.subr.bf16.mxu0 0
        %2461 = vmatpush2.bf16.msra.mxu0 0
        %2462 = vmatprep.subr.bf16.mxu0 0
        %2463 = vmatpush2.bf16.msra.mxu0 0
        %2464 = vmatprep.subr.bf16.mxu0 0
        %2465 = vmatpush2.bf16.msra.mxu0 0
        %2466 = vmatprep.subr.bf16.mxu0 0
        %2467 = vmatpush2.bf16.msra.mxu0 0
        %2468 = vmatprep.subr.bf16.mxu0 0
        %2469 = vmatpush2.bf16.msra.mxu0 0
        %2470 = vmatprep.subr.bf16.mxu0 0
        %2471 = vmatpush2.bf16.msra.mxu0 0
        %2472 = vmatprep.mubr.bf16.mxu0 0
        %2473 = vmatmul.mubr.bf16.gmra.mxu0 %v2331
        %v2474 = vpop.f32.mrf.mxu0
        %v2475 = vadd.f32 %v2353, %v2474
        %v2476 = vpop.f32.mrf.mxu0
        %v2477 = vadd.f32 %v2357, %v2476
        %v2478 = vpop.f32.mrf.mxu0
        %v2479 = vpop.f32.mrf.mxu0
        %2480 = vdwg.mxu0
        %v2481 = vmax.f32 %v2475, 0.0
        %v2482 = vmax.f32 %v2477, 0.0
        %v2483 = vpack.c.bf16 %v2481, %v2481
        %v2484 = vpack.c.bf16 %v2482, %v2482
        %v2485 = vld [vmem:[%s11] sm:$0xf]
        %v2486 = vld [vmem:[%s11 + $0x4] sm:$0xf]
        %v2487 = vld [vmem:[%s11 + $0x8] sm:$0xf]
        %v2488 = vld [vmem:[%s11 + $0xc] sm:$0xf]
        %v2489 = vld [vmem:[%s11 + $0x10] sm:$0xf]
        %v2490 = vld [vmem:[%s11 + $0x14] sm:$0xf]
        %v2491 = vld [vmem:[%s11 + $0x18] sm:$0xf]
        %v2492 = vld [vmem:[%s11 + $0x1c] sm:$0xf]
        %v2493 = vld [vmem:[%s11 + $0x20] sm:$0xf]
        %v2494 = vld [vmem:[%s11 + $0x24] sm:$0xf]
        %v2495 = vld [vmem:[%s11 + $0x28] sm:$0xf]
        %v2496 = vld [vmem:[%s11 + $0x2c] sm:$0xf]
        %v2497 = vld [vmem:[%s11 + $0x30] sm:$0xf]
        %v2498 = vld [vmem:[%s11 + $0x34] sm:$0xf]
        %v2499 = vld [vmem:[%s11 + $0x38] sm:$0xf]
        %v2500 = vld [vmem:[%s11 + $0x3c] sm:$0xf]
        %v2501 = vld [vmem:[%s11 + $0x40] sm:$0xf]
        %v2502 = vld [vmem:[%s11 + $0x44] sm:$0xf]
        %v2503 = vld [vmem:[%s11 + $0x48] sm:$0xf]
        %v2504 = vld [vmem:[%s11 + $0x4c] sm:$0xf]
        %v2505 = vld [vmem:[%s11 + $0x50] sm:$0xf]
        %v2506 = vld [vmem:[%s11 + $0x54] sm:$0xf]
        %v2507 = vld [vmem:[%s11 + $0x58] sm:$0xf]
        %v2508 = vld [vmem:[%s11 + $0x5c] sm:$0xf]
        %v2509 = vld [vmem:[%s11 + $0x60] sm:$0xf]
        %v2510 = vld [vmem:[%s11 + $0x64] sm:$0xf]
        %v2511 = vld [vmem:[%s11 + $0x68] sm:$0xf]
        %v2512 = vld [vmem:[%s11 + $0x6c] sm:$0xf]
        %v2513 = vld [vmem:[%s11 + $0x70] sm:$0xf]
        %v2514 = vld [vmem:[%s11 + $0x74] sm:$0xf]
        %v2515 = vld [vmem:[%s11 + $0x78] sm:$0xf]
        %v2516 = vld [vmem:[%s11 + $0x7c] sm:$0xf]
        %v2517 = vld [vmem:[%s12] sm:$0x1]
        %v2519 = vlaneseq
        %v2520 = vshrl.u32 %v2519, 7
        %v2521 = vsub.s32 0, %v2520
        %v2522 = vrot.slane %v2517, %v2521
        %v2556 = vunpack.c.l.b16 %v2485
        %v2557 = vunpack.c.l.b16 %v2486
        %v2558 = vunpack.c.l.b16 %v2487
        %v2559 = vunpack.c.l.b16 %v2488
        %v2560 = vunpack.c.l.b16 %v2489
        %v2561 = vunpack.c.l.b16 %v2490
        %v2562 = vunpack.c.l.b16 %v2491
        %v2563 = vunpack.c.l.b16 %v2492
        %v2564 = vunpack.c.l.b16 %v2493
        %v2565 = vunpack.c.l.b16 %v2494
        %v2566 = vunpack.c.l.b16 %v2495
        %v2567 = vunpack.c.l.b16 %v2496
        %v2568 = vunpack.c.l.b16 %v2497
        %v2569 = vunpack.c.l.b16 %v2498
        %v2570 = vunpack.c.l.b16 %v2499
        %v2571 = vunpack.c.l.b16 %v2500
        %v2572 = vunpack.c.l.b16 %v2501
        %v2573 = vunpack.c.l.b16 %v2502
        %v2574 = vunpack.c.l.b16 %v2503
        %v2575 = vunpack.c.l.b16 %v2504
        %v2576 = vunpack.c.l.b16 %v2505
        %v2577 = vunpack.c.l.b16 %v2506
        %v2578 = vunpack.c.l.b16 %v2507
        %v2579 = vunpack.c.l.b16 %v2508
        %v2580 = vunpack.c.l.b16 %v2509
        %v2581 = vunpack.c.l.b16 %v2510
        %v2582 = vunpack.c.l.b16 %v2511
        %v2583 = vunpack.c.l.b16 %v2512
        %v2584 = vunpack.c.l.b16 %v2513
        %v2585 = vunpack.c.l.b16 %v2514
        %v2586 = vunpack.c.l.b16 %v2515
        %v2587 = vunpack.c.l.b16 %v2516
        %v2588 = vpack.c.b16 %v2557, %v2556
        %v2589 = vpack.c.b16 %v2559, %v2558
        %v2590 = vpack.c.b16 %v2561, %v2560
        %v2591 = vpack.c.b16 %v2563, %v2562
        %v2592 = vpack.c.b16 %v2565, %v2564
        %v2593 = vpack.c.b16 %v2567, %v2566
        %v2594 = vpack.c.b16 %v2569, %v2568
        %v2595 = vpack.c.b16 %v2571, %v2570
        %v2596 = vpack.c.b16 %v2573, %v2572
        %v2597 = vpack.c.b16 %v2575, %v2574
        %v2598 = vpack.c.b16 %v2577, %v2576
        %v2599 = vpack.c.b16 %v2579, %v2578
        %v2600 = vpack.c.b16 %v2581, %v2580
        %v2601 = vpack.c.b16 %v2583, %v2582
        %v2602 = vpack.c.b16 %v2585, %v2584
        %v2603 = vpack.c.b16 %v2587, %v2586
        %2620 = vmatprep.subr.bf16.mxu0 0
        %2621 = vmatpush1.bf16.msra.mxu0 %v2595
        %2622 = vmatprep.subr.bf16.mxu0 0
        %2623 = vmatpush1.bf16.msra.mxu0 %v2594
        %2624 = vmatprep.subr.bf16.mxu0 0
        %2625 = vmatpush1.bf16.msra.mxu0 %v2593
        %2626 = vmatprep.subr.bf16.mxu0 0
        %2627 = vmatpush1.bf16.msra.mxu0 %v2592
        %2628 = vmatprep.subr.bf16.mxu0 0
        %2629 = vmatpush1.bf16.msra.mxu0 %v2591
        %2630 = vmatprep.subr.bf16.mxu0 0
        %2631 = vmatpush1.bf16.msra.mxu0 %v2590
        %2632 = vmatprep.subr.bf16.mxu0 0
        %2633 = vmatpush1.bf16.msra.mxu0 %v2589
        %2634 = vmatprep.subr.bf16.mxu0 0
        %2635 = vmatpush1.bf16.msra.mxu0 %v2588
        %2636 = vmatprep.subr.bf16.mxu0 0
        %2637 = vmatpush2.bf16.msra.mxu0 %v2603
        %2638 = vmatprep.subr.bf16.mxu0 0
        %2639 = vmatpush2.bf16.msra.mxu0 %v2602
        %2640 = vmatprep.subr.bf16.mxu0 0
        %2641 = vmatpush2.bf16.msra.mxu0 %v2601
        %2642 = vmatprep.subr.bf16.mxu0 0
        %2643 = vmatpush2.bf16.msra.mxu0 %v2600
        %2644 = vmatprep.subr.bf16.mxu0 0
        %2645 = vmatpush2.bf16.msra.mxu0 %v2599
        %2646 = vmatprep.subr.bf16.mxu0 0
        %2647 = vmatpush2.bf16.msra.mxu0 %v2598
        %2648 = vmatprep.subr.bf16.mxu0 0
        %2649 = vmatpush2.bf16.msra.mxu0 %v2597
        %2650 = vmatprep.subr.bf16.mxu0 0
        %2651 = vmatpush2.bf16.msra.mxu0 %v2596
        %2652 = vmatprep.mubr.bf16.mxu0 %v2484
        %2653 = vmatmul.mubr.bf16.gmra.mxu0 %v2483
        %v2654 = vpop.f32.mrf.mxu0
        %v2655 = vadd.f32 %v2522, %v2654
        %v2656 = vpop.f32.mrf.mxu0
        %v2657 = vpop.f32.mrf.mxu0
        %v2658 = vpop.f32.mrf.mxu0
        %2659 = vdwg.mxu0
        %v2660 = vadd.f32 %v2330, %v2655
        %v2661 = vld [vmem:[%s15] sm:$0x1]
        %v2662 = vld [vmem:[%s16] sm:$0x1]
        %2663 = vadd.xlane.f32.xlu0 %v2660
        %v2664 = vpop.xlane.xlu0 %2663
        %v2665 = vmul.f32 %v2664, %v2307
        %v2666 = vsub.f32 %v2660, %v2665
        %v2667 = vmul.f32 %v2666, %v2666
        %2668 = vadd.xlane.f32.xlu0 %v2667
        %v2669 = vpop.xlane.xlu0 %2668
        %v2670 = vmul.f32 %v2669, %v2307
        %v2671 = vadd.f32 %v2670, 1e-05
        %v2672 = vrsqrt.pop %v2671
        %v2673 = vmul.f32 %v2666, %v2672
        %v2675 = vlaneseq
        %v2676 = vshrl.u32 %v2675, 7
        %v2677 = vsub.s32 0, %v2676
        %v2678 = vrot.slane %v2661, %v2677
        %v2680 = vmul.f32 %v2673, %v2678
        %v2682 = vlaneseq
        %v2683 = vshrl.u32 %v2682, 7
        %v2684 = vsub.s32 0, %v2683
        %v2685 = vrot.slane %v2662, %v2684
        %v2687 = vadd.f32 %v2680, %v2685
        %2688 = vst [vmem:[%s555] sm:$0xff] %v2687
        %s2689 = sand.u32 %s415, 1
        %s2690 = scalar_lea.sflag [#allocation5], %s2689
        %s2691 = sand.u32 %s415, 1
        %s2692 = smul.addr %s2691, 8
        %s2693 = scalar_lea.vmem [#allocation4], %s2692
        // Predicated region
        $region93: #{_encoder_layer_jit.1} parent=87 // pred_check
          %p2694 = pneg %p425
        $region94: #{_encoder_layer_jit.1} parent=87 // pred_check_branch
          %2696 = sbr.rel (%p2694) target = $region96
        $region95: #{_encoder_layer_jit.1} parent=87 // pred_region
          %s2698 = ssub.s32 128, 128
          %2699 = vsyncadd %s2690, %s2698
          %s2700 = smul.addr %s35, 2
          %s2701 = sadd.s32 %s36, %s2700
          %s2702 = smul.addr %s2701, 128
          %s2703 = scalar_lea.hbm %s17, %s2702
          %s2705 = sshll.u32 %s2693, 4
          %s2706 = int_to_ptr.vmem [resolvable:$true] %s2705
          %2708 = dma.vmem_to_hbm [thread:$0]  %s2706, 128, %s2703, %s2690
        $region96: #{_encoder_layer_jit.1} parent=87 // pred_fallthru
          _
      $region88: #{_encoder_layer_jit.1} parent=5 // pred_fallthru
        _
      %p2709 = scmp.le.s32.totalorder 2, %s26
      // Predicated region
      $region97: #{_encoder_layer_jit.1} parent=5 // pred_check
        %p2710 = pneg %p2709
      $region98: #{_encoder_layer_jit.1} parent=5 // pred_check_branch
        %2712 = sbr.rel (%p2710) target = $region100
      $region99: #{_encoder_layer_jit.1} parent=5 // pred_region
        %s2713 = ssub.s32 %s26, 2
        // Predicated region
        $region101: #{_encoder_layer_jit.1} parent=99 // pred_check
          %p2714 = pneg %p431
        $region102: #{_encoder_layer_jit.1} parent=99 // pred_check_branch
          %2716 = sbr.rel (%p2714) target = $region104
        $region103: #{_encoder_layer_jit.1} parent=99 // pred_region
          %s2717 = sand.u32 %s416, 1
          %s2718 = scalar_lea.sflag [#allocation5], %s2717
          %s2719 = sand.u32 %s416, 1
          %s2720 = smul.addr %s2719, 8
          %s2721 = scalar_lea.vmem [#allocation4], %s2720
          %2722 = dma.done %s2718, 128
        $region104: #{_encoder_layer_jit.1} parent=99 // pred_fallthru
          _
      $region100: #{_encoder_layer_jit.1} parent=5 // pred_fallthru
        _
    $region6: #{_encoder_layer_jit.1} parent=1 // loop_footer
      %s30 = sadd.s32 1, %s26
    $region7: #{_encoder_layer_jit.1} parent=1 // loop_footer_branch
      %25 = sbr.rel target = $region3
    $region8: #{_encoder_layer_jit.1} parent=1 // loop_exit
      _
    %2723 = vsyncpa [#allocation5], 1
    %s2724 = scalar_lea.sflag [#allocation5], 1
    %2725 = vsyncpa %s2724, 1

</llo_original>
